<compile_context>
chip_gen: v7x
topology: tpu7x:2x2x1
jax: 0.10.0
libtpu: 0.0.40
codegen_flags: <defaults>
</compile_context>

<pallas_src>
import functools

import jax
import jax.numpy as jnp
from jax.experimental import pallas as pl
from jax.experimental.pallas import tpu as pltpu

EPS = 1e-5                       # torch.nn.BatchNorm2d default eps
STRIDES = (2, 2, 2, 1, 1, 1)     # 3 stride-2 encoder convs, 3 stride-1 decoder convs
UP_AFTER = 3                     # the 3 nearest-x2 interpolates sit after encoder layer 3
UP_FACTOR = 8                    # 2 * 2 * 2


# ---------------------------------------------------------------------------
# Fused kernel: whole forward pass for BLOCK_BATCH samples, activations stay in VMEM.
# Layout inside the kernel: a[t, b*cmax + c] = activation of sample b, channel c, time t.
# ---------------------------------------------------------------------------
def _fused_ae_kernel(x_ref, w_ref, shift_ref, d0_ref, d1_ref, d2_ref, up_ref, o_ref,
                     *, strides, up_after):
    dec_refs = (d0_ref, d1_ref, d2_ref)
    a = x_ref[...]                                   # (H, BC) float32
    dec_i = 0
    for li, stride in enumerate(strides):
        # +-1 time shifts with zero fill (== the conv's padding=(1,0)).
        zrow = jnp.zeros((1, a.shape[1]), jnp.float32)
        x_prev = jnp.concatenate([zrow, a[:-1, :]], axis=0)      # row t holds a[t-1]
        x_next = jnp.concatenate([a[1:, :], zrow], axis=0)       # row t holds a[t+1]
        # 3-tap conv as three lane-dense MXU matmuls against block-diagonal,
        # BN-scale-folded weights.
        y = (jnp.dot(x_prev, w_ref[3 * li + 0], preferred_element_type=jnp.float32)
             + jnp.dot(a,      w_ref[3 * li + 1], preferred_element_type=jnp.float32)
             + jnp.dot(x_next, w_ref[3 * li + 2], preferred_element_type=jnp.float32))
        # folded BN shift (+ conv bias) and ReLU
        y = jnp.maximum(y + shift_ref[li:li + 1, :], 0.0)
        if stride == 2:
            # stride-2 decimation: row-selection matmul with a hoisted 0/1 matrix
            y = jnp.dot(dec_refs[dec_i][...], y, preferred_element_type=jnp.float32)
            dec_i += 1
        a = y
        if li + 1 == up_after:
            # three nearest x2 upsamples == one nearest x8, also a hoisted 0/1 matmul
            a = jnp.dot(up_ref[...], a, preferred_element_type=jnp.float32)
    o_ref[...] = a.astype(o_ref.dtype)


# ---------------------------------------------------------------------------
# Wrapper: single pallas_call for the whole network (layout plumbing is plain XLA).
# ---------------------------------------------------------------------------
def forward_pallas(x_nchw, w_all, shift_all, dec_mats, up_mat, *, block_batch, cmax):
    n, c, h, w = x_nchw.shape
    assert w == 1 and h % UP_FACTOR == 0
    assert n % block_batch == 0
    g = n // block_batch
    bc = block_batch * cmax

    # NCHW -> (grid, H, block_batch * cmax): time on sublanes, (sample, channel-slot) on
    # lanes, channels zero-padded to a fixed cmax-lane slot per sample.
    xt = jnp.transpose(x_nchw[:, :, :, 0], (0, 2, 1))                     # (N, H, C)
    xt = jnp.pad(xt, ((0, 0), (0, 0), (0, cmax - c)))                     # (N, H, cmax)
    xt = xt.reshape(g, block_batch, h, cmax).transpose(0, 2, 1, 3).reshape(g, h, bc)

    kernel = functools.partial(_fused_ae_kernel, strides=STRIDES, up_after=UP_AFTER)
    const2 = lambda i: (0, 0)                                             # resident operands

    out = pl.pallas_call(
        kernel,
        out_shape=jax.ShapeDtypeStruct((g, h, bc), jnp.float32),
        grid=(g,),
        in_specs=[
            pl.BlockSpec((None, h, bc), lambda i: (i, 0, 0)),             # packed activations
            pl.BlockSpec(w_all.shape, lambda i: (0, 0, 0)),               # (18, BC, BC) weights
            pl.BlockSpec(shift_all.shape, const2),                        # (6, BC) shifts
            pl.BlockSpec(dec_mats[0].shape, const2),                      # (H/2, H)
            pl.BlockSpec(dec_mats[1].shape, const2),                      # (H/4, H/2)
            pl.BlockSpec(dec_mats[2].shape, const2),                      # (H/8, H/4)
            pl.BlockSpec(up_mat.shape, const2),                           # (H, H/8)
        ],
        out_specs=pl.BlockSpec((None, h, bc), lambda i: (i, 0, 0)),
        compiler_params=pltpu.CompilerParams(dimension_semantics=("parallel",)),
    )(xt, w_all, shift_all, dec_mats[0], dec_mats[1], dec_mats[2], up_mat)

    # (grid, H, BC) -> NCHW (last layer maps back to `variables` channels)
    c_out = c
    out = out.reshape(g, h, block_batch, cmax)[:, :, :, :c_out]           # (g, H, bb, c_out)
    out = out.transpose(0, 2, 3, 1).reshape(n, c_out, h, 1)
    return out


# ---------------------------------------------------------------------------
# Parameters (deterministic, synthetic) -- shapes follow the PyTorch __init__
# ---------------------------------------------------------------------------
def init_params(key, variables=1, features=16):
    layer_cfg = [
        (variables, features),            # encoder (stride 2)
        (features, features // 2),
        (features // 2, features // 4),
        (features // 4, features // 2),   # decoder (stride 1)
        (features // 2, features),
        (features, variables),
    ]
    params = []
    for idx, (cin, cout) in enumerate(layer_cfg):
        k = jax.random.fold_in(key, idx)
        kw, kb, kg, kbe, km, kv = jax.random.split(k, 6)
        params.append(dict(
            w=jax.random.normal(kw, (cout, cin, 3, 1), jnp.float32) * 0.3,   # Conv2d weight OIHW
            b=jax.random.normal(kb, (cout,), jnp.float32) * 0.1,             # Conv2d bias
            gamma=1.0 + 0.1 * jax.random.normal(kg, (cout,), jnp.float32),   # BN weight
            beta=0.1 * jax.random.normal(kbe, (cout,), jnp.float32),         # BN bias
            mean=0.1 * jax.random.normal(km, (cout,), jnp.float32),          # BN running_mean
            var=jax.random.uniform(kv, (cout,), jnp.float32, 0.5, 1.5),      # BN running_var
        ))
    return params


def prepare_inputs(raw_params, block_batch, cmax):
    """One-time host-side prep (outside jit): fold conv bias + eval-BN into
    block-diagonal per-tap weights (18, BC, BC) and a per-layer shift table (6, BC)."""
    eye_b = jnp.eye(block_batch, dtype=jnp.float32)
    w_blocks, shift_rows = [], []
    for p in raw_params:
        cout, cin = p['w'].shape[0], p['w'].shape[1]
        inv = p['gamma'] / jnp.sqrt(p['var'] + EPS)                        # (cout,)
        shift = p['beta'] + (p['b'] - p['mean']) * inv                     # (cout,)
        shift_pad = jnp.zeros((cmax,), jnp.float32).at[:cout].set(shift)
        shift_rows.append(jnp.tile(shift_pad, block_batch))                # (BC,)
        for k in range(3):
            wk = p['w'][:, :, k, 0] * inv[:, None]                         # (cout, cin), BN scale folded
            wk_pad = jnp.zeros((cmax, cmax), jnp.float32).at[:cin, :cout].set(wk.T)
            w_blocks.append(jnp.kron(eye_b, wk_pad))                       # block-diagonal (BC, BC)
    return jnp.stack(w_blocks, axis=0), jnp.stack(shift_rows, axis=0)


def make_resample_mats(h):
    """Hoisted 0/1 selection matrices: three stride-2 decimations and one nearest x8."""
    decs, cur = [], h
    for _ in range(3):
        nxt = cur // 2
        decs.append((jnp.arange(nxt)[:, None] * 2 ==
                     jnp.arange(cur)[None, :]).astype(jnp.float32))        # (cur/2, cur)
        cur = nxt
    up = (jnp.arange(cur * UP_FACTOR)[:, None] // UP_FACTOR ==
          jnp.arange(cur)[None, :]).astype(jnp.float32)                    # (H, H/8)
    # TODO(synk): for very long sequences (H~1K) with huge per-step batches, re-derive
    # BLOCK_BATCH against per-generation VMEM (64 MiB on v7x vs 128 MiB on v5e/v6e).
    return tuple(decs), up


# ---------------------------------------------------------------------------
# Pure-JAX reference (lax.conv) to validate the Pallas implementation
# ---------------------------------------------------------------------------
def forward_ref(x, raw_params):
    def layer(x, p, stride):
        y = jax.lax.conv_general_dilated(
            x, p['w'], window_strides=(stride, 1), padding=((1, 1), (0, 0)),
            dimension_numbers=('NCHW', 'OIHW', 'NCHW'),
            precision=jax.lax.Precision.HIGHEST)
        y = y + p['b'][None, :, None, None]
        y = (y - p['mean'][None, :, None, None]) / jnp.sqrt(p['var'][None, :, None, None] + EPS)
        y = y * p['gamma'][None, :, None, None] + p['beta'][None, :, None, None]
        return jnp.maximum(y, 0.0)

    for p, s in zip(raw_params[:3], STRIDES[:3]):
        x = layer(x, p, s)
    for _ in range(3):                      # interpolate(scale_factor=(2,1), mode='nearest') x3
        x = jnp.repeat(x, 2, axis=2)
    for p, s in zip(raw_params[3:], STRIDES[3:]):
        x = layer(x, p, s)
    return x


if __name__ == "__main__":
    key = jax.random.PRNGKey(0)
    kx, kp = jax.random.split(key)

    # Small shapes consistent with the module: variables=1, features=16, time length 64.
    # Batch 16 split into 2 grid steps of 8 samples -> 8*16 = 128 lanes per matmul/store.
    N, C, H, W = 16, 1, 64, 1
    FEATURES = 16
    CMAX = FEATURES                       # per-sample lane slot (max channel count in the net)
    BLOCK_BATCH = 8                       # samples per grid step

    x = jax.random.normal(kx, (N, C, H, W), jnp.float32)
    raw_params = init_params(kp, variables=C, features=FEATURES)

    # One-time host-side prep (hoisted out of the jitted forward).
    w_all, shift_all = prepare_inputs(raw_params, BLOCK_BATCH, CMAX)
    dec_mats, up_mat = make_resample_mats(H)

    fwd = jax.jit(functools.partial(forward_pallas, block_batch=BLOCK_BATCH, cmax=CMAX))
    out = jax.block_until_ready(fwd(x, w_all, shift_all, dec_mats, up_mat))

    ref = forward_ref(x, raw_params)
    assert out.shape == (N, C, H, W), out.shape
    max_err = float(jnp.max(jnp.abs(out - ref)))
    if not jnp.allclose(out, ref, rtol=1e-2, atol=1e-2):
        raise AssertionError(f"Pallas vs reference mismatch, max abs err = {max_err}")

    print("KERNEL_OK")
</pallas_src>

<mosaic_0001>
module attributes {stable_mosaic.version = 11 : i64} {
  func.func @_fused_ae_kernel(%arg0: i32, %arg1: memref<1x64x128xf32, #tpu.memory_space<vmem>>, %arg2: memref<18x128x128xf32, #tpu.memory_space<vmem>>, %arg3: memref<6x128xf32, #tpu.memory_space<vmem>>, %arg4: memref<32x64xf32, #tpu.memory_space<vmem>>, %arg5: memref<16x32xf32, #tpu.memory_space<vmem>>, %arg6: memref<8x16xf32, #tpu.memory_space<vmem>>, %arg7: memref<64x8xf32, #tpu.memory_space<vmem>>, %arg8: memref<1x64x128xf32, #tpu.memory_space<vmem>>) attributes {dimension_semantics = [#tpu.dimension_semantics<parallel>], iteration_bounds = array<i64: 2>, scalar_prefetch = 0 : i64, scratch_operands = 0 : i64, tpu.core_type = #tpu.core_type<tc>, window_params = [{transform_indices = @transform_0, window_bounds = array<i64: 1, 64, 128>}, {pipeline_mode = #tpu.pipeline_mode<synchronous>, transform_indices = @transform_1, window_bounds = array<i64: 18, 128, 128>}, {pipeline_mode = #tpu.pipeline_mode<synchronous>, transform_indices = @transform_2, window_bounds = array<i64: 6, 128>}, {pipeline_mode = #tpu.pipeline_mode<synchronous>, transform_indices = @transform_3, window_bounds = array<i64: 32, 64>}, {pipeline_mode = #tpu.pipeline_mode<synchronous>, transform_indices = @transform_4, window_bounds = array<i64: 16, 32>}, {pipeline_mode = #tpu.pipeline_mode<synchronous>, transform_indices = @transform_5, window_bounds = array<i64: 8, 16>}, {pipeline_mode = #tpu.pipeline_mode<synchronous>, transform_indices = @transform_6, window_bounds = array<i64: 64, 8>}, {transform_indices = @transform_7, window_bounds = array<i64: 1, 64, 128>}]} {
    %c0 = arith.constant 0 : index
    %c0_0 = arith.constant 0 : index
    %c0_1 = arith.constant 0 : index
    %0 = vector.load %arg1[%c0, %c0_0, %c0_1] : memref<1x64x128xf32, #tpu.memory_space<vmem>>, vector<1x64x128xf32>
    %1 = vector.shape_cast %0 : vector<1x64x128xf32> to vector<64x128xf32>
    %cst = arith.constant 0.000000e+00 : f32
    %2 = vector.broadcast %cst : f32 to vector<1x128xf32>
    %3 = vector.extract_strided_slice %1 {offsets = [0, 0], sizes = [63, 128], strides = [1, 1]} : vector<64x128xf32> to vector<63x128xf32>
    %4 = tpu.concatenate %2, %3 in 0 : vector<1x128xf32>, vector<63x128xf32> -> vector<64x128xf32>
    %5 = vector.extract_strided_slice %1 {offsets = [1, 0], sizes = [63, 128], strides = [1, 1]} : vector<64x128xf32> to vector<63x128xf32>
    %6 = tpu.concatenate %5, %2 in 0 : vector<63x128xf32>, vector<1x128xf32> -> vector<64x128xf32>
    %c0_2 = arith.constant 0 : index
    %c0_3 = arith.constant 0 : index
    %c0_4 = arith.constant 0 : index
    %7 = vector.load %arg2[%c0_2, %c0_3, %c0_4] : memref<18x128x128xf32, #tpu.memory_space<vmem>>, vector<1x128x128xf32>
    %8 = vector.shape_cast %7 : vector<1x128x128xf32> to vector<128x128xf32>
    %cst_5 = arith.constant dense<0.000000e+00> : vector<64x128xf32>
    %9 = tpu.matmul %4, %8, %cst_5 {dimension_numbers = #tpu.dot_dimension_numbers<[1], [0], [0], [1], [0, 0, 1, 1], [], []>} : vector<64x128xf32>, vector<128x128xf32>, vector<64x128xf32> -> vector<64x128xf32>
    %c1 = arith.constant 1 : index
    %c0_6 = arith.constant 0 : index
    %c0_7 = arith.constant 0 : index
    %10 = vector.load %arg2[%c1, %c0_6, %c0_7] : memref<18x128x128xf32, #tpu.memory_space<vmem>>, vector<1x128x128xf32>
    %11 = vector.shape_cast %10 : vector<1x128x128xf32> to vector<128x128xf32>
    %cst_8 = arith.constant dense<0.000000e+00> : vector<64x128xf32>
    %12 = tpu.matmul %1, %11, %cst_8 {dimension_numbers = #tpu.dot_dimension_numbers<[1], [0], [0], [1], [0, 0, 1, 1], [], []>} : vector<64x128xf32>, vector<128x128xf32>, vector<64x128xf32> -> vector<64x128xf32>
    %13 = arith.addf %9, %12 : vector<64x128xf32>
    %c2 = arith.constant 2 : index
    %c0_9 = arith.constant 0 : index
    %c0_10 = arith.constant 0 : index
    %14 = vector.load %arg2[%c2, %c0_9, %c0_10] : memref<18x128x128xf32, #tpu.memory_space<vmem>>, vector<1x128x128xf32>
    %15 = vector.shape_cast %14 : vector<1x128x128xf32> to vector<128x128xf32>
    %cst_11 = arith.constant dense<0.000000e+00> : vector<64x128xf32>
    %16 = tpu.matmul %6, %15, %cst_11 {dimension_numbers = #tpu.dot_dimension_numbers<[1], [0], [0], [1], [0, 0, 1, 1], [], []>} : vector<64x128xf32>, vector<128x128xf32>, vector<64x128xf32> -> vector<64x128xf32>
    %17 = arith.addf %13, %16 : vector<64x128xf32>
    %c0_12 = arith.constant 0 : index
    %c0_13 = arith.constant 0 : index
    %18 = vector.load %arg3[%c0_12, %c0_13] : memref<6x128xf32, #tpu.memory_space<vmem>>, vector<1x128xf32>
    %19 = vector.broadcast %18 : vector<1x128xf32> to vector<64x128xf32>
    %20 = arith.addf %17, %19 : vector<64x128xf32>
    %cst_14 = arith.constant 0.000000e+00 : f32
    %21 = vector.broadcast %cst_14 : f32 to vector<64x128xf32>
    %22 = arith.maximumf %20, %21 : vector<64x128xf32>
    %c0_15 = arith.constant 0 : index
    %c0_16 = arith.constant 0 : index
    %23 = vector.load %arg4[%c0_15, %c0_16] : memref<32x64xf32, #tpu.memory_space<vmem>>, vector<32x64xf32>
    %cst_17 = arith.constant dense<0.000000e+00> : vector<32x128xf32>
    %24 = tpu.matmul %23, %22, %cst_17 {dimension_numbers = #tpu.dot_dimension_numbers<[1], [0], [0], [1], [0, 0, 1, 1], [], []>} : vector<32x64xf32>, vector<64x128xf32>, vector<32x128xf32> -> vector<32x128xf32>
    %cst_18 = arith.constant 0.000000e+00 : f32
    %25 = vector.broadcast %cst_18 : f32 to vector<1x128xf32>
    %26 = vector.extract_strided_slice %24 {offsets = [0, 0], sizes = [31, 128], strides = [1, 1]} : vector<32x128xf32> to vector<31x128xf32>
    %27 = tpu.concatenate %25, %26 in 0 : vector<1x128xf32>, vector<31x128xf32> -> vector<32x128xf32>
    %28 = vector.extract_strided_slice %24 {offsets = [1, 0], sizes = [31, 128], strides = [1, 1]} : vector<32x128xf32> to vector<31x128xf32>
    %29 = tpu.concatenate %28, %25 in 0 : vector<31x128xf32>, vector<1x128xf32> -> vector<32x128xf32>
    %c3 = arith.constant 3 : index
    %c0_19 = arith.constant 0 : index
    %c0_20 = arith.constant 0 : index
    %30 = vector.load %arg2[%c3, %c0_19, %c0_20] : memref<18x128x128xf32, #tpu.memory_space<vmem>>, vector<1x128x128xf32>
    %31 = vector.shape_cast %30 : vector<1x128x128xf32> to vector<128x128xf32>
    %cst_21 = arith.constant dense<0.000000e+00> : vector<32x128xf32>
    %32 = tpu.matmul %27, %31, %cst_21 {dimension_numbers = #tpu.dot_dimension_numbers<[1], [0], [0], [1], [0, 0, 1, 1], [], []>} : vector<32x128xf32>, vector<128x128xf32>, vector<32x128xf32> -> vector<32x128xf32>
    %c4 = arith.constant 4 : index
    %c0_22 = arith.constant 0 : index
    %c0_23 = arith.constant 0 : index
    %33 = vector.load %arg2[%c4, %c0_22, %c0_23] : memref<18x128x128xf32, #tpu.memory_space<vmem>>, vector<1x128x128xf32>
    %34 = vector.shape_cast %33 : vector<1x128x128xf32> to vector<128x128xf32>
    %cst_24 = arith.constant dense<0.000000e+00> : vector<32x128xf32>
    %35 = tpu.matmul %24, %34, %cst_24 {dimension_numbers = #tpu.dot_dimension_numbers<[1], [0], [0], [1], [0, 0, 1, 1], [], []>} : vector<32x128xf32>, vector<128x128xf32>, vector<32x128xf32> -> vector<32x128xf32>
    %36 = arith.addf %32, %35 : vector<32x128xf32>
    %c5 = arith.constant 5 : index
    %c0_25 = arith.constant 0 : index
    %c0_26 = arith.constant 0 : index
    %37 = vector.load %arg2[%c5, %c0_25, %c0_26] : memref<18x128x128xf32, #tpu.memory_space<vmem>>, vector<1x128x128xf32>
    %38 = vector.shape_cast %37 : vector<1x128x128xf32> to vector<128x128xf32>
    %cst_27 = arith.constant dense<0.000000e+00> : vector<32x128xf32>
    %39 = tpu.matmul %29, %38, %cst_27 {dimension_numbers = #tpu.dot_dimension_numbers<[1], [0], [0], [1], [0, 0, 1, 1], [], []>} : vector<32x128xf32>, vector<128x128xf32>, vector<32x128xf32> -> vector<32x128xf32>
    %40 = arith.addf %36, %39 : vector<32x128xf32>
    %c1_28 = arith.constant 1 : index
    %c0_29 = arith.constant 0 : index
    %41 = vector.load %arg3[%c1_28, %c0_29] : memref<6x128xf32, #tpu.memory_space<vmem>>, vector<1x128xf32>
    %42 = vector.broadcast %41 : vector<1x128xf32> to vector<32x128xf32>
    %43 = arith.addf %40, %42 : vector<32x128xf32>
    %cst_30 = arith.constant 0.000000e+00 : f32
    %44 = vector.broadcast %cst_30 : f32 to vector<32x128xf32>
    %45 = arith.maximumf %43, %44 : vector<32x128xf32>
    %c0_31 = arith.constant 0 : index
    %c0_32 = arith.constant 0 : index
    %46 = vector.load %arg5[%c0_31, %c0_32] : memref<16x32xf32, #tpu.memory_space<vmem>>, vector<16x32xf32>
    %cst_33 = arith.constant dense<0.000000e+00> : vector<16x128xf32>
    %47 = tpu.matmul %46, %45, %cst_33 {dimension_numbers = #tpu.dot_dimension_numbers<[1], [0], [0], [1], [0, 0, 1, 1], [], []>} : vector<16x32xf32>, vector<32x128xf32>, vector<16x128xf32> -> vector<16x128xf32>
    %cst_34 = arith.constant 0.000000e+00 : f32
    %48 = vector.broadcast %cst_34 : f32 to vector<1x128xf32>
    %49 = vector.extract_strided_slice %47 {offsets = [0, 0], sizes = [15, 128], strides = [1, 1]} : vector<16x128xf32> to vector<15x128xf32>
    %50 = tpu.concatenate %48, %49 in 0 : vector<1x128xf32>, vector<15x128xf32> -> vector<16x128xf32>
    %51 = vector.extract_strided_slice %47 {offsets = [1, 0], sizes = [15, 128], strides = [1, 1]} : vector<16x128xf32> to vector<15x128xf32>
    %52 = tpu.concatenate %51, %48 in 0 : vector<15x128xf32>, vector<1x128xf32> -> vector<16x128xf32>
    %c6 = arith.constant 6 : index
    %c0_35 = arith.constant 0 : index
    %c0_36 = arith.constant 0 : index
    %53 = vector.load %arg2[%c6, %c0_35, %c0_36] : memref<18x128x128xf32, #tpu.memory_space<vmem>>, vector<1x128x128xf32>
    %54 = vector.shape_cast %53 : vector<1x128x128xf32> to vector<128x128xf32>
    %cst_37 = arith.constant dense<0.000000e+00> : vector<16x128xf32>
    %55 = tpu.matmul %50, %54, %cst_37 {dimension_numbers = #tpu.dot_dimension_numbers<[1], [0], [0], [1], [0, 0, 1, 1], [], []>} : vector<16x128xf32>, vector<128x128xf32>, vector<16x128xf32> -> vector<16x128xf32>
    %c7 = arith.constant 7 : index
    %c0_38 = arith.constant 0 : index
    %c0_39 = arith.constant 0 : index
    %56 = vector.load %arg2[%c7, %c0_38, %c0_39] : memref<18x128x128xf32, #tpu.memory_space<vmem>>, vector<1x128x128xf32>
    %57 = vector.shape_cast %56 : vector<1x128x128xf32> to vector<128x128xf32>
    %cst_40 = arith.constant dense<0.000000e+00> : vector<16x128xf32>
    %58 = tpu.matmul %47, %57, %cst_40 {dimension_numbers = #tpu.dot_dimension_numbers<[1], [0], [0], [1], [0, 0, 1, 1], [], []>} : vector<16x128xf32>, vector<128x128xf32>, vector<16x128xf32> -> vector<16x128xf32>
    %59 = arith.addf %55, %58 : vector<16x128xf32>
    %c8 = arith.constant 8 : index
    %c0_41 = arith.constant 0 : index
    %c0_42 = arith.constant 0 : index
    %60 = vector.load %arg2[%c8, %c0_41, %c0_42] : memref<18x128x128xf32, #tpu.memory_space<vmem>>, vector<1x128x128xf32>
    %61 = vector.shape_cast %60 : vector<1x128x128xf32> to vector<128x128xf32>
    %cst_43 = arith.constant dense<0.000000e+00> : vector<16x128xf32>
    %62 = tpu.matmul %52, %61, %cst_43 {dimension_numbers = #tpu.dot_dimension_numbers<[1], [0], [0], [1], [0, 0, 1, 1], [], []>} : vector<16x128xf32>, vector<128x128xf32>, vector<16x128xf32> -> vector<16x128xf32>
    %63 = arith.addf %59, %62 : vector<16x128xf32>
    %c2_44 = arith.constant 2 : index
    %c0_45 = arith.constant 0 : index
    %64 = vector.load %arg3[%c2_44, %c0_45] : memref<6x128xf32, #tpu.memory_space<vmem>>, vector<1x128xf32>
    %65 = vector.broadcast %64 : vector<1x128xf32> to vector<16x128xf32>
    %66 = arith.addf %63, %65 : vector<16x128xf32>
    %cst_46 = arith.constant 0.000000e+00 : f32
    %67 = vector.broadcast %cst_46 : f32 to vector<16x128xf32>
    %68 = arith.maximumf %66, %67 : vector<16x128xf32>
    %c0_47 = arith.constant 0 : index
    %c0_48 = arith.constant 0 : index
    %69 = vector.load %arg6[%c0_47, %c0_48] : memref<8x16xf32, #tpu.memory_space<vmem>>, vector<8x16xf32>
    %cst_49 = arith.constant dense<0.000000e+00> : vector<8x128xf32>
    %70 = tpu.matmul %69, %68, %cst_49 {dimension_numbers = #tpu.dot_dimension_numbers<[1], [0], [0], [1], [0, 0, 1, 1], [], []>} : vector<8x16xf32>, vector<16x128xf32>, vector<8x128xf32> -> vector<8x128xf32>
    %c0_50 = arith.constant 0 : index
    %c0_51 = arith.constant 0 : index
    %71 = vector.load %arg7[%c0_50, %c0_51] : memref<64x8xf32, #tpu.memory_space<vmem>>, vector<64x8xf32>
    %cst_52 = arith.constant dense<0.000000e+00> : vector<64x128xf32>
    %72 = tpu.matmul %71, %70, %cst_52 {dimension_numbers = #tpu.dot_dimension_numbers<[1], [0], [0], [1], [0, 0, 1, 1], [], []>} : vector<64x8xf32>, vector<8x128xf32>, vector<64x128xf32> -> vector<64x128xf32>
    %cst_53 = arith.constant 0.000000e+00 : f32
    %73 = vector.broadcast %cst_53 : f32 to vector<1x128xf32>
    %74 = vector.extract_strided_slice %72 {offsets = [0, 0], sizes = [63, 128], strides = [1, 1]} : vector<64x128xf32> to vector<63x128xf32>
    %75 = tpu.concatenate %73, %74 in 0 : vector<1x128xf32>, vector<63x128xf32> -> vector<64x128xf32>
    %76 = vector.extract_strided_slice %72 {offsets = [1, 0], sizes = [63, 128], strides = [1, 1]} : vector<64x128xf32> to vector<63x128xf32>
    %77 = tpu.concatenate %76, %73 in 0 : vector<63x128xf32>, vector<1x128xf32> -> vector<64x128xf32>
    %c9 = arith.constant 9 : index
    %c0_54 = arith.constant 0 : index
    %c0_55 = arith.constant 0 : index
    %78 = vector.load %arg2[%c9, %c0_54, %c0_55] : memref<18x128x128xf32, #tpu.memory_space<vmem>>, vector<1x128x128xf32>
    %79 = vector.shape_cast %78 : vector<1x128x128xf32> to vector<128x128xf32>
    %cst_56 = arith.constant dense<0.000000e+00> : vector<64x128xf32>
    %80 = tpu.matmul %75, %79, %cst_56 {dimension_numbers = #tpu.dot_dimension_numbers<[1], [0], [0], [1], [0, 0, 1, 1], [], []>} : vector<64x128xf32>, vector<128x128xf32>, vector<64x128xf32> -> vector<64x128xf32>
    %c10 = arith.constant 10 : index
    %c0_57 = arith.constant 0 : index
    %c0_58 = arith.constant 0 : index
    %81 = vector.load %arg2[%c10, %c0_57, %c0_58] : memref<18x128x128xf32, #tpu.memory_space<vmem>>, vector<1x128x128xf32>
    %82 = vector.shape_cast %81 : vector<1x128x128xf32> to vector<128x128xf32>
    %cst_59 = arith.constant dense<0.000000e+00> : vector<64x128xf32>
    %83 = tpu.matmul %72, %82, %cst_59 {dimension_numbers = #tpu.dot_dimension_numbers<[1], [0], [0], [1], [0, 0, 1, 1], [], []>} : vector<64x128xf32>, vector<128x128xf32>, vector<64x128xf32> -> vector<64x128xf32>
    %84 = arith.addf %80, %83 : vector<64x128xf32>
    %c11 = arith.constant 11 : index
    %c0_60 = arith.constant 0 : index
    %c0_61 = arith.constant 0 : index
    %85 = vector.load %arg2[%c11, %c0_60, %c0_61] : memref<18x128x128xf32, #tpu.memory_space<vmem>>, vector<1x128x128xf32>
    %86 = vector.shape_cast %85 : vector<1x128x128xf32> to vector<128x128xf32>
    %cst_62 = arith.constant dense<0.000000e+00> : vector<64x128xf32>
    %87 = tpu.matmul %77, %86, %cst_62 {dimension_numbers = #tpu.dot_dimension_numbers<[1], [0], [0], [1], [0, 0, 1, 1], [], []>} : vector<64x128xf32>, vector<128x128xf32>, vector<64x128xf32> -> vector<64x128xf32>
    %88 = arith.addf %84, %87 : vector<64x128xf32>
    %c3_63 = arith.constant 3 : index
    %c0_64 = arith.constant 0 : index
    %89 = vector.load %arg3[%c3_63, %c0_64] : memref<6x128xf32, #tpu.memory_space<vmem>>, vector<1x128xf32>
    %90 = vector.broadcast %89 : vector<1x128xf32> to vector<64x128xf32>
    %91 = arith.addf %88, %90 : vector<64x128xf32>
    %cst_65 = arith.constant 0.000000e+00 : f32
    %92 = vector.broadcast %cst_65 : f32 to vector<64x128xf32>
    %93 = arith.maximumf %91, %92 : vector<64x128xf32>
    %cst_66 = arith.constant 0.000000e+00 : f32
    %94 = vector.broadcast %cst_66 : f32 to vector<1x128xf32>
    %95 = vector.extract_strided_slice %93 {offsets = [0, 0], sizes = [63, 128], strides = [1, 1]} : vector<64x128xf32> to vector<63x128xf32>
    %96 = tpu.concatenate %94, %95 in 0 : vector<1x128xf32>, vector<63x128xf32> -> vector<64x128xf32>
    %97 = vector.extract_strided_slice %93 {offsets = [1, 0], sizes = [63, 128], strides = [1, 1]} : vector<64x128xf32> to vector<63x128xf32>
    %98 = tpu.concatenate %97, %94 in 0 : vector<63x128xf32>, vector<1x128xf32> -> vector<64x128xf32>
    %c12 = arith.constant 12 : index
    %c0_67 = arith.constant 0 : index
    %c0_68 = arith.constant 0 : index
    %99 = vector.load %arg2[%c12, %c0_67, %c0_68] : memref<18x128x128xf32, #tpu.memory_space<vmem>>, vector<1x128x128xf32>
    %100 = vector.shape_cast %99 : vector<1x128x128xf32> to vector<128x128xf32>
    %cst_69 = arith.constant dense<0.000000e+00> : vector<64x128xf32>
    %101 = tpu.matmul %96, %100, %cst_69 {dimension_numbers = #tpu.dot_dimension_numbers<[1], [0], [0], [1], [0, 0, 1, 1], [], []>} : vector<64x128xf32>, vector<128x128xf32>, vector<64x128xf32> -> vector<64x128xf32>
    %c13 = arith.constant 13 : index
    %c0_70 = arith.constant 0 : index
    %c0_71 = arith.constant 0 : index
    %102 = vector.load %arg2[%c13, %c0_70, %c0_71] : memref<18x128x128xf32, #tpu.memory_space<vmem>>, vector<1x128x128xf32>
    %103 = vector.shape_cast %102 : vector<1x128x128xf32> to vector<128x128xf32>
    %cst_72 = arith.constant dense<0.000000e+00> : vector<64x128xf32>
    %104 = tpu.matmul %93, %103, %cst_72 {dimension_numbers = #tpu.dot_dimension_numbers<[1], [0], [0], [1], [0, 0, 1, 1], [], []>} : vector<64x128xf32>, vector<128x128xf32>, vector<64x128xf32> -> vector<64x128xf32>
    %105 = arith.addf %101, %104 : vector<64x128xf32>
    %c14 = arith.constant 14 : index
    %c0_73 = arith.constant 0 : index
    %c0_74 = arith.constant 0 : index
    %106 = vector.load %arg2[%c14, %c0_73, %c0_74] : memref<18x128x128xf32, #tpu.memory_space<vmem>>, vector<1x128x128xf32>
    %107 = vector.shape_cast %106 : vector<1x128x128xf32> to vector<128x128xf32>
    %cst_75 = arith.constant dense<0.000000e+00> : vector<64x128xf32>
    %108 = tpu.matmul %98, %107, %cst_75 {dimension_numbers = #tpu.dot_dimension_numbers<[1], [0], [0], [1], [0, 0, 1, 1], [], []>} : vector<64x128xf32>, vector<128x128xf32>, vector<64x128xf32> -> vector<64x128xf32>
    %109 = arith.addf %105, %108 : vector<64x128xf32>
    %c4_76 = arith.constant 4 : index
    %c0_77 = arith.constant 0 : index
    %110 = vector.load %arg3[%c4_76, %c0_77] : memref<6x128xf32, #tpu.memory_space<vmem>>, vector<1x128xf32>
    %111 = vector.broadcast %110 : vector<1x128xf32> to vector<64x128xf32>
    %112 = arith.addf %109, %111 : vector<64x128xf32>
    %cst_78 = arith.constant 0.000000e+00 : f32
    %113 = vector.broadcast %cst_78 : f32 to vector<64x128xf32>
    %114 = arith.maximumf %112, %113 : vector<64x128xf32>
    %cst_79 = arith.constant 0.000000e+00 : f32
    %115 = vector.broadcast %cst_79 : f32 to vector<1x128xf32>
    %116 = vector.extract_strided_slice %114 {offsets = [0, 0], sizes = [63, 128], strides = [1, 1]} : vector<64x128xf32> to vector<63x128xf32>
    %117 = tpu.concatenate %115, %116 in 0 : vector<1x128xf32>, vector<63x128xf32> -> vector<64x128xf32>
    %118 = vector.extract_strided_slice %114 {offsets = [1, 0], sizes = [63, 128], strides = [1, 1]} : vector<64x128xf32> to vector<63x128xf32>
    %119 = tpu.concatenate %118, %115 in 0 : vector<63x128xf32>, vector<1x128xf32> -> vector<64x128xf32>
    %c15 = arith.constant 15 : index
    %c0_80 = arith.constant 0 : index
    %c0_81 = arith.constant 0 : index
    %120 = vector.load %arg2[%c15, %c0_80, %c0_81] : memref<18x128x128xf32, #tpu.memory_space<vmem>>, vector<1x128x128xf32>
    %121 = vector.shape_cast %120 : vector<1x128x128xf32> to vector<128x128xf32>
    %cst_82 = arith.constant dense<0.000000e+00> : vector<64x128xf32>
    %122 = tpu.matmul %117, %121, %cst_82 {dimension_numbers = #tpu.dot_dimension_numbers<[1], [0], [0], [1], [0, 0, 1, 1], [], []>} : vector<64x128xf32>, vector<128x128xf32>, vector<64x128xf32> -> vector<64x128xf32>
    %c16 = arith.constant 16 : index
    %c0_83 = arith.constant 0 : index
    %c0_84 = arith.constant 0 : index
    %123 = vector.load %arg2[%c16, %c0_83, %c0_84] : memref<18x128x128xf32, #tpu.memory_space<vmem>>, vector<1x128x128xf32>
    %124 = vector.shape_cast %123 : vector<1x128x128xf32> to vector<128x128xf32>
    %cst_85 = arith.constant dense<0.000000e+00> : vector<64x128xf32>
    %125 = tpu.matmul %114, %124, %cst_85 {dimension_numbers = #tpu.dot_dimension_numbers<[1], [0], [0], [1], [0, 0, 1, 1], [], []>} : vector<64x128xf32>, vector<128x128xf32>, vector<64x128xf32> -> vector<64x128xf32>
    %126 = arith.addf %122, %125 : vector<64x128xf32>
    %c17 = arith.constant 17 : index
    %c0_86 = arith.constant 0 : index
    %c0_87 = arith.constant 0 : index
    %127 = vector.load %arg2[%c17, %c0_86, %c0_87] : memref<18x128x128xf32, #tpu.memory_space<vmem>>, vector<1x128x128xf32>
    %128 = vector.shape_cast %127 : vector<1x128x128xf32> to vector<128x128xf32>
    %cst_88 = arith.constant dense<0.000000e+00> : vector<64x128xf32>
    %129 = tpu.matmul %119, %128, %cst_88 {dimension_numbers = #tpu.dot_dimension_numbers<[1], [0], [0], [1], [0, 0, 1, 1], [], []>} : vector<64x128xf32>, vector<128x128xf32>, vector<64x128xf32> -> vector<64x128xf32>
    %130 = arith.addf %126, %129 : vector<64x128xf32>
    %c5_89 = arith.constant 5 : index
    %c0_90 = arith.constant 0 : index
    %131 = vector.load %arg3[%c5_89, %c0_90] : memref<6x128xf32, #tpu.memory_space<vmem>>, vector<1x128xf32>
    %132 = vector.broadcast %131 : vector<1x128xf32> to vector<64x128xf32>
    %133 = arith.addf %130, %132 : vector<64x128xf32>
    %cst_91 = arith.constant 0.000000e+00 : f32
    %134 = vector.broadcast %cst_91 : f32 to vector<64x128xf32>
    %135 = arith.maximumf %133, %134 : vector<64x128xf32>
    %c0_92 = arith.constant 0 : index
    %c0_93 = arith.constant 0 : index
    %c0_94 = arith.constant 0 : index
    %136 = vector.load %arg8[%c0_92, %c0_93, %c0_94] : memref<1x64x128xf32, #tpu.memory_space<vmem>>, vector<1x64x128xf32>
    %137 = vector.shape_cast %136 : vector<1x64x128xf32> to vector<64x128xf32>
    %138 = vector.shape_cast %135 : vector<64x128xf32> to vector<1x64x128xf32>
    tpu.vector_store %arg8[%c0_92, %c0_93, %c0_94], %138 {strides = array<i32>} : memref<1x64x128xf32, #tpu.memory_space<vmem>>, vector<1x64x128xf32>,
    return
  }
  func.func @transform_0(%arg0: i32) -> (i32, i32, i32) {
    %c0_i32 = arith.constant 0 : i32
    %c0_i32_0 = arith.constant 0 : i32
    %c0_i32_1 = arith.constant 0 : i32
    return %arg0, %c0_i32, %c0_i32_0 : i32, i32, i32
  }
  func.func @transform_1(%arg0: i32) -> (i32, i32, i32) {
    %c0_i32 = arith.constant 0 : i32
    %c0_i32_0 = arith.constant 0 : i32
    %c0_i32_1 = arith.constant 0 : i32
    %c0_i32_2 = arith.constant 0 : i32
    return %c0_i32, %c0_i32_0, %c0_i32_1 : i32, i32, i32
  }
  func.func @transform_2(%arg0: i32) -> (i32, i32) {
    %c0_i32 = arith.constant 0 : i32
    %c0_i32_0 = arith.constant 0 : i32
    %c0_i32_1 = arith.constant 0 : i32
    return %c0_i32, %c0_i32_0 : i32, i32
  }
  func.func @transform_3(%arg0: i32) -> (i32, i32) {
    %c0_i32 = arith.constant 0 : i32
    %c0_i32_0 = arith.constant 0 : i32
    %c0_i32_1 = arith.constant 0 : i32
    return %c0_i32, %c0_i32_0 : i32, i32
  }
  func.func @transform_4(%arg0: i32) -> (i32, i32) {
    %c0_i32 = arith.constant 0 : i32
    %c0_i32_0 = arith.constant 0 : i32
    %c0_i32_1 = arith.constant 0 : i32
    return %c0_i32, %c0_i32_0 : i32, i32
  }
  func.func @transform_5(%arg0: i32) -> (i32, i32) {
    %c0_i32 = arith.constant 0 : i32
    %c0_i32_0 = arith.constant 0 : i32
    %c0_i32_1 = arith.constant 0 : i32
    return %c0_i32, %c0_i32_0 : i32, i32
  }
  func.func @transform_6(%arg0: i32) -> (i32, i32) {
    %c0_i32 = arith.constant 0 : i32
    %c0_i32_0 = arith.constant 0 : i32
    %c0_i32_1 = arith.constant 0 : i32
    return %c0_i32, %c0_i32_0 : i32, i32
  }
  func.func @transform_7(%arg0: i32) -> (i32, i32, i32) {
    %c0_i32 = arith.constant 0 : i32
    %c0_i32_0 = arith.constant 0 : i32
    %c0_i32_1 = arith.constant 0 : i32
    return %arg0, %c0_i32, %c0_i32_0 : i32, i32, i32
  }
}

</mosaic_0001>

<llo_original>
// kernel: forward_pallas.1
$region0: #{forward_pallas.1}
  #allocation0 [shape = 'u32[]', space=smem, size = 0x4, offset = 0x4, fixed_abs, tag = 'smem constant byte address 0x4 - core index']
  #allocation1 [shape = 'u32[144,128]{1,0:T(1,128)}', space=vmem, size = 0x12000, scoped, tag = 'internal scratch']
  %s0 = inlined_call_operand.vmem [shape: f32[2,64,128], index: 0, kind: input, shape index: {}]
  %s1 = inlined_call_operand.hbm [shape: f32[18,128,128], index: 1, kind: input, shape index: {}]
  %s2 = inlined_call_operand.hbm [shape: f32[6,128], index: 2, kind: input, shape index: {}]
  %s3 = inlined_call_operand.hbm [shape: f32[32,64], index: 3, kind: input, shape index: {}]
  %s4 = inlined_call_operand.hbm [shape: f32[16,32], index: 4, kind: input, shape index: {}]
  %s5 = inlined_call_operand.hbm [shape: f32[8,16], index: 5, kind: input, shape index: {}]
  %s6 = inlined_call_operand.vmem [shape: f32[64,8], index: 6, kind: input, shape index: {}]
  %s7 = inlined_call_operand.vmem [shape: f32[2,64,128], index: 7, kind: output, shape index: {}]
  %s8 = sld [smem:[#allocation0]]
  $region81: #{forward_pallas.1} parent=0
    _
  %s10 = ssub.s32 1, %s8
  %s11 = scalar_select 0, %s10, %s8
  $region1: #{forward_pallas.1} parent=0
    #allocation2 [shape = 'u8[1179648]{0}', space=vmem, size = 0x120000, scoped, tag = 'input window, operand 1, single buffered']
    #allocation3 [shape = 's32[2]{0}', space=sflag, size = 0x8, scoped, tag = 'scoped memory for forward_pallas.1']
    #allocation4 [shape = 'u8[4096]{0}', space=vmem, size = 0x1000, scoped, tag = 'input window, operand 2, single buffered']
    #allocation5 [shape = 's32[1]{0}', space=sflag, size = 0x4, scoped, tag = 'scoped memory for forward_pallas.1']
    #allocation6 [shape = 'u8[16384]{0}', space=vmem, size = 0x4000, scoped, tag = 'input window, operand 3, single buffered']
    #allocation7 [shape = 'u8[8192]{0}', space=vmem, size = 0x2000, scoped, tag = 'input window, operand 4, single buffered']
    #allocation8 [shape = 's32[1]{0}', space=sflag, size = 0x4, scoped, tag = 'scoped memory for forward_pallas.1']
    #allocation9 [shape = 'u8[4096]{0}', space=vmem, size = 0x1000, scoped, tag = 'input window, operand 5, single buffered']
    %12 = vsyncpa [#allocation3], 0
    %13 = vsyncpa [#allocation5], 0
    %14 = vsyncpa [#allocation8], 0
    loop: start=0, step=1, limit=4
    $region2: #{forward_pallas.1} parent=1 // loop_pre_header
      _
    $region3: #{forward_pallas.1} parent=1 // loop_header
      %s16 = sphi 0, %s20
      %p17 = scmp.ge.s32.totalorder %s16, 4
      %s26 = sphi 0, %s28
      %s29 = sphi 0, %s26
      %s30 = sphi 0, %s29
      %s46 = sphi 0, %s30
      %s50 = sphi 0, %s50
      %s52 = sphi 0, %s50
      %s53 = sphi 0, %s52
      %s67 = sphi 0, %s53
      %s71 = sphi 0, %s71
      %s73 = sphi 0, %s71
      %s74 = sphi 0, %s73
      %s88 = sphi 0, %s74
      %s92 = sphi 0, %s92
      %s94 = sphi 0, %s92
      %s95 = sphi 0, %s94
      %s109 = sphi 0, %s95
      %s113 = sphi 0, %s113
      %s115 = sphi 0, %s113
      %s116 = sphi 0, %s115
      %s130 = sphi 0, %s116
      %s134 = sphi 0, %s134
      %s136 = sphi 0, %s134
      %s137 = sphi 0, %s136
      %s151 = sphi 0, %s137
      %s155 = sphi 0, %s155
      %s157 = sphi 0, %s155
      %s158 = sphi 0, %s157
      %s172 = sphi 0, %s158
      %s178 = sphi 0, %s180
      %s181 = sphi 0, %s178
      %s182 = sphi 0, %s181
      %s198 = sphi 0, %s182
    $region4: #{forward_pallas.1} parent=1 // loop_header_branch
      %19 = sbr.rel (%p17) target = $region8
    $region5: #{forward_pallas.1} parent=1 // loop_body
      %s21 = ssub.s32 %s16, 1
      %s22 = ssub.s32 %s16, 2
      %s23 = sadd.s32 %s16, 1
      %s24 = ssub.s32 %s16, %s23
      %p25 = scmp.eq.s32.totalorder %s24, 0
      %s27 = sadd.s32 %s26, 1
      %s28 = scalar_select %p25, %s26, %s27
      %p31 = pneg %p25
      %p32 = scmp.eq.s32.totalorder %s16, 1
      %p33 = por %p31, %p32
      %p34 = scmp.ne.s32.totalorder %s26, %s29
      %p35 = scmp.eq.s32.totalorder %s16, 0
      %p36 = por %p34, %p35
      %p37 = scmp.ne.s32.totalorder %s26, %s29
      %p38 = scmp.eq.s32.totalorder %s21, 1
      %p39 = por %p37, %p38
      %p40 = scmp.ne.s32.totalorder %s29, %s30
      %p41 = scmp.eq.s32.totalorder %s21, 0
      %p42 = por %p40, %p41
      %p43 = scmp.ne.s32.totalorder %s29, %s30
      %p44 = scmp.eq.s32.totalorder %s22, 1
      %p45 = por %p43, %p44
      %p47 = scmp.ne.s32.totalorder %s30, %s46
      %p48 = scmp.eq.s32.totalorder %s22, 0
      %p49 = por %p47, %p48
      %s51 = sadd.s32 %s50, 1
      %p54 = scmp.eq.s32.totalorder %s16, 1
      %p55 = scmp.ne.s32.totalorder %s50, %s52
      %p56 = scmp.eq.s32.totalorder %s16, 0
      %p57 = por %p55, %p56
      %p58 = scmp.ne.s32.totalorder %s50, %s52
      %p59 = scmp.eq.s32.totalorder %s21, 1
      %p60 = por %p58, %p59
      %p61 = scmp.ne.s32.totalorder %s52, %s53
      %p62 = scmp.eq.s32.totalorder %s21, 0
      %p63 = por %p61, %p62
      %p64 = scmp.ne.s32.totalorder %s52, %s53
      %p65 = scmp.eq.s32.totalorder %s22, 1
      %p66 = por %p64, %p65
      %p68 = scmp.ne.s32.totalorder %s53, %s67
      %p69 = scmp.eq.s32.totalorder %s22, 0
      %p70 = por %p68, %p69
      %s72 = sadd.s32 %s71, 1
      %p75 = scmp.eq.s32.totalorder %s16, 1
      %p76 = scmp.ne.s32.totalorder %s71, %s73
      %p77 = scmp.eq.s32.totalorder %s16, 0
      %p78 = por %p76, %p77
      %p79 = scmp.ne.s32.totalorder %s71, %s73
      %p80 = scmp.eq.s32.totalorder %s21, 1
      %p81 = por %p79, %p80
      %p82 = scmp.ne.s32.totalorder %s73, %s74
      %p83 = scmp.eq.s32.totalorder %s21, 0
      %p84 = por %p82, %p83
      %p85 = scmp.ne.s32.totalorder %s73, %s74
      %p86 = scmp.eq.s32.totalorder %s22, 1
      %p87 = por %p85, %p86
      %p89 = scmp.ne.s32.totalorder %s74, %s88
      %p90 = scmp.eq.s32.totalorder %s22, 0
      %p91 = por %p89, %p90
      %s93 = sadd.s32 %s92, 1
      %p96 = scmp.eq.s32.totalorder %s16, 1
      %p97 = scmp.ne.s32.totalorder %s92, %s94
      %p98 = scmp.eq.s32.totalorder %s16, 0
      %p99 = por %p97, %p98
      %p100 = scmp.ne.s32.totalorder %s92, %s94
      %p101 = scmp.eq.s32.totalorder %s21, 1
      %p102 = por %p100, %p101
      %p103 = scmp.ne.s32.totalorder %s94, %s95
      %p104 = scmp.eq.s32.totalorder %s21, 0
      %p105 = por %p103, %p104
      %p106 = scmp.ne.s32.totalorder %s94, %s95
      %p107 = scmp.eq.s32.totalorder %s22, 1
      %p108 = por %p106, %p107
      %p110 = scmp.ne.s32.totalorder %s95, %s109
      %p111 = scmp.eq.s32.totalorder %s22, 0
      %p112 = por %p110, %p111
      %s114 = sadd.s32 %s113, 1
      %p117 = scmp.eq.s32.totalorder %s16, 1
      %p118 = scmp.ne.s32.totalorder %s113, %s115
      %p119 = scmp.eq.s32.totalorder %s16, 0
      %p120 = por %p118, %p119
      %p121 = scmp.ne.s32.totalorder %s113, %s115
      %p122 = scmp.eq.s32.totalorder %s21, 1
      %p123 = por %p121, %p122
      %p124 = scmp.ne.s32.totalorder %s115, %s116
      %p125 = scmp.eq.s32.totalorder %s21, 0
      %p126 = por %p124, %p125
      %p127 = scmp.ne.s32.totalorder %s115, %s116
      %p128 = scmp.eq.s32.totalorder %s22, 1
      %p129 = por %p127, %p128
      %p131 = scmp.ne.s32.totalorder %s116, %s130
      %p132 = scmp.eq.s32.totalorder %s22, 0
      %p133 = por %p131, %p132
      %s135 = sadd.s32 %s134, 1
      %p138 = scmp.eq.s32.totalorder %s16, 1
      %p139 = scmp.ne.s32.totalorder %s134, %s136
      %p140 = scmp.eq.s32.totalorder %s16, 0
      %p141 = por %p139, %p140
      %p142 = scmp.ne.s32.totalorder %s134, %s136
      %p143 = scmp.eq.s32.totalorder %s21, 1
      %p144 = por %p142, %p143
      %p145 = scmp.ne.s32.totalorder %s136, %s137
      %p146 = scmp.eq.s32.totalorder %s21, 0
      %p147 = por %p145, %p146
      %p148 = scmp.ne.s32.totalorder %s136, %s137
      %p149 = scmp.eq.s32.totalorder %s22, 1
      %p150 = por %p148, %p149
      %p152 = scmp.ne.s32.totalorder %s137, %s151
      %p153 = scmp.eq.s32.totalorder %s22, 0
      %p154 = por %p152, %p153
      %s156 = sadd.s32 %s155, 1
      %p159 = scmp.eq.s32.totalorder %s16, 1
      %p160 = scmp.ne.s32.totalorder %s155, %s157
      %p161 = scmp.eq.s32.totalorder %s16, 0
      %p162 = por %p160, %p161
      %p163 = scmp.ne.s32.totalorder %s155, %s157
      %p164 = scmp.eq.s32.totalorder %s21, 1
      %p165 = por %p163, %p164
      %p166 = scmp.ne.s32.totalorder %s157, %s158
      %p167 = scmp.eq.s32.totalorder %s21, 0
      %p168 = por %p166, %p167
      %p169 = scmp.ne.s32.totalorder %s157, %s158
      %p170 = scmp.eq.s32.totalorder %s22, 1
      %p171 = por %p169, %p170
      %p173 = scmp.ne.s32.totalorder %s158, %s172
      %p174 = scmp.eq.s32.totalorder %s22, 0
      %p175 = por %p173, %p174
      %s176 = ssub.s32 %s16, %s23
      %p177 = scmp.eq.s32.totalorder %s176, 0
      %s179 = sadd.s32 %s178, 1
      %s180 = scalar_select %p177, %s178, %s179
      %p183 = pneg %p177
      %p184 = scmp.eq.s32.totalorder %s16, 1
      %p185 = por %p183, %p184
      %p186 = scmp.ne.s32.totalorder %s178, %s181
      %p187 = scmp.eq.s32.totalorder %s16, 0
      %p188 = por %p186, %p187
      %p189 = scmp.ne.s32.totalorder %s178, %s181
      %p190 = scmp.eq.s32.totalorder %s21, 1
      %p191 = por %p189, %p190
      %p192 = scmp.ne.s32.totalorder %s181, %s182
      %p193 = scmp.eq.s32.totalorder %s21, 0
      %p194 = por %p192, %p193
      %p195 = scmp.ne.s32.totalorder %s181, %s182
      %p196 = scmp.eq.s32.totalorder %s22, 1
      %p197 = por %p195, %p196
      %p199 = scmp.ne.s32.totalorder %s182, %s198
      %p200 = scmp.eq.s32.totalorder %s22, 0
      %p201 = por %p199, %p200
      %p202 = scmp.le.s32.totalorder 1, %s16
      %p203 = scmp.lt.s32.totalorder %s16, 3
      %p204 = pnand %p202, %p203
      %p205 = pneg %p204
      // Predicated region
      $region9: #{forward_pallas.1} parent=5 // pred_check
        _
      $region10: #{forward_pallas.1} parent=5 // pred_check_branch
        %207 = sbr.rel (%p204) target = $region12
      $region11: #{forward_pallas.1} parent=5 // pred_region
        %s208 = ssub.s32 %s16, 1
        // Predicated region
        $region13: #{forward_pallas.1} parent=11 // pred_check
          %p209 = pneg %p63
        $region14: #{forward_pallas.1} parent=11 // pred_check_branch
          %211 = sbr.rel (%p209) target = $region16
        $region15: #{forward_pallas.1} parent=11 // pred_region
          %s213 = ssub.s32 36864, 36864
          %214 = vsyncadd [#allocation3], %s213
          %s215 = sshll.u32 [#allocation2], 4
          %s216 = int_to_ptr.vmem [resolvable:$true] %s215
          %221 = dma.hbm_to_vmem [thread:$0]  %s1, 36864, %s216, [#allocation3], 128, 128, 8
        $region16: #{forward_pallas.1} parent=11 // pred_fallthru
          _
        // Predicated region
        $region17: #{forward_pallas.1} parent=11 // pred_check
          %p222 = pneg %p84
        $region18: #{forward_pallas.1} parent=11 // pred_check_branch
          %224 = sbr.rel (%p222) target = $region20
        $region19: #{forward_pallas.1} parent=11 // pred_region
          %s226 = ssub.s32 128, 128
          %227 = vsyncadd [#allocation5], %s226
          %s229 = sshll.u32 [#allocation4], 4
          %s230 = int_to_ptr.vmem [resolvable:$true] %s229
          %232 = dma.hbm_to_vmem [thread:$0]  %s2, 128, %s230, [#allocation5]
        $region20: #{forward_pallas.1} parent=11 // pred_fallthru
          _
        // Predicated region
        $region21: #{forward_pallas.1} parent=11 // pred_check
          %p233 = pneg %p105
        $region22: #{forward_pallas.1} parent=11 // pred_check_branch
          %235 = sbr.rel (%p233) target = $region24
        $region23: #{forward_pallas.1} parent=11 // pred_region
          %s237 = ssub.s32 512, 512
          %238 = vsyncadd [#allocation5], %s237
          %s239 = sshll.u32 [#allocation6], 4
          %s240 = int_to_ptr.vmem [resolvable:$true] %s239
          %245 = dma.hbm_to_vmem [thread:$0]  %s3, 512, %s240, [#allocation5], 128, 128, 8
        $region24: #{forward_pallas.1} parent=11 // pred_fallthru
          _
        // Predicated region
        $region25: #{forward_pallas.1} parent=11 // pred_check
          %p246 = pneg %p126
        $region26: #{forward_pallas.1} parent=11 // pred_check_branch
          %248 = sbr.rel (%p246) target = $region28
        $region27: #{forward_pallas.1} parent=11 // pred_region
          %s250 = ssub.s32 256, 256
          %251 = vsyncadd [#allocation8], %s250
          %s252 = sshll.u32 [#allocation7], 4
          %s253 = int_to_ptr.vmem [resolvable:$true] %s252
          %258 = dma.hbm_to_vmem [thread:$0]  %s4, 256, %s253, [#allocation8], 128, 128, 8
        $region28: #{forward_pallas.1} parent=11 // pred_fallthru
          _
        // Predicated region
        $region29: #{forward_pallas.1} parent=11 // pred_check
          %p259 = pneg %p147
        $region30: #{forward_pallas.1} parent=11 // pred_check_branch
          %261 = sbr.rel (%p259) target = $region32
        $region31: #{forward_pallas.1} parent=11 // pred_region
          %s263 = ssub.s32 128, 128
          %264 = vsyncadd [#allocation8], %s263
          %s266 = sshll.u32 [#allocation9], 4
          %s267 = int_to_ptr.vmem [resolvable:$true] %s266
          %269 = dma.hbm_to_vmem [thread:$0]  %s5, 128, %s267, [#allocation8]
        $region32: #{forward_pallas.1} parent=11 // pred_fallthru
          _
        // Predicated region
        $region33: #{forward_pallas.1} parent=11 // pred_check
          %p270 = pneg %p168
        $region34: #{forward_pallas.1} parent=11 // pred_check_branch
          %272 = sbr.rel (%p270) target = $region36
        $region35: #{forward_pallas.1} parent=11 // pred_region
          _
        $region36: #{forward_pallas.1} parent=11 // pred_fallthru
          _
      $region12: #{forward_pallas.1} parent=5 // pred_fallthru
        _
      %p273 = scmp.lt.s32.totalorder %s16, 2
      // Predicated region
      $region37: #{forward_pallas.1} parent=5 // pred_check
        %p274 = pneg %p273
      $region38: #{forward_pallas.1} parent=5 // pred_check_branch
        %276 = sbr.rel (%p274) target = $region40
      $region39: #{forward_pallas.1} parent=5 // pred_region
        // Predicated region
        $region41: #{forward_pallas.1} parent=39 // pred_check
          %p277 = pneg %p36
        $region42: #{forward_pallas.1} parent=39 // pred_check_branch
          %279 = sbr.rel (%p277) target = $region44
        $region43: #{forward_pallas.1} parent=39 // pred_region
          %p280 = scmp.lt.s32.totalorder %s16, 1
          %s281 = scalar_select %p280, %s16, 1
          %s282 = smul.addr %s281, 8
          %s283 = smul.addr %s282, 8
          %s284 = scalar_lea.vmem %s0, %s283
        $region44: #{forward_pallas.1} parent=39 // pred_fallthru
          _
      $region40: #{forward_pallas.1} parent=5 // pred_fallthru
        _
      %p285 = scmp.le.s32.totalorder 1, %s16
      %p286 = scmp.lt.s32.totalorder %s16, 3
      %p287 = pnand %p285, %p286
      %p288 = pneg %p287
      // Predicated region
      $region45: #{forward_pallas.1} parent=5 // pred_check
        _
      $region46: #{forward_pallas.1} parent=5 // pred_check_branch
        %290 = sbr.rel (%p287) target = $region48
      $region47: #{forward_pallas.1} parent=5 // pred_region
        %s291 = ssub.s32 %s16, 1
        // Predicated region
        $region49: #{forward_pallas.1} parent=47 // pred_check
          %p292 = pneg %p63
        $region50: #{forward_pallas.1} parent=47 // pred_check_branch
          %294 = sbr.rel (%p292) target = $region52
        $region51: #{forward_pallas.1} parent=47 // pred_region
          %295 = dma.done [#allocation3], 36864
        $region52: #{forward_pallas.1} parent=47 // pred_fallthru
          _
        // Predicated region
        $region53: #{forward_pallas.1} parent=47 // pred_check
          %p296 = pneg %p84
        $region54: #{forward_pallas.1} parent=47 // pred_check_branch
          %298 = sbr.rel (%p296) target = $region56
        $region55: #{forward_pallas.1} parent=47 // pred_region
          %299 = dma.done [#allocation5], 128
        $region56: #{forward_pallas.1} parent=47 // pred_fallthru
          _
        // Predicated region
        $region57: #{forward_pallas.1} parent=47 // pred_check
          %p300 = pneg %p105
        $region58: #{forward_pallas.1} parent=47 // pred_check_branch
          %302 = sbr.rel (%p300) target = $region60
        $region59: #{forward_pallas.1} parent=47 // pred_region
          %303 = dma.done [#allocation5], 512
        $region60: #{forward_pallas.1} parent=47 // pred_fallthru
          _
        // Predicated region
        $region61: #{forward_pallas.1} parent=47 // pred_check
          %p304 = pneg %p126
        $region62: #{forward_pallas.1} parent=47 // pred_check_branch
          %306 = sbr.rel (%p304) target = $region64
        $region63: #{forward_pallas.1} parent=47 // pred_region
          %307 = dma.done [#allocation8], 256
        $region64: #{forward_pallas.1} parent=47 // pred_fallthru
          _
        // Predicated region
        $region65: #{forward_pallas.1} parent=47 // pred_check
          %p308 = pneg %p147
        $region66: #{forward_pallas.1} parent=47 // pred_check_branch
          %310 = sbr.rel (%p308) target = $region68
        $region67: #{forward_pallas.1} parent=47 // pred_region
          %311 = dma.done [#allocation8], 128
        $region68: #{forward_pallas.1} parent=47 // pred_fallthru
          _
        %p312 = scmp.lt.s32.totalorder %s21, 1
        %s313 = scalar_select %p312, %s21, 1
        %s314 = smul.addr %s313, 8
        %s315 = smul.addr %s314, 8
        %s316 = scalar_lea.vmem %s0, %s315
        %p317 = pneg %p42
        %p318 = pneg %p39
        %p319 = pneg %p63
        %p320 = pneg %p60
        %p321 = pneg %p84
        %p322 = pneg %p81
        %p323 = pneg %p105
        %p324 = pneg %p102
        %p325 = pneg %p126
        %p326 = pneg %p123
        %p327 = pneg %p147
        %p328 = pneg %p144
        %p329 = pneg %p168
        %p330 = pneg %p165
        %p331 = pneg %p194
        %p332 = pneg %p191
        %p333 = scmp.lt.s32.totalorder %s21, 1
        %s334 = scalar_select %p333, %s21, 1
        %s335 = smul.addr %s334, 8
        %s336 = smul.addr %s335, 8
        %s337 = scalar_lea.vmem %s7, %s336
        %p338 = scmp.lt.s32.totalorder %s21, 1
        %s339 = scalar_select %p338, %s21, 1
        %s340 = smul.addr %s339, 8
        %s341 = smul.addr %s340, 8
        %s342 = scalar_lea.vmem %s0, %s341
        %p343 = scmp.lt.s32.totalorder %s21, 1
        %s344 = scalar_select %p343, %s21, 1
        %s345 = smul.addr %s344, 8
        %s346 = smul.addr %s345, 8
        %s347 = scalar_lea.vmem %s7, %s346
        %v348 = vld [vmem:[%s342] sm:$0xff]
        %v349 = vld [vmem:[%s342 + $0x8] sm:$0xff]
        %v350 = vld [vmem:[%s342 + $0x10] sm:$0xff]
        %v351 = vld [vmem:[%s342 + $0x18] sm:$0xff]
        %v352 = vld [vmem:[%s342 + $0x20] sm:$0xff]
        %v353 = vld [vmem:[%s342 + $0x28] sm:$0xff]
        %v354 = vld [vmem:[%s342 + $0x30] sm:$0xff]
        %v355 = vld [vmem:[%s342 + $0x38] sm:$0xff]
        %vm364 = vcmask 1040384
        %v365 = vrot.slane %v348, 7
        %v366 = vrot.slane %v349, 7
        %v367 = vsel %vm364, %v365, %v366
        %v368 = vrot.slane %v350, 7
        %v369 = vsel %vm364, %v366, %v368
        %v370 = vrot.slane %v351, 7
        %v371 = vsel %vm364, %v368, %v370
        %v372 = vrot.slane %v352, 7
        %v373 = vsel %vm364, %v370, %v372
        %v374 = vrot.slane %v353, 7
        %v375 = vsel %vm364, %v372, %v374
        %v376 = vrot.slane %v354, 7
        %v377 = vsel %vm364, %v374, %v376
        %v378 = vrot.slane %v355, 7
        %v379 = vsel %vm364, %v376, %v378
        %v388 = vsel %vm364, 0.0, %v365
        %vm389 = vcmask 1046528
        %v390 = vrot.slane %v348, 1
        %v391 = vrot.slane %v349, 1
        %v392 = vsel %vm389, %v390, %v391
        %v393 = vrot.slane %v350, 1
        %v394 = vsel %vm389, %v391, %v393
        %v395 = vrot.slane %v351, 1
        %v396 = vsel %vm389, %v393, %v395
        %v397 = vrot.slane %v352, 1
        %v398 = vsel %vm389, %v395, %v397
        %v399 = vrot.slane %v353, 1
        %v400 = vsel %vm389, %v397, %v399
        %v401 = vrot.slane %v354, 1
        %v402 = vsel %vm389, %v399, %v401
        %v403 = vrot.slane %v355, 1
        %v404 = vsel %vm389, %v401, %v403
        %v413 = vsel %vm389, %v403, 0.0
        %v414 = vld [vmem:[#allocation2] sm:$0xff]
        %v415 = vld [vmem:[#allocation2 + $0x8] sm:$0xff]
        %v416 = vld [vmem:[#allocation2 + $0x10] sm:$0xff]
        %v417 = vld [vmem:[#allocation2 + $0x18] sm:$0xff]
        %v418 = vld [vmem:[#allocation2 + $0x20] sm:$0xff]
        %v419 = vld [vmem:[#allocation2 + $0x28] sm:$0xff]
        %v420 = vld [vmem:[#allocation2 + $0x30] sm:$0xff]
        %v421 = vld [vmem:[#allocation2 + $0x38] sm:$0xff]
        %v422 = vld [vmem:[#allocation2 + $0x40] sm:$0xff]
        %v423 = vld [vmem:[#allocation2 + $0x48] sm:$0xff]
        %v424 = vld [vmem:[#allocation2 + $0x50] sm:$0xff]
        %v425 = vld [vmem:[#allocation2 + $0x58] sm:$0xff]
        %v426 = vld [vmem:[#allocation2 + $0x60] sm:$0xff]
        %v427 = vld [vmem:[#allocation2 + $0x68] sm:$0xff]
        %v428 = vld [vmem:[#allocation2 + $0x70] sm:$0xff]
        %v429 = vld [vmem:[#allocation2 + $0x78] sm:$0xff]
        %s430 = scalar_lea.vmem [#allocation2], 128
        %v431 = vld [vmem:[%s430] sm:$0xff]
        %v432 = vld [vmem:[%s430 + $0x8] sm:$0xff]
        %v433 = vld [vmem:[%s430 + $0x10] sm:$0xff]
        %v434 = vld [vmem:[%s430 + $0x18] sm:$0xff]
        %v435 = vld [vmem:[%s430 + $0x20] sm:$0xff]
        %v436 = vld [vmem:[%s430 + $0x28] sm:$0xff]
        %v437 = vld [vmem:[%s430 + $0x30] sm:$0xff]
        %v438 = vld [vmem:[%s430 + $0x38] sm:$0xff]
        %v439 = vld [vmem:[%s430 + $0x40] sm:$0xff]
        %v440 = vld [vmem:[%s430 + $0x48] sm:$0xff]
        %v441 = vld [vmem:[%s430 + $0x50] sm:$0xff]
        %v442 = vld [vmem:[%s430 + $0x58] sm:$0xff]
        %v443 = vld [vmem:[%s430 + $0x60] sm:$0xff]
        %v444 = vld [vmem:[%s430 + $0x68] sm:$0xff]
        %v445 = vld [vmem:[%s430 + $0x70] sm:$0xff]
        %v446 = vld [vmem:[%s430 + $0x78] sm:$0xff]
        %447 = vmatprep.subr.mxu0 0.0
        %448 = vmatpush1.msra.mxu0 %v431
        %449 = vmatprep.subr.mxu0 0.0
        %450 = vmatpush1.msra.mxu0 %v432
        %451 = vmatprep.subr.mxu0 0.0
        %452 = vmatpush1.msra.mxu0 %v433
        %453 = vmatprep.subr.mxu0 0.0
        %454 = vmatpush1.msra.mxu0 %v434
        %455 = vmatprep.subr.mxu0 0.0
        %456 = vmatpush1.msra.mxu0 %v435
        %457 = vmatprep.subr.mxu0 0.0
        %458 = vmatpush1.msra.mxu0 %v436
        %459 = vmatprep.subr.mxu0 0.0
        %460 = vmatpush1.msra.mxu0 %v437
        %461 = vmatprep.subr.mxu0 0.0
        %462 = vmatpush1.msra.mxu0 %v438
        %463 = vmatprep.subr.mxu0 0.0
        %464 = vmatpush1.msra.mxu0 %v439
        %465 = vmatprep.subr.mxu0 0.0
        %466 = vmatpush1.msra.mxu0 %v440
        %467 = vmatprep.subr.mxu0 0.0
        %468 = vmatpush1.msra.mxu0 %v441
        %469 = vmatprep.subr.mxu0 0.0
        %470 = vmatpush1.msra.mxu0 %v442
        %471 = vmatprep.subr.mxu0 0.0
        %472 = vmatpush1.msra.mxu0 %v443
        %473 = vmatprep.subr.mxu0 0.0
        %474 = vmatpush1.msra.mxu0 %v444
        %475 = vmatprep.subr.mxu0 0.0
        %476 = vmatpush1.msra.mxu0 %v445
        %477 = vmatprep.subr.mxu0 0.0
        %478 = vmatpush1.msra.mxu0 %v446
        %479 = vmatprep.subr.mxu0 0.0
        %480 = vmatpush1.msra.mxu0 0.0
        %481 = vmatprep.subr.mxu0 0.0
        %482 = vmatpush1.msra.mxu0 0.0
        %483 = vmatprep.subr.mxu0 0.0
        %484 = vmatpush1.msra.mxu0 0.0
        %485 = vmatprep.subr.mxu0 0.0
        %486 = vmatpush1.msra.mxu0 0.0
        %487 = vmatprep.subr.mxu0 0.0
        %488 = vmatpush1.msra.mxu0 0.0
        %489 = vmatprep.subr.mxu0 0.0
        %490 = vmatpush1.msra.mxu0 0.0
        %491 = vmatprep.subr.mxu0 0.0
        %492 = vmatpush1.msra.mxu0 0.0
        %493 = vmatprep.subr.mxu0 0.0
        %494 = vmatpush1.msra.mxu0 0.0
        %495 = vmatprep.subr.mxu0 0.0
        %496 = vmatpush1.msra.mxu0 0.0
        %497 = vmatprep.subr.mxu0 0.0
        %498 = vmatpush1.msra.mxu0 0.0
        %499 = vmatprep.subr.mxu0 0.0
        %500 = vmatpush1.msra.mxu0 0.0
        %501 = vmatprep.subr.mxu0 0.0
        %502 = vmatpush1.msra.mxu0 0.0
        %503 = vmatprep.subr.mxu0 0.0
        %504 = vmatpush1.msra.mxu0 0.0
        %505 = vmatprep.subr.mxu0 0.0
        %506 = vmatpush1.msra.mxu0 0.0
        %507 = vmatprep.subr.mxu0 0.0
        %508 = vmatpush1.msra.mxu0 0.0
        %509 = vmatprep.subr.mxu0 0.0
        %510 = vmatpush1.msra.mxu0 0.0
        %511 = vmatprep.mubr.f32.mxu0 0.0
        %512 = vmatmul.mubr.f32.gmra.mrb[0].mxu0 %v348
        %v513 = vpop.f32.mrb[0].mxu0
        %v514 = vadd.f32 0.0, %v513
        %v515 = vpop.f32.mrb[0].mxu0
        %516 = vmatprep.mubr.f32.mxu0 0.0
        %517 = vmatmul.mubr.f32.gmra.mrb[0].mxu0 %v349
        %v518 = vpop.f32.mrb[0].mxu0
        %v519 = vadd.f32 0.0, %v518
        %v520 = vpop.f32.mrb[0].mxu0
        %521 = vmatprep.mubr.f32.mxu0 0.0
        %522 = vmatmul.mubr.f32.gmra.mrb[0].mxu0 %v350
        %v523 = vpop.f32.mrb[0].mxu0
        %v524 = vadd.f32 0.0, %v523
        %v525 = vpop.f32.mrb[0].mxu0
        %526 = vmatprep.mubr.f32.mxu0 0.0
        %527 = vmatmul.mubr.f32.gmra.mrb[0].mxu0 %v351
        %v528 = vpop.f32.mrb[0].mxu0
        %v529 = vadd.f32 0.0, %v528
        %v530 = vpop.f32.mrb[0].mxu0
        %531 = vmatprep.mubr.f32.mxu0 0.0
        %532 = vmatmul.mubr.f32.gmra.mrb[0].mxu0 %v352
        %v533 = vpop.f32.mrb[0].mxu0
        %v534 = vadd.f32 0.0, %v533
        %v535 = vpop.f32.mrb[0].mxu0
        %536 = vmatprep.mubr.f32.mxu0 0.0
        %537 = vmatmul.mubr.f32.gmra.mrb[0].mxu0 %v353
        %v538 = vpop.f32.mrb[0].mxu0
        %v539 = vadd.f32 0.0, %v538
        %v540 = vpop.f32.mrb[0].mxu0
        %541 = vmatprep.mubr.f32.mxu0 0.0
        %542 = vmatmul.mubr.f32.gmra.mrb[0].mxu0 %v354
        %v543 = vpop.f32.mrb[0].mxu0
        %v544 = vadd.f32 0.0, %v543
        %v545 = vpop.f32.mrb[0].mxu0
        %546 = vmatprep.mubr.f32.mxu0 0.0
        %547 = vmatmul.mubr.f32.gmra.mrb[0].mxu0 %v355
        %v548 = vpop.f32.mrb[0].mxu0
        %v549 = vadd.f32 0.0, %v548
        %v550 = vpop.f32.mrb[0].mxu0
        %551 = vdwg.mxu0
        %552 = vmatprep.subr.mxu0 0.0
        %553 = vmatpush1.msra.mxu0 %v414
        %554 = vmatprep.subr.mxu0 0.0
        %555 = vmatpush1.msra.mxu0 %v415
        %556 = vmatprep.subr.mxu0 0.0
        %557 = vmatpush1.msra.mxu0 %v416
        %558 = vmatprep.subr.mxu0 0.0
        %559 = vmatpush1.msra.mxu0 %v417
        %560 = vmatprep.subr.mxu0 0.0
        %561 = vmatpush1.msra.mxu0 %v418
        %562 = vmatprep.subr.mxu0 0.0
        %563 = vmatpush1.msra.mxu0 %v419
        %564 = vmatprep.subr.mxu0 0.0
        %565 = vmatpush1.msra.mxu0 %v420
        %566 = vmatprep.subr.mxu0 0.0
        %567 = vmatpush1.msra.mxu0 %v421
        %568 = vmatprep.subr.mxu0 0.0
        %569 = vmatpush1.msra.mxu0 %v422
        %570 = vmatprep.subr.mxu0 0.0
        %571 = vmatpush1.msra.mxu0 %v423
        %572 = vmatprep.subr.mxu0 0.0
        %573 = vmatpush1.msra.mxu0 %v424
        %574 = vmatprep.subr.mxu0 0.0
        %575 = vmatpush1.msra.mxu0 %v425
        %576 = vmatprep.subr.mxu0 0.0
        %577 = vmatpush1.msra.mxu0 %v426
        %578 = vmatprep.subr.mxu0 0.0
        %579 = vmatpush1.msra.mxu0 %v427
        %580 = vmatprep.subr.mxu0 0.0
        %581 = vmatpush1.msra.mxu0 %v428
        %582 = vmatprep.subr.mxu0 0.0
        %583 = vmatpush1.msra.mxu0 %v429
        %584 = vmatprep.subr.mxu0 0.0
        %585 = vmatpush1.msra.mxu0 0.0
        %586 = vmatprep.subr.mxu0 0.0
        %587 = vmatpush1.msra.mxu0 0.0
        %588 = vmatprep.subr.mxu0 0.0
        %589 = vmatpush1.msra.mxu0 0.0
        %590 = vmatprep.subr.mxu0 0.0
        %591 = vmatpush1.msra.mxu0 0.0
        %592 = vmatprep.subr.mxu0 0.0
        %593 = vmatpush1.msra.mxu0 0.0
        %594 = vmatprep.subr.mxu0 0.0
        %595 = vmatpush1.msra.mxu0 0.0
        %596 = vmatprep.subr.mxu0 0.0
        %597 = vmatpush1.msra.mxu0 0.0
        %598 = vmatprep.subr.mxu0 0.0
        %599 = vmatpush1.msra.mxu0 0.0
        %600 = vmatprep.subr.mxu0 0.0
        %601 = vmatpush1.msra.mxu0 0.0
        %602 = vmatprep.subr.mxu0 0.0
        %603 = vmatpush1.msra.mxu0 0.0
        %604 = vmatprep.subr.mxu0 0.0
        %605 = vmatpush1.msra.mxu0 0.0
        %606 = vmatprep.subr.mxu0 0.0
        %607 = vmatpush1.msra.mxu0 0.0
        %608 = vmatprep.subr.mxu0 0.0
        %609 = vmatpush1.msra.mxu0 0.0
        %610 = vmatprep.subr.mxu0 0.0
        %611 = vmatpush1.msra.mxu0 0.0
        %612 = vmatprep.subr.mxu0 0.0
        %613 = vmatpush1.msra.mxu0 0.0
        %614 = vmatprep.subr.mxu0 0.0
        %615 = vmatpush1.msra.mxu0 0.0
        %616 = vmatprep.mubr.f32.mxu0 0.0
        %617 = vmatmul.mubr.f32.gmra.mrb[0].mxu0 %v388
        %v618 = vpop.f32.mrb[0].mxu0
        %v619 = vadd.f32 %v514, %v618
        %v620 = vpop.f32.mrb[0].mxu0
        %621 = vmatprep.mubr.f32.mxu0 0.0
        %622 = vmatmul.mubr.f32.gmra.mrb[0].mxu0 %v367
        %v623 = vpop.f32.mrb[0].mxu0
        %v624 = vadd.f32 %v519, %v623
        %v625 = vpop.f32.mrb[0].mxu0
        %626 = vmatprep.mubr.f32.mxu0 0.0
        %627 = vmatmul.mubr.f32.gmra.mrb[0].mxu0 %v369
        %v628 = vpop.f32.mrb[0].mxu0
        %v629 = vadd.f32 %v524, %v628
        %v630 = vpop.f32.mrb[0].mxu0
        %631 = vmatprep.mubr.f32.mxu0 0.0
        %632 = vmatmul.mubr.f32.gmra.mrb[0].mxu0 %v371
        %v633 = vpop.f32.mrb[0].mxu0
        %v634 = vadd.f32 %v529, %v633
        %v635 = vpop.f32.mrb[0].mxu0
        %636 = vmatprep.mubr.f32.mxu0 0.0
        %637 = vmatmul.mubr.f32.gmra.mrb[0].mxu0 %v373
        %v638 = vpop.f32.mrb[0].mxu0
        %v639 = vadd.f32 %v534, %v638
        %v640 = vpop.f32.mrb[0].mxu0
        %641 = vmatprep.mubr.f32.mxu0 0.0
        %642 = vmatmul.mubr.f32.gmra.mrb[0].mxu0 %v375
        %v643 = vpop.f32.mrb[0].mxu0
        %v644 = vadd.f32 %v539, %v643
        %v645 = vpop.f32.mrb[0].mxu0
        %646 = vmatprep.mubr.f32.mxu0 0.0
        %647 = vmatmul.mubr.f32.gmra.mrb[0].mxu0 %v377
        %v648 = vpop.f32.mrb[0].mxu0
        %v649 = vadd.f32 %v544, %v648
        %v650 = vpop.f32.mrb[0].mxu0
        %651 = vmatprep.mubr.f32.mxu0 0.0
        %652 = vmatmul.mubr.f32.gmra.mrb[0].mxu0 %v379
        %v653 = vpop.f32.mrb[0].mxu0
        %v654 = vadd.f32 %v549, %v653
        %v655 = vpop.f32.mrb[0].mxu0
        %656 = vdwg.mxu0
        %s657 = scalar_lea.vmem [#allocation2], 256
        %v658 = vld [vmem:[%s657] sm:$0xff]
        %v659 = vld [vmem:[%s657 + $0x8] sm:$0xff]
        %v660 = vld [vmem:[%s657 + $0x10] sm:$0xff]
        %v661 = vld [vmem:[%s657 + $0x18] sm:$0xff]
        %v662 = vld [vmem:[%s657 + $0x20] sm:$0xff]
        %v663 = vld [vmem:[%s657 + $0x28] sm:$0xff]
        %v664 = vld [vmem:[%s657 + $0x30] sm:$0xff]
        %v665 = vld [vmem:[%s657 + $0x38] sm:$0xff]
        %v666 = vld [vmem:[%s657 + $0x40] sm:$0xff]
        %v667 = vld [vmem:[%s657 + $0x48] sm:$0xff]
        %v668 = vld [vmem:[%s657 + $0x50] sm:$0xff]
        %v669 = vld [vmem:[%s657 + $0x58] sm:$0xff]
        %v670 = vld [vmem:[%s657 + $0x60] sm:$0xff]
        %v671 = vld [vmem:[%s657 + $0x68] sm:$0xff]
        %v672 = vld [vmem:[%s657 + $0x70] sm:$0xff]
        %v673 = vld [vmem:[%s657 + $0x78] sm:$0xff]
        %674 = vmatprep.subr.mxu0 0.0
        %675 = vmatpush1.msra.mxu0 %v658
        %676 = vmatprep.subr.mxu0 0.0
        %677 = vmatpush1.msra.mxu0 %v659
        %678 = vmatprep.subr.mxu0 0.0
        %679 = vmatpush1.msra.mxu0 %v660
        %680 = vmatprep.subr.mxu0 0.0
        %681 = vmatpush1.msra.mxu0 %v661
        %682 = vmatprep.subr.mxu0 0.0
        %683 = vmatpush1.msra.mxu0 %v662
        %684 = vmatprep.subr.mxu0 0.0
        %685 = vmatpush1.msra.mxu0 %v663
        %686 = vmatprep.subr.mxu0 0.0
        %687 = vmatpush1.msra.mxu0 %v664
        %688 = vmatprep.subr.mxu0 0.0
        %689 = vmatpush1.msra.mxu0 %v665
        %690 = vmatprep.subr.mxu0 0.0
        %691 = vmatpush1.msra.mxu0 %v666
        %692 = vmatprep.subr.mxu0 0.0
        %693 = vmatpush1.msra.mxu0 %v667
        %694 = vmatprep.subr.mxu0 0.0
        %695 = vmatpush1.msra.mxu0 %v668
        %696 = vmatprep.subr.mxu0 0.0
        %697 = vmatpush1.msra.mxu0 %v669
        %698 = vmatprep.subr.mxu0 0.0
        %699 = vmatpush1.msra.mxu0 %v670
        %700 = vmatprep.subr.mxu0 0.0
        %701 = vmatpush1.msra.mxu0 %v671
        %702 = vmatprep.subr.mxu0 0.0
        %703 = vmatpush1.msra.mxu0 %v672
        %704 = vmatprep.subr.mxu0 0.0
        %705 = vmatpush1.msra.mxu0 %v673
        %706 = vmatprep.subr.mxu0 0.0
        %707 = vmatpush1.msra.mxu0 0.0
        %708 = vmatprep.subr.mxu0 0.0
        %709 = vmatpush1.msra.mxu0 0.0
        %710 = vmatprep.subr.mxu0 0.0
        %711 = vmatpush1.msra.mxu0 0.0
        %712 = vmatprep.subr.mxu0 0.0
        %713 = vmatpush1.msra.mxu0 0.0
        %714 = vmatprep.subr.mxu0 0.0
        %715 = vmatpush1.msra.mxu0 0.0
        %716 = vmatprep.subr.mxu0 0.0
        %717 = vmatpush1.msra.mxu0 0.0
        %718 = vmatprep.subr.mxu0 0.0
        %719 = vmatpush1.msra.mxu0 0.0
        %720 = vmatprep.subr.mxu0 0.0
        %721 = vmatpush1.msra.mxu0 0.0
        %722 = vmatprep.subr.mxu0 0.0
        %723 = vmatpush1.msra.mxu0 0.0
        %724 = vmatprep.subr.mxu0 0.0
        %725 = vmatpush1.msra.mxu0 0.0
        %726 = vmatprep.subr.mxu0 0.0
        %727 = vmatpush1.msra.mxu0 0.0
        %728 = vmatprep.subr.mxu0 0.0
        %729 = vmatpush1.msra.mxu0 0.0
        %730 = vmatprep.subr.mxu0 0.0
        %731 = vmatpush1.msra.mxu0 0.0
        %732 = vmatprep.subr.mxu0 0.0
        %733 = vmatpush1.msra.mxu0 0.0
        %734 = vmatprep.subr.mxu0 0.0
        %735 = vmatpush1.msra.mxu0 0.0
        %736 = vmatprep.subr.mxu0 0.0
        %737 = vmatpush1.msra.mxu0 0.0
        %738 = vmatprep.mubr.f32.mxu0 0.0
        %739 = vmatmul.mubr.f32.gmra.mrb[0].mxu0 %v392
        %v740 = vpop.f32.mrb[0].mxu0
        %v741 = vadd.f32 0.0, %v740
        %v742 = vpop.f32.mrb[0].mxu0
        %743 = vmatprep.mubr.f32.mxu0 0.0
        %744 = vmatmul.mubr.f32.gmra.mrb[0].mxu0 %v394
        %v745 = vpop.f32.mrb[0].mxu0
        %v746 = vadd.f32 0.0, %v745
        %v747 = vpop.f32.mrb[0].mxu0
        %748 = vmatprep.mubr.f32.mxu0 0.0
        %749 = vmatmul.mubr.f32.gmra.mrb[0].mxu0 %v396
        %v750 = vpop.f32.mrb[0].mxu0
        %v751 = vadd.f32 0.0, %v750
        %v752 = vpop.f32.mrb[0].mxu0
        %753 = vmatprep.mubr.f32.mxu0 0.0
        %754 = vmatmul.mubr.f32.gmra.mrb[0].mxu0 %v398
        %v755 = vpop.f32.mrb[0].mxu0
        %v756 = vadd.f32 0.0, %v755
        %v757 = vpop.f32.mrb[0].mxu0
        %758 = vmatprep.mubr.f32.mxu0 0.0
        %759 = vmatmul.mubr.f32.gmra.mrb[0].mxu0 %v400
        %v760 = vpop.f32.mrb[0].mxu0
        %v761 = vadd.f32 0.0, %v760
        %v762 = vpop.f32.mrb[0].mxu0
        %763 = vmatprep.mubr.f32.mxu0 0.0
        %764 = vmatmul.mubr.f32.gmra.mrb[0].mxu0 %v402
        %v765 = vpop.f32.mrb[0].mxu0
        %v766 = vadd.f32 0.0, %v765
        %v767 = vpop.f32.mrb[0].mxu0
        %768 = vmatprep.mubr.f32.mxu0 0.0
        %769 = vmatmul.mubr.f32.gmra.mrb[0].mxu0 %v404
        %v770 = vpop.f32.mrb[0].mxu0
        %v771 = vadd.f32 0.0, %v770
        %v772 = vpop.f32.mrb[0].mxu0
        %773 = vmatprep.mubr.f32.mxu0 0.0
        %774 = vmatmul.mubr.f32.gmra.mrb[0].mxu0 %v413
        %v775 = vpop.f32.mrb[0].mxu0
        %v776 = vadd.f32 0.0, %v775
        %v777 = vpop.f32.mrb[0].mxu0
        %778 = vdwg.mxu0
        %v779 = vadd.f32 %v619, %v741
        %v780 = vadd.f32 %v624, %v746
        %v781 = vadd.f32 %v629, %v751
        %v782 = vadd.f32 %v634, %v756
        %v783 = vadd.f32 %v639, %v761
        %v784 = vadd.f32 %v644, %v766
        %v785 = vadd.f32 %v649, %v771
        %v786 = vadd.f32 %v654, %v776
        %v787 = vld [vmem:[#allocation4] sm:$0x1]
        %v788 = vlaneseq
        %v789 = vshrl.u32 %v788, 7
        %v790 = vsub.s32 0, %v789
        %v791 = vrot.slane %v787, %v790
        %v792 = vadd.f32 %v779, %v791
        %v793 = vadd.f32 %v780, %v791
        %v794 = vadd.f32 %v781, %v791
        %v795 = vadd.f32 %v782, %v791
        %v796 = vadd.f32 %v783, %v791
        %v797 = vadd.f32 %v784, %v791
        %v798 = vadd.f32 %v785, %v791
        %v799 = vadd.f32 %v786, %v791
        %v800 = vmax.f32 %v792, 0.0
        %v801 = vmax.f32 %v793, 0.0
        %v802 = vmax.f32 %v794, 0.0
        %v803 = vmax.f32 %v795, 0.0
        %v804 = vmax.f32 %v796, 0.0
        %v805 = vmax.f32 %v797, 0.0
        %v806 = vmax.f32 %v798, 0.0
        %v807 = vmax.f32 %v799, 0.0
        %v808 = vld [vmem:[#allocation6] sm:$0xff]
        %v809 = vld [vmem:[#allocation6 + $0x8] sm:$0xff]
        %v810 = vld [vmem:[#allocation6 + $0x10] sm:$0xff]
        %v811 = vld [vmem:[#allocation6 + $0x18] sm:$0xff]
        %vm812 = vcmask 523264
        %v814 = vsel %vm812, %v808, 0
        %v817 = vsel %vm812, %v809, 0
        %v820 = vsel %vm812, %v810, 0
        %v823 = vsel %vm812, %v811, 0
        %825 = vmatprep.subr.mxu0 0.0
        %826 = vmatpush1.msra.mxu0 %v800
        %827 = vmatprep.subr.mxu0 0.0
        %828 = vmatpush1.msra.mxu0 %v801
        %829 = vmatprep.subr.mxu0 0.0
        %830 = vmatpush1.msra.mxu0 %v802
        %831 = vmatprep.subr.mxu0 0.0
        %832 = vmatpush1.msra.mxu0 %v803
        %833 = vmatprep.subr.mxu0 0.0
        %834 = vmatpush1.msra.mxu0 %v804
        %835 = vmatprep.subr.mxu0 0.0
        %836 = vmatpush1.msra.mxu0 %v805
        %837 = vmatprep.subr.mxu0 0.0
        %838 = vmatpush1.msra.mxu0 %v806
        %839 = vmatprep.subr.mxu0 0.0
        %840 = vmatpush1.msra.mxu0 %v807
        %841 = vmatprep.subr.mxu0 0.0
        %842 = vmatpush1.msra.mxu0 0.0
        %843 = vmatprep.subr.mxu0 0.0
        %844 = vmatpush1.msra.mxu0 0.0
        %845 = vmatprep.subr.mxu0 0.0
        %846 = vmatpush1.msra.mxu0 0.0
        %847 = vmatprep.subr.mxu0 0.0
        %848 = vmatpush1.msra.mxu0 0.0
        %849 = vmatprep.subr.mxu0 0.0
        %850 = vmatpush1.msra.mxu0 0.0
        %851 = vmatprep.subr.mxu0 0.0
        %852 = vmatpush1.msra.mxu0 0.0
        %853 = vmatprep.subr.mxu0 0.0
        %854 = vmatpush1.msra.mxu0 0.0
        %855 = vmatprep.subr.mxu0 0.0
        %856 = vmatpush1.msra.mxu0 0.0
        %857 = vmatprep.subr.mxu0 0.0
        %858 = vmatpush1.msra.mxu0 0.0
        %859 = vmatprep.subr.mxu0 0.0
        %860 = vmatpush1.msra.mxu0 0.0
        %861 = vmatprep.subr.mxu0 0.0
        %862 = vmatpush1.msra.mxu0 0.0
        %863 = vmatprep.subr.mxu0 0.0
        %864 = vmatpush1.msra.mxu0 0.0
        %865 = vmatprep.subr.mxu0 0.0
        %866 = vmatpush1.msra.mxu0 0.0
        %867 = vmatprep.subr.mxu0 0.0
        %868 = vmatpush1.msra.mxu0 0.0
        %869 = vmatprep.subr.mxu0 0.0
        %870 = vmatpush1.msra.mxu0 0.0
        %871 = vmatprep.subr.mxu0 0.0
        %872 = vmatpush1.msra.mxu0 0.0
        %873 = vmatprep.subr.mxu0 0.0
        %874 = vmatpush1.msra.mxu0 0.0
        %875 = vmatprep.subr.mxu0 0.0
        %876 = vmatpush1.msra.mxu0 0.0
        %877 = vmatprep.subr.mxu0 0.0
        %878 = vmatpush1.msra.mxu0 0.0
        %879 = vmatprep.subr.mxu0 0.0
        %880 = vmatpush1.msra.mxu0 0.0
        %881 = vmatprep.subr.mxu0 0.0
        %882 = vmatpush1.msra.mxu0 0.0
        %883 = vmatprep.subr.mxu0 0.0
        %884 = vmatpush1.msra.mxu0 0.0
        %885 = vmatprep.subr.mxu0 0.0
        %886 = vmatpush1.msra.mxu0 0.0
        %887 = vmatprep.subr.mxu0 0.0
        %888 = vmatpush1.msra.mxu0 0.0
        %889 = vmatprep.mubr.f32.mxu0 0.0
        %890 = vmatmul.mubr.f32.gmra.mrb[0].mxu0 %v814
        %v891 = vpop.f32.mrb[0].mxu0
        %v892 = vadd.f32 0.0, %v891
        %v893 = vpop.f32.mrb[0].mxu0
        %894 = vmatprep.mubr.f32.mxu0 0.0
        %895 = vmatmul.mubr.f32.gmra.mrb[0].mxu0 %v817
        %v896 = vpop.f32.mrb[0].mxu0
        %v897 = vadd.f32 0.0, %v896
        %v898 = vpop.f32.mrb[0].mxu0
        %899 = vmatprep.mubr.f32.mxu0 0.0
        %900 = vmatmul.mubr.f32.gmra.mrb[0].mxu0 %v820
        %v901 = vpop.f32.mrb[0].mxu0
        %v902 = vadd.f32 0.0, %v901
        %v903 = vpop.f32.mrb[0].mxu0
        %904 = vmatprep.mubr.f32.mxu0 0.0
        %905 = vmatmul.mubr.f32.gmra.mrb[0].mxu0 %v823
        %v906 = vpop.f32.mrb[0].mxu0
        %v907 = vadd.f32 0.0, %v906
        %v908 = vpop.f32.mrb[0].mxu0
        %909 = vdwg.mxu0
        %v914 = vrot.slane %v892, 7
        %v915 = vrot.slane %v897, 7
        %v916 = vsel %vm364, %v914, %v915
        %v917 = vrot.slane %v902, 7
        %v918 = vsel %vm364, %v915, %v917
        %v919 = vrot.slane %v907, 7
        %v920 = vsel %vm364, %v917, %v919
        %v925 = vsel %vm364, 0.0, %v914
        %v926 = vrot.slane %v892, 1
        %v927 = vrot.slane %v897, 1
        %v928 = vsel %vm389, %v926, %v927
        %v929 = vrot.slane %v902, 1
        %v930 = vsel %vm389, %v927, %v929
        %v931 = vrot.slane %v907, 1
        %v932 = vsel %vm389, %v929, %v931
        %v937 = vsel %vm389, %v931, 0.0
        %s938 = scalar_lea.vmem [#allocation2], 384
        %v939 = vld [vmem:[%s938] sm:$0xff]
        %v940 = vld [vmem:[%s938 + $0x8] sm:$0xff]
        %v941 = vld [vmem:[%s938 + $0x10] sm:$0xff]
        %v942 = vld [vmem:[%s938 + $0x18] sm:$0xff]
        %v943 = vld [vmem:[%s938 + $0x20] sm:$0xff]
        %v944 = vld [vmem:[%s938 + $0x28] sm:$0xff]
        %v945 = vld [vmem:[%s938 + $0x30] sm:$0xff]
        %v946 = vld [vmem:[%s938 + $0x38] sm:$0xff]
        %v947 = vld [vmem:[%s938 + $0x40] sm:$0xff]
        %v948 = vld [vmem:[%s938 + $0x48] sm:$0xff]
        %v949 = vld [vmem:[%s938 + $0x50] sm:$0xff]
        %v950 = vld [vmem:[%s938 + $0x58] sm:$0xff]
        %v951 = vld [vmem:[%s938 + $0x60] sm:$0xff]
        %v952 = vld [vmem:[%s938 + $0x68] sm:$0xff]
        %v953 = vld [vmem:[%s938 + $0x70] sm:$0xff]
        %v954 = vld [vmem:[%s938 + $0x78] sm:$0xff]
        %s955 = scalar_lea.vmem [#allocation2], 512
        %v956 = vld [vmem:[%s955] sm:$0xff]
        %v957 = vld [vmem:[%s955 + $0x8] sm:$0xff]
        %v958 = vld [vmem:[%s955 + $0x10] sm:$0xff]
        %v959 = vld [vmem:[%s955 + $0x18] sm:$0xff]
        %v960 = vld [vmem:[%s955 + $0x20] sm:$0xff]
        %v961 = vld [vmem:[%s955 + $0x28] sm:$0xff]
        %v962 = vld [vmem:[%s955 + $0x30] sm:$0xff]
        %v963 = vld [vmem:[%s955 + $0x38] sm:$0xff]
        %v964 = vld [vmem:[%s955 + $0x40] sm:$0xff]
        %v965 = vld [vmem:[%s955 + $0x48] sm:$0xff]
        %v966 = vld [vmem:[%s955 + $0x50] sm:$0xff]
        %v967 = vld [vmem:[%s955 + $0x58] sm:$0xff]
        %v968 = vld [vmem:[%s955 + $0x60] sm:$0xff]
        %v969 = vld [vmem:[%s955 + $0x68] sm:$0xff]
        %v970 = vld [vmem:[%s955 + $0x70] sm:$0xff]
        %v971 = vld [vmem:[%s955 + $0x78] sm:$0xff]
        %972 = vmatprep.subr.mxu0 0.0
        %973 = vmatpush1.msra.mxu0 %v956
        %974 = vmatprep.subr.mxu0 0.0
        %975 = vmatpush1.msra.mxu0 %v957
        %976 = vmatprep.subr.mxu0 0.0
        %977 = vmatpush1.msra.mxu0 %v958
        %978 = vmatprep.subr.mxu0 0.0
        %979 = vmatpush1.msra.mxu0 %v959
        %980 = vmatprep.subr.mxu0 0.0
        %981 = vmatpush1.msra.mxu0 %v960
        %982 = vmatprep.subr.mxu0 0.0
        %983 = vmatpush1.msra.mxu0 %v961
        %984 = vmatprep.subr.mxu0 0.0
        %985 = vmatpush1.msra.mxu0 %v962
        %986 = vmatprep.subr.mxu0 0.0
        %987 = vmatpush1.msra.mxu0 %v963
        %988 = vmatprep.subr.mxu0 0.0
        %989 = vmatpush1.msra.mxu0 %v964
        %990 = vmatprep.subr.mxu0 0.0
        %991 = vmatpush1.msra.mxu0 %v965
        %992 = vmatprep.subr.mxu0 0.0
        %993 = vmatpush1.msra.mxu0 %v966
        %994 = vmatprep.subr.mxu0 0.0
        %995 = vmatpush1.msra.mxu0 %v967
        %996 = vmatprep.subr.mxu0 0.0
        %997 = vmatpush1.msra.mxu0 %v968
        %998 = vmatprep.subr.mxu0 0.0
        %999 = vmatpush1.msra.mxu0 %v969
        %1000 = vmatprep.subr.mxu0 0.0
        %1001 = vmatpush1.msra.mxu0 %v970
        %1002 = vmatprep.subr.mxu0 0.0
        %1003 = vmatpush1.msra.mxu0 %v971
        %1004 = vmatprep.subr.mxu0 0.0
        %1005 = vmatpush1.msra.mxu0 0.0
        %1006 = vmatprep.subr.mxu0 0.0
        %1007 = vmatpush1.msra.mxu0 0.0
        %1008 = vmatprep.subr.mxu0 0.0
        %1009 = vmatpush1.msra.mxu0 0.0
        %1010 = vmatprep.subr.mxu0 0.0
        %1011 = vmatpush1.msra.mxu0 0.0
        %1012 = vmatprep.subr.mxu0 0.0
        %1013 = vmatpush1.msra.mxu0 0.0
        %1014 = vmatprep.subr.mxu0 0.0
        %1015 = vmatpush1.msra.mxu0 0.0
        %1016 = vmatprep.subr.mxu0 0.0
        %1017 = vmatpush1.msra.mxu0 0.0
        %1018 = vmatprep.subr.mxu0 0.0
        %1019 = vmatpush1.msra.mxu0 0.0
        %1020 = vmatprep.subr.mxu0 0.0
        %1021 = vmatpush1.msra.mxu0 0.0
        %1022 = vmatprep.subr.mxu0 0.0
        %1023 = vmatpush1.msra.mxu0 0.0
        %1024 = vmatprep.subr.mxu0 0.0
        %1025 = vmatpush1.msra.mxu0 0.0
        %1026 = vmatprep.subr.mxu0 0.0
        %1027 = vmatpush1.msra.mxu0 0.0
        %1028 = vmatprep.subr.mxu0 0.0
        %1029 = vmatpush1.msra.mxu0 0.0
        %1030 = vmatprep.subr.mxu0 0.0
        %1031 = vmatpush1.msra.mxu0 0.0
        %1032 = vmatprep.subr.mxu0 0.0
        %1033 = vmatpush1.msra.mxu0 0.0
        %1034 = vmatprep.subr.mxu0 0.0
        %1035 = vmatpush1.msra.mxu0 0.0
        %1036 = vmatprep.mubr.f32.mxu0 0.0
        %1037 = vmatmul.mubr.f32.gmra.mrb[0].mxu0 %v892
        %v1038 = vpop.f32.mrb[0].mxu0
        %v1039 = vadd.f32 0.0, %v1038
        %v1040 = vpop.f32.mrb[0].mxu0
        %1041 = vmatprep.mubr.f32.mxu0 0.0
        %1042 = vmatmul.mubr.f32.gmra.mrb[0].mxu0 %v897
        %v1043 = vpop.f32.mrb[0].mxu0
        %v1044 = vadd.f32 0.0, %v1043
        %v1045 = vpop.f32.mrb[0].mxu0
        %1046 = vmatprep.mubr.f32.mxu0 0.0
        %1047 = vmatmul.mubr.f32.gmra.mrb[0].mxu0 %v902
        %v1048 = vpop.f32.mrb[0].mxu0
        %v1049 = vadd.f32 0.0, %v1048
        %v1050 = vpop.f32.mrb[0].mxu0
        %1051 = vmatprep.mubr.f32.mxu0 0.0
        %1052 = vmatmul.mubr.f32.gmra.mrb[0].mxu0 %v907
        %v1053 = vpop.f32.mrb[0].mxu0
        %v1054 = vadd.f32 0.0, %v1053
        %v1055 = vpop.f32.mrb[0].mxu0
        %1056 = vdwg.mxu0
        %1057 = vmatprep.subr.mxu0 0.0
        %1058 = vmatpush1.msra.mxu0 %v939
        %1059 = vmatprep.subr.mxu0 0.0
        %1060 = vmatpush1.msra.mxu0 %v940
        %1061 = vmatprep.subr.mxu0 0.0
        %1062 = vmatpush1.msra.mxu0 %v941
        %1063 = vmatprep.subr.mxu0 0.0
        %1064 = vmatpush1.msra.mxu0 %v942
        %1065 = vmatprep.subr.mxu0 0.0
        %1066 = vmatpush1.msra.mxu0 %v943
        %1067 = vmatprep.subr.mxu0 0.0
        %1068 = vmatpush1.msra.mxu0 %v944
        %1069 = vmatprep.subr.mxu0 0.0
        %1070 = vmatpush1.msra.mxu0 %v945
        %1071 = vmatprep.subr.mxu0 0.0
        %1072 = vmatpush1.msra.mxu0 %v946
        %1073 = vmatprep.subr.mxu0 0.0
        %1074 = vmatpush1.msra.mxu0 %v947
        %1075 = vmatprep.subr.mxu0 0.0
        %1076 = vmatpush1.msra.mxu0 %v948
        %1077 = vmatprep.subr.mxu0 0.0
        %1078 = vmatpush1.msra.mxu0 %v949
        %1079 = vmatprep.subr.mxu0 0.0
        %1080 = vmatpush1.msra.mxu0 %v950
        %1081 = vmatprep.subr.mxu0 0.0
        %1082 = vmatpush1.msra.mxu0 %v951
        %1083 = vmatprep.subr.mxu0 0.0
        %1084 = vmatpush1.msra.mxu0 %v952
        %1085 = vmatprep.subr.mxu0 0.0
        %1086 = vmatpush1.msra.mxu0 %v953
        %1087 = vmatprep.subr.mxu0 0.0
        %1088 = vmatpush1.msra.mxu0 %v954
        %1089 = vmatprep.subr.mxu0 0.0
        %1090 = vmatpush1.msra.mxu0 0.0
        %1091 = vmatprep.subr.mxu0 0.0
        %1092 = vmatpush1.msra.mxu0 0.0
        %1093 = vmatprep.subr.mxu0 0.0
        %1094 = vmatpush1.msra.mxu0 0.0
        %1095 = vmatprep.subr.mxu0 0.0
        %1096 = vmatpush1.msra.mxu0 0.0
        %1097 = vmatprep.subr.mxu0 0.0
        %1098 = vmatpush1.msra.mxu0 0.0
        %1099 = vmatprep.subr.mxu0 0.0
        %1100 = vmatpush1.msra.mxu0 0.0
        %1101 = vmatprep.subr.mxu0 0.0
        %1102 = vmatpush1.msra.mxu0 0.0
        %1103 = vmatprep.subr.mxu0 0.0
        %1104 = vmatpush1.msra.mxu0 0.0
        %1105 = vmatprep.subr.mxu0 0.0
        %1106 = vmatpush1.msra.mxu0 0.0
        %1107 = vmatprep.subr.mxu0 0.0
        %1108 = vmatpush1.msra.mxu0 0.0
        %1109 = vmatprep.subr.mxu0 0.0
        %1110 = vmatpush1.msra.mxu0 0.0
        %1111 = vmatprep.subr.mxu0 0.0
        %1112 = vmatpush1.msra.mxu0 0.0
        %1113 = vmatprep.subr.mxu0 0.0
        %1114 = vmatpush1.msra.mxu0 0.0
        %1115 = vmatprep.subr.mxu0 0.0
        %1116 = vmatpush1.msra.mxu0 0.0
        %1117 = vmatprep.subr.mxu0 0.0
        %1118 = vmatpush1.msra.mxu0 0.0
        %1119 = vmatprep.subr.mxu0 0.0
        %1120 = vmatpush1.msra.mxu0 0.0
        %1121 = vmatprep.mubr.f32.mxu0 0.0
        %1122 = vmatmul.mubr.f32.gmra.mrb[0].mxu0 %v925
        %v1123 = vpop.f32.mrb[0].mxu0
        %v1124 = vadd.f32 %v1039, %v1123
        %v1125 = vpop.f32.mrb[0].mxu0
        %1126 = vmatprep.mubr.f32.mxu0 0.0
        %1127 = vmatmul.mubr.f32.gmra.mrb[0].mxu0 %v916
        %v1128 = vpop.f32.mrb[0].mxu0
        %v1129 = vadd.f32 %v1044, %v1128
        %v1130 = vpop.f32.mrb[0].mxu0
        %1131 = vmatprep.mubr.f32.mxu0 0.0
        %1132 = vmatmul.mubr.f32.gmra.mrb[0].mxu0 %v918
        %v1133 = vpop.f32.mrb[0].mxu0
        %v1134 = vadd.f32 %v1049, %v1133
        %v1135 = vpop.f32.mrb[0].mxu0
        %1136 = vmatprep.mubr.f32.mxu0 0.0
        %1137 = vmatmul.mubr.f32.gmra.mrb[0].mxu0 %v920
        %v1138 = vpop.f32.mrb[0].mxu0
        %v1139 = vadd.f32 %v1054, %v1138
        %v1140 = vpop.f32.mrb[0].mxu0
        %1141 = vdwg.mxu0
        %s1142 = scalar_lea.vmem [#allocation2], 640
        %v1143 = vld [vmem:[%s1142] sm:$0xff]
        %v1144 = vld [vmem:[%s1142 + $0x8] sm:$0xff]
        %v1145 = vld [vmem:[%s1142 + $0x10] sm:$0xff]
        %v1146 = vld [vmem:[%s1142 + $0x18] sm:$0xff]
        %v1147 = vld [vmem:[%s1142 + $0x20] sm:$0xff]
        %v1148 = vld [vmem:[%s1142 + $0x28] sm:$0xff]
        %v1149 = vld [vmem:[%s1142 + $0x30] sm:$0xff]
        %v1150 = vld [vmem:[%s1142 + $0x38] sm:$0xff]
        %v1151 = vld [vmem:[%s1142 + $0x40] sm:$0xff]
        %v1152 = vld [vmem:[%s1142 + $0x48] sm:$0xff]
        %v1153 = vld [vmem:[%s1142 + $0x50] sm:$0xff]
        %v1154 = vld [vmem:[%s1142 + $0x58] sm:$0xff]
        %v1155 = vld [vmem:[%s1142 + $0x60] sm:$0xff]
        %v1156 = vld [vmem:[%s1142 + $0x68] sm:$0xff]
        %v1157 = vld [vmem:[%s1142 + $0x70] sm:$0xff]
        %v1158 = vld [vmem:[%s1142 + $0x78] sm:$0xff]
        %1159 = vmatprep.subr.mxu0 0.0
        %1160 = vmatpush1.msra.mxu0 %v1143
        %1161 = vmatprep.subr.mxu0 0.0
        %1162 = vmatpush1.msra.mxu0 %v1144
        %1163 = vmatprep.subr.mxu0 0.0
        %1164 = vmatpush1.msra.mxu0 %v1145
        %1165 = vmatprep.subr.mxu0 0.0
        %1166 = vmatpush1.msra.mxu0 %v1146
        %1167 = vmatprep.subr.mxu0 0.0
        %1168 = vmatpush1.msra.mxu0 %v1147
        %1169 = vmatprep.subr.mxu0 0.0
        %1170 = vmatpush1.msra.mxu0 %v1148
        %1171 = vmatprep.subr.mxu0 0.0
        %1172 = vmatpush1.msra.mxu0 %v1149
        %1173 = vmatprep.subr.mxu0 0.0
        %1174 = vmatpush1.msra.mxu0 %v1150
        %1175 = vmatprep.subr.mxu0 0.0
        %1176 = vmatpush1.msra.mxu0 %v1151
        %1177 = vmatprep.subr.mxu0 0.0
        %1178 = vmatpush1.msra.mxu0 %v1152
        %1179 = vmatprep.subr.mxu0 0.0
        %1180 = vmatpush1.msra.mxu0 %v1153
        %1181 = vmatprep.subr.mxu0 0.0
        %1182 = vmatpush1.msra.mxu0 %v1154
        %1183 = vmatprep.subr.mxu0 0.0
        %1184 = vmatpush1.msra.mxu0 %v1155
        %1185 = vmatprep.subr.mxu0 0.0
        %1186 = vmatpush1.msra.mxu0 %v1156
        %1187 = vmatprep.subr.mxu0 0.0
        %1188 = vmatpush1.msra.mxu0 %v1157
        %1189 = vmatprep.subr.mxu0 0.0
        %1190 = vmatpush1.msra.mxu0 %v1158
        %1191 = vmatprep.subr.mxu0 0.0
        %1192 = vmatpush1.msra.mxu0 0.0
        %1193 = vmatprep.subr.mxu0 0.0
        %1194 = vmatpush1.msra.mxu0 0.0
        %1195 = vmatprep.subr.mxu0 0.0
        %1196 = vmatpush1.msra.mxu0 0.0
        %1197 = vmatprep.subr.mxu0 0.0
        %1198 = vmatpush1.msra.mxu0 0.0
        %1199 = vmatprep.subr.mxu0 0.0
        %1200 = vmatpush1.msra.mxu0 0.0
        %1201 = vmatprep.subr.mxu0 0.0
        %1202 = vmatpush1.msra.mxu0 0.0
        %1203 = vmatprep.subr.mxu0 0.0
        %1204 = vmatpush1.msra.mxu0 0.0
        %1205 = vmatprep.subr.mxu0 0.0
        %1206 = vmatpush1.msra.mxu0 0.0
        %1207 = vmatprep.subr.mxu0 0.0
        %1208 = vmatpush1.msra.mxu0 0.0
        %1209 = vmatprep.subr.mxu0 0.0
        %1210 = vmatpush1.msra.mxu0 0.0
        %1211 = vmatprep.subr.mxu0 0.0
        %1212 = vmatpush1.msra.mxu0 0.0
        %1213 = vmatprep.subr.mxu0 0.0
        %1214 = vmatpush1.msra.mxu0 0.0
        %1215 = vmatprep.subr.mxu0 0.0
        %1216 = vmatpush1.msra.mxu0 0.0
        %1217 = vmatprep.subr.mxu0 0.0
        %1218 = vmatpush1.msra.mxu0 0.0
        %1219 = vmatprep.subr.mxu0 0.0
        %1220 = vmatpush1.msra.mxu0 0.0
        %1221 = vmatprep.subr.mxu0 0.0
        %1222 = vmatpush1.msra.mxu0 0.0
        %1223 = vmatprep.mubr.f32.mxu0 0.0
        %1224 = vmatmul.mubr.f32.gmra.mrb[0].mxu0 %v928
        %v1225 = vpop.f32.mrb[0].mxu0
        %v1226 = vadd.f32 0.0, %v1225
        %v1227 = vpop.f32.mrb[0].mxu0
        %1228 = vmatprep.mubr.f32.mxu0 0.0
        %1229 = vmatmul.mubr.f32.gmra.mrb[0].mxu0 %v930
        %v1230 = vpop.f32.mrb[0].mxu0
        %v1231 = vadd.f32 0.0, %v1230
        %v1232 = vpop.f32.mrb[0].mxu0
        %1233 = vmatprep.mubr.f32.mxu0 0.0
        %1234 = vmatmul.mubr.f32.gmra.mrb[0].mxu0 %v932
        %v1235 = vpop.f32.mrb[0].mxu0
        %v1236 = vadd.f32 0.0, %v1235
        %v1237 = vpop.f32.mrb[0].mxu0
        %1238 = vmatprep.mubr.f32.mxu0 0.0
        %1239 = vmatmul.mubr.f32.gmra.mrb[0].mxu0 %v937
        %v1240 = vpop.f32.mrb[0].mxu0
        %v1241 = vadd.f32 0.0, %v1240
        %v1242 = vpop.f32.mrb[0].mxu0
        %1243 = vdwg.mxu0
        %v1244 = vadd.f32 %v1124, %v1226
        %v1245 = vadd.f32 %v1129, %v1231
        %v1246 = vadd.f32 %v1134, %v1236
        %v1247 = vadd.f32 %v1139, %v1241
        %v1248 = vld [vmem:[#allocation4 + $0x1] sm:$0x1]
        %v1249 = vlaneseq
        %v1250 = vshrl.u32 %v1249, 7
        %v1251 = vsub.s32 0, %v1250
        %v1252 = vrot.slane %v1248, %v1251
        %v1253 = vadd.f32 %v1244, %v1252
        %v1254 = vadd.f32 %v1245, %v1252
        %v1255 = vadd.f32 %v1246, %v1252
        %v1256 = vadd.f32 %v1247, %v1252
        %v1257 = vmax.f32 %v1253, 0.0
        %v1258 = vmax.f32 %v1254, 0.0
        %v1259 = vmax.f32 %v1255, 0.0
        %v1260 = vmax.f32 %v1256, 0.0
        %v1261 = vld [vmem:[#allocation7] sm:$0xff]
        %v1262 = vld [vmem:[#allocation7 + $0x8] sm:$0xff]
        %vm1263 = vcmask 261120
        %v1265 = vsel %vm1263, %v1261, 0
        %v1268 = vsel %vm1263, %v1262, 0
        %1270 = vmatprep.subr.mxu0 0.0
        %1271 = vmatpush1.msra.mxu0 %v1257
        %1272 = vmatprep.subr.mxu0 0.0
        %1273 = vmatpush1.msra.mxu0 %v1258
        %1274 = vmatprep.subr.mxu0 0.0
        %1275 = vmatpush1.msra.mxu0 %v1259
        %1276 = vmatprep.subr.mxu0 0.0
        %1277 = vmatpush1.msra.mxu0 %v1260
        %1278 = vmatprep.subr.mxu0 0.0
        %1279 = vmatpush1.msra.mxu0 0.0
        %1280 = vmatprep.subr.mxu0 0.0
        %1281 = vmatpush1.msra.mxu0 0.0
        %1282 = vmatprep.subr.mxu0 0.0
        %1283 = vmatpush1.msra.mxu0 0.0
        %1284 = vmatprep.subr.mxu0 0.0
        %1285 = vmatpush1.msra.mxu0 0.0
        %1286 = vmatprep.subr.mxu0 0.0
        %1287 = vmatpush1.msra.mxu0 0.0
        %1288 = vmatprep.subr.mxu0 0.0
        %1289 = vmatpush1.msra.mxu0 0.0
        %1290 = vmatprep.subr.mxu0 0.0
        %1291 = vmatpush1.msra.mxu0 0.0
        %1292 = vmatprep.subr.mxu0 0.0
        %1293 = vmatpush1.msra.mxu0 0.0
        %1294 = vmatprep.subr.mxu0 0.0
        %1295 = vmatpush1.msra.mxu0 0.0
        %1296 = vmatprep.subr.mxu0 0.0
        %1297 = vmatpush1.msra.mxu0 0.0
        %1298 = vmatprep.subr.mxu0 0.0
        %1299 = vmatpush1.msra.mxu0 0.0
        %1300 = vmatprep.subr.mxu0 0.0
        %1301 = vmatpush1.msra.mxu0 0.0
        %1302 = vmatprep.subr.mxu0 0.0
        %1303 = vmatpush1.msra.mxu0 0.0
        %1304 = vmatprep.subr.mxu0 0.0
        %1305 = vmatpush1.msra.mxu0 0.0
        %1306 = vmatprep.subr.mxu0 0.0
        %1307 = vmatpush1.msra.mxu0 0.0
        %1308 = vmatprep.subr.mxu0 0.0
        %1309 = vmatpush1.msra.mxu0 0.0
        %1310 = vmatprep.subr.mxu0 0.0
        %1311 = vmatpush1.msra.mxu0 0.0
        %1312 = vmatprep.subr.mxu0 0.0
        %1313 = vmatpush1.msra.mxu0 0.0
        %1314 = vmatprep.subr.mxu0 0.0
        %1315 = vmatpush1.msra.mxu0 0.0
        %1316 = vmatprep.subr.mxu0 0.0
        %1317 = vmatpush1.msra.mxu0 0.0
        %1318 = vmatprep.subr.mxu0 0.0
        %1319 = vmatpush1.msra.mxu0 0.0
        %1320 = vmatprep.subr.mxu0 0.0
        %1321 = vmatpush1.msra.mxu0 0.0
        %1322 = vmatprep.subr.mxu0 0.0
        %1323 = vmatpush1.msra.mxu0 0.0
        %1324 = vmatprep.subr.mxu0 0.0
        %1325 = vmatpush1.msra.mxu0 0.0
        %1326 = vmatprep.subr.mxu0 0.0
        %1327 = vmatpush1.msra.mxu0 0.0
        %1328 = vmatprep.subr.mxu0 0.0
        %1329 = vmatpush1.msra.mxu0 0.0
        %1330 = vmatprep.subr.mxu0 0.0
        %1331 = vmatpush1.msra.mxu0 0.0
        %1332 = vmatprep.subr.mxu0 0.0
        %1333 = vmatpush1.msra.mxu0 0.0
        %1334 = vmatprep.mubr.f32.mxu0 0.0
        %1335 = vmatmul.mubr.f32.gmra.mrb[0].mxu0 %v1265
        %v1336 = vpop.f32.mrb[0].mxu0
        %v1337 = vadd.f32 0.0, %v1336
        %v1338 = vpop.f32.mrb[0].mxu0
        %1339 = vmatprep.mubr.f32.mxu0 0.0
        %1340 = vmatmul.mubr.f32.gmra.mrb[0].mxu0 %v1268
        %v1341 = vpop.f32.mrb[0].mxu0
        %v1342 = vadd.f32 0.0, %v1341
        %v1343 = vpop.f32.mrb[0].mxu0
        %1344 = vdwg.mxu0
        %v1347 = vrot.slane %v1337, 7
        %v1348 = vrot.slane %v1342, 7
        %v1349 = vsel %vm364, %v1347, %v1348
        %v1352 = vsel %vm364, 0.0, %v1347
        %v1353 = vrot.slane %v1337, 1
        %v1354 = vrot.slane %v1342, 1
        %v1355 = vsel %vm389, %v1353, %v1354
        %v1358 = vsel %vm389, %v1354, 0.0
        %s1359 = scalar_lea.vmem [#allocation2], 768
        %v1360 = vld [vmem:[%s1359] sm:$0xff]
        %v1361 = vld [vmem:[%s1359 + $0x8] sm:$0xff]
        %v1362 = vld [vmem:[%s1359 + $0x10] sm:$0xff]
        %v1363 = vld [vmem:[%s1359 + $0x18] sm:$0xff]
        %v1364 = vld [vmem:[%s1359 + $0x20] sm:$0xff]
        %v1365 = vld [vmem:[%s1359 + $0x28] sm:$0xff]
        %v1366 = vld [vmem:[%s1359 + $0x30] sm:$0xff]
        %v1367 = vld [vmem:[%s1359 + $0x38] sm:$0xff]
        %v1368 = vld [vmem:[%s1359 + $0x40] sm:$0xff]
        %v1369 = vld [vmem:[%s1359 + $0x48] sm:$0xff]
        %v1370 = vld [vmem:[%s1359 + $0x50] sm:$0xff]
        %v1371 = vld [vmem:[%s1359 + $0x58] sm:$0xff]
        %v1372 = vld [vmem:[%s1359 + $0x60] sm:$0xff]
        %v1373 = vld [vmem:[%s1359 + $0x68] sm:$0xff]
        %v1374 = vld [vmem:[%s1359 + $0x70] sm:$0xff]
        %v1375 = vld [vmem:[%s1359 + $0x78] sm:$0xff]
        %s1376 = scalar_lea.vmem [#allocation2], 896
        %v1377 = vld [vmem:[%s1376] sm:$0xff]
        %v1378 = vld [vmem:[%s1376 + $0x8] sm:$0xff]
        %v1379 = vld [vmem:[%s1376 + $0x10] sm:$0xff]
        %v1380 = vld [vmem:[%s1376 + $0x18] sm:$0xff]
        %v1381 = vld [vmem:[%s1376 + $0x20] sm:$0xff]
        %v1382 = vld [vmem:[%s1376 + $0x28] sm:$0xff]
        %v1383 = vld [vmem:[%s1376 + $0x30] sm:$0xff]
        %v1384 = vld [vmem:[%s1376 + $0x38] sm:$0xff]
        %v1385 = vld [vmem:[%s1376 + $0x40] sm:$0xff]
        %v1386 = vld [vmem:[%s1376 + $0x48] sm:$0xff]
        %v1387 = vld [vmem:[%s1376 + $0x50] sm:$0xff]
        %v1388 = vld [vmem:[%s1376 + $0x58] sm:$0xff]
        %v1389 = vld [vmem:[%s1376 + $0x60] sm:$0xff]
        %v1390 = vld [vmem:[%s1376 + $0x68] sm:$0xff]
        %v1391 = vld [vmem:[%s1376 + $0x70] sm:$0xff]
        %v1392 = vld [vmem:[%s1376 + $0x78] sm:$0xff]
        %1393 = vmatprep.subr.mxu0 0.0
        %1394 = vmatpush1.msra.mxu0 %v1377
        %1395 = vmatprep.subr.mxu0 0.0
        %1396 = vmatpush1.msra.mxu0 %v1378
        %1397 = vmatprep.subr.mxu0 0.0
        %1398 = vmatpush1.msra.mxu0 %v1379
        %1399 = vmatprep.subr.mxu0 0.0
        %1400 = vmatpush1.msra.mxu0 %v1380
        %1401 = vmatprep.subr.mxu0 0.0
        %1402 = vmatpush1.msra.mxu0 %v1381
        %1403 = vmatprep.subr.mxu0 0.0
        %1404 = vmatpush1.msra.mxu0 %v1382
        %1405 = vmatprep.subr.mxu0 0.0
        %1406 = vmatpush1.msra.mxu0 %v1383
        %1407 = vmatprep.subr.mxu0 0.0
        %1408 = vmatpush1.msra.mxu0 %v1384
        %1409 = vmatprep.subr.mxu0 0.0
        %1410 = vmatpush1.msra.mxu0 %v1385
        %1411 = vmatprep.subr.mxu0 0.0
        %1412 = vmatpush1.msra.mxu0 %v1386
        %1413 = vmatprep.subr.mxu0 0.0
        %1414 = vmatpush1.msra.mxu0 %v1387
        %1415 = vmatprep.subr.mxu0 0.0
        %1416 = vmatpush1.msra.mxu0 %v1388
        %1417 = vmatprep.subr.mxu0 0.0
        %1418 = vmatpush1.msra.mxu0 %v1389
        %1419 = vmatprep.subr.mxu0 0.0
        %1420 = vmatpush1.msra.mxu0 %v1390
        %1421 = vmatprep.subr.mxu0 0.0
        %1422 = vmatpush1.msra.mxu0 %v1391
        %1423 = vmatprep.subr.mxu0 0.0
        %1424 = vmatpush1.msra.mxu0 %v1392
        %1425 = vmatprep.subr.mxu0 0.0
        %1426 = vmatpush1.msra.mxu0 0.0
        %1427 = vmatprep.subr.mxu0 0.0
        %1428 = vmatpush1.msra.mxu0 0.0
        %1429 = vmatprep.subr.mxu0 0.0
        %1430 = vmatpush1.msra.mxu0 0.0
        %1431 = vmatprep.subr.mxu0 0.0
        %1432 = vmatpush1.msra.mxu0 0.0
        %1433 = vmatprep.subr.mxu0 0.0
        %1434 = vmatpush1.msra.mxu0 0.0
        %1435 = vmatprep.subr.mxu0 0.0
        %1436 = vmatpush1.msra.mxu0 0.0
        %1437 = vmatprep.subr.mxu0 0.0
        %1438 = vmatpush1.msra.mxu0 0.0
        %1439 = vmatprep.subr.mxu0 0.0
        %1440 = vmatpush1.msra.mxu0 0.0
        %1441 = vmatprep.subr.mxu0 0.0
        %1442 = vmatpush1.msra.mxu0 0.0
        %1443 = vmatprep.subr.mxu0 0.0
        %1444 = vmatpush1.msra.mxu0 0.0
        %1445 = vmatprep.subr.mxu0 0.0
        %1446 = vmatpush1.msra.mxu0 0.0
        %1447 = vmatprep.subr.mxu0 0.0
        %1448 = vmatpush1.msra.mxu0 0.0
        %1449 = vmatprep.subr.mxu0 0.0
        %1450 = vmatpush1.msra.mxu0 0.0
        %1451 = vmatprep.subr.mxu0 0.0
        %1452 = vmatpush1.msra.mxu0 0.0
        %1453 = vmatprep.subr.mxu0 0.0
        %1454 = vmatpush1.msra.mxu0 0.0
        %1455 = vmatprep.subr.mxu0 0.0
        %1456 = vmatpush1.msra.mxu0 0.0
        %1457 = vmatprep.mubr.f32.mxu0 0.0
        %1458 = vmatmul.mubr.f32.gmra.mrb[0].mxu0 %v1337
        %v1459 = vpop.f32.mrb[0].mxu0
        %v1460 = vadd.f32 0.0, %v1459
        %v1461 = vpop.f32.mrb[0].mxu0
        %1462 = vmatprep.mubr.f32.mxu0 0.0
        %1463 = vmatmul.mubr.f32.gmra.mrb[0].mxu0 %v1342
        %v1464 = vpop.f32.mrb[0].mxu0
        %v1465 = vadd.f32 0.0, %v1464
        %v1466 = vpop.f32.mrb[0].mxu0
        %1467 = vdwg.mxu0
        %1468 = vmatprep.subr.mxu0 0.0
        %1469 = vmatpush1.msra.mxu0 %v1360
        %1470 = vmatprep.subr.mxu0 0.0
        %1471 = vmatpush1.msra.mxu0 %v1361
        %1472 = vmatprep.subr.mxu0 0.0
        %1473 = vmatpush1.msra.mxu0 %v1362
        %1474 = vmatprep.subr.mxu0 0.0
        %1475 = vmatpush1.msra.mxu0 %v1363
        %1476 = vmatprep.subr.mxu0 0.0
        %1477 = vmatpush1.msra.mxu0 %v1364
        %1478 = vmatprep.subr.mxu0 0.0
        %1479 = vmatpush1.msra.mxu0 %v1365
        %1480 = vmatprep.subr.mxu0 0.0
        %1481 = vmatpush1.msra.mxu0 %v1366
        %1482 = vmatprep.subr.mxu0 0.0
        %1483 = vmatpush1.msra.mxu0 %v1367
        %1484 = vmatprep.subr.mxu0 0.0
        %1485 = vmatpush1.msra.mxu0 %v1368
        %1486 = vmatprep.subr.mxu0 0.0
        %1487 = vmatpush1.msra.mxu0 %v1369
        %1488 = vmatprep.subr.mxu0 0.0
        %1489 = vmatpush1.msra.mxu0 %v1370
        %1490 = vmatprep.subr.mxu0 0.0
        %1491 = vmatpush1.msra.mxu0 %v1371
        %1492 = vmatprep.subr.mxu0 0.0
        %1493 = vmatpush1.msra.mxu0 %v1372
        %1494 = vmatprep.subr.mxu0 0.0
        %1495 = vmatpush1.msra.mxu0 %v1373
        %1496 = vmatprep.subr.mxu0 0.0
        %1497 = vmatpush1.msra.mxu0 %v1374
        %1498 = vmatprep.subr.mxu0 0.0
        %1499 = vmatpush1.msra.mxu0 %v1375
        %1500 = vmatprep.subr.mxu0 0.0
        %1501 = vmatpush1.msra.mxu0 0.0
        %1502 = vmatprep.subr.mxu0 0.0
        %1503 = vmatpush1.msra.mxu0 0.0
        %1504 = vmatprep.subr.mxu0 0.0
        %1505 = vmatpush1.msra.mxu0 0.0
        %1506 = vmatprep.subr.mxu0 0.0
        %1507 = vmatpush1.msra.mxu0 0.0
        %1508 = vmatprep.subr.mxu0 0.0
        %1509 = vmatpush1.msra.mxu0 0.0
        %1510 = vmatprep.subr.mxu0 0.0
        %1511 = vmatpush1.msra.mxu0 0.0
        %1512 = vmatprep.subr.mxu0 0.0
        %1513 = vmatpush1.msra.mxu0 0.0
        %1514 = vmatprep.subr.mxu0 0.0
        %1515 = vmatpush1.msra.mxu0 0.0
        %1516 = vmatprep.subr.mxu0 0.0
        %1517 = vmatpush1.msra.mxu0 0.0
        %1518 = vmatprep.subr.mxu0 0.0
        %1519 = vmatpush1.msra.mxu0 0.0
        %1520 = vmatprep.subr.mxu0 0.0
        %1521 = vmatpush1.msra.mxu0 0.0
        %1522 = vmatprep.subr.mxu0 0.0
        %1523 = vmatpush1.msra.mxu0 0.0
        %1524 = vmatprep.subr.mxu0 0.0
        %1525 = vmatpush1.msra.mxu0 0.0
        %1526 = vmatprep.subr.mxu0 0.0
        %1527 = vmatpush1.msra.mxu0 0.0
        %1528 = vmatprep.subr.mxu0 0.0
        %1529 = vmatpush1.msra.mxu0 0.0
        %1530 = vmatprep.subr.mxu0 0.0
        %1531 = vmatpush1.msra.mxu0 0.0
        %1532 = vmatprep.mubr.f32.mxu0 0.0
        %1533 = vmatmul.mubr.f32.gmra.mrb[0].mxu0 %v1352
        %v1534 = vpop.f32.mrb[0].mxu0
        %v1535 = vadd.f32 %v1460, %v1534
        %v1536 = vpop.f32.mrb[0].mxu0
        %1537 = vmatprep.mubr.f32.mxu0 0.0
        %1538 = vmatmul.mubr.f32.gmra.mrb[0].mxu0 %v1349
        %v1539 = vpop.f32.mrb[0].mxu0
        %v1540 = vadd.f32 %v1465, %v1539
        %v1541 = vpop.f32.mrb[0].mxu0
        %1542 = vdwg.mxu0
        %s1543 = scalar_lea.vmem [#allocation2], 1024
        %v1544 = vld [vmem:[%s1543] sm:$0xff]
        %v1545 = vld [vmem:[%s1543 + $0x8] sm:$0xff]
        %v1546 = vld [vmem:[%s1543 + $0x10] sm:$0xff]
        %v1547 = vld [vmem:[%s1543 + $0x18] sm:$0xff]
        %v1548 = vld [vmem:[%s1543 + $0x20] sm:$0xff]
        %v1549 = vld [vmem:[%s1543 + $0x28] sm:$0xff]
        %v1550 = vld [vmem:[%s1543 + $0x30] sm:$0xff]
        %v1551 = vld [vmem:[%s1543 + $0x38] sm:$0xff]
        %v1552 = vld [vmem:[%s1543 + $0x40] sm:$0xff]
        %v1553 = vld [vmem:[%s1543 + $0x48] sm:$0xff]
        %v1554 = vld [vmem:[%s1543 + $0x50] sm:$0xff]
        %v1555 = vld [vmem:[%s1543 + $0x58] sm:$0xff]
        %v1556 = vld [vmem:[%s1543 + $0x60] sm:$0xff]
        %v1557 = vld [vmem:[%s1543 + $0x68] sm:$0xff]
        %v1558 = vld [vmem:[%s1543 + $0x70] sm:$0xff]
        %v1559 = vld [vmem:[%s1543 + $0x78] sm:$0xff]
        %1560 = vmatprep.subr.mxu0 0.0
        %1561 = vmatpush1.msra.mxu0 %v1544
        %1562 = vmatprep.subr.mxu0 0.0
        %1563 = vmatpush1.msra.mxu0 %v1545
        %1564 = vmatprep.subr.mxu0 0.0
        %1565 = vmatpush1.msra.mxu0 %v1546
        %1566 = vmatprep.subr.mxu0 0.0
        %1567 = vmatpush1.msra.mxu0 %v1547
        %1568 = vmatprep.subr.mxu0 0.0
        %1569 = vmatpush1.msra.mxu0 %v1548
        %1570 = vmatprep.subr.mxu0 0.0
        %1571 = vmatpush1.msra.mxu0 %v1549
        %1572 = vmatprep.subr.mxu0 0.0
        %1573 = vmatpush1.msra.mxu0 %v1550
        %1574 = vmatprep.subr.mxu0 0.0
        %1575 = vmatpush1.msra.mxu0 %v1551
        %1576 = vmatprep.subr.mxu0 0.0
        %1577 = vmatpush1.msra.mxu0 %v1552
        %1578 = vmatprep.subr.mxu0 0.0
        %1579 = vmatpush1.msra.mxu0 %v1553
        %1580 = vmatprep.subr.mxu0 0.0
        %1581 = vmatpush1.msra.mxu0 %v1554
        %1582 = vmatprep.subr.mxu0 0.0
        %1583 = vmatpush1.msra.mxu0 %v1555
        %1584 = vmatprep.subr.mxu0 0.0
        %1585 = vmatpush1.msra.mxu0 %v1556
        %1586 = vmatprep.subr.mxu0 0.0
        %1587 = vmatpush1.msra.mxu0 %v1557
        %1588 = vmatprep.subr.mxu0 0.0
        %1589 = vmatpush1.msra.mxu0 %v1558
        %1590 = vmatprep.subr.mxu0 0.0
        %1591 = vmatpush1.msra.mxu0 %v1559
        %1592 = vmatprep.subr.mxu0 0.0
        %1593 = vmatpush1.msra.mxu0 0.0
        %1594 = vmatprep.subr.mxu0 0.0
        %1595 = vmatpush1.msra.mxu0 0.0
        %1596 = vmatprep.subr.mxu0 0.0
        %1597 = vmatpush1.msra.mxu0 0.0
        %1598 = vmatprep.subr.mxu0 0.0
        %1599 = vmatpush1.msra.mxu0 0.0
        %1600 = vmatprep.subr.mxu0 0.0
        %1601 = vmatpush1.msra.mxu0 0.0
        %1602 = vmatprep.subr.mxu0 0.0
        %1603 = vmatpush1.msra.mxu0 0.0
        %1604 = vmatprep.subr.mxu0 0.0
        %1605 = vmatpush1.msra.mxu0 0.0
        %1606 = vmatprep.subr.mxu0 0.0
        %1607 = vmatpush1.msra.mxu0 0.0
        %1608 = vmatprep.subr.mxu0 0.0
        %1609 = vmatpush1.msra.mxu0 0.0
        %1610 = vmatprep.subr.mxu0 0.0
        %1611 = vmatpush1.msra.mxu0 0.0
        %1612 = vmatprep.subr.mxu0 0.0
        %1613 = vmatpush1.msra.mxu0 0.0
        %1614 = vmatprep.subr.mxu0 0.0
        %1615 = vmatpush1.msra.mxu0 0.0
        %1616 = vmatprep.subr.mxu0 0.0
        %1617 = vmatpush1.msra.mxu0 0.0
        %1618 = vmatprep.subr.mxu0 0.0
        %1619 = vmatpush1.msra.mxu0 0.0
        %1620 = vmatprep.subr.mxu0 0.0
        %1621 = vmatpush1.msra.mxu0 0.0
        %1622 = vmatprep.subr.mxu0 0.0
        %1623 = vmatpush1.msra.mxu0 0.0
        %1624 = vmatprep.mubr.f32.mxu0 0.0
        %1625 = vmatmul.mubr.f32.gmra.mrb[0].mxu0 %v1355
        %v1626 = vpop.f32.mrb[0].mxu0
        %v1627 = vadd.f32 0.0, %v1626
        %v1628 = vpop.f32.mrb[0].mxu0
        %1629 = vmatprep.mubr.f32.mxu0 0.0
        %1630 = vmatmul.mubr.f32.gmra.mrb[0].mxu0 %v1358
        %v1631 = vpop.f32.mrb[0].mxu0
        %v1632 = vadd.f32 0.0, %v1631
        %v1633 = vpop.f32.mrb[0].mxu0
        %1634 = vdwg.mxu0
        %v1635 = vadd.f32 %v1535, %v1627
        %v1636 = vadd.f32 %v1540, %v1632
        %v1637 = vld [vmem:[#allocation4 + $0x2] sm:$0x1]
        %v1638 = vlaneseq
        %v1639 = vshrl.u32 %v1638, 7
        %v1640 = vsub.s32 0, %v1639
        %v1641 = vrot.slane %v1637, %v1640
        %v1642 = vadd.f32 %v1635, %v1641
        %v1643 = vadd.f32 %v1636, %v1641
        %v1644 = vmax.f32 %v1642, 0.0
        %v1645 = vmax.f32 %v1643, 0.0
        %v1646 = vld [vmem:[#allocation9] sm:$0xff]
        %vm1647 = vcmask 130048
        %v1649 = vsel %vm1647, %v1646, 0
        %1651 = vmatprep.subr.mxu0 0.0
        %1652 = vmatpush1.msra.mxu0 %v1644
        %1653 = vmatprep.subr.mxu0 0.0
        %1654 = vmatpush1.msra.mxu0 %v1645
        %1655 = vmatprep.subr.mxu0 0.0
        %1656 = vmatpush1.msra.mxu0 0.0
        %1657 = vmatprep.subr.mxu0 0.0
        %1658 = vmatpush1.msra.mxu0 0.0
        %1659 = vmatprep.subr.mxu0 0.0
        %1660 = vmatpush1.msra.mxu0 0.0
        %1661 = vmatprep.subr.mxu0 0.0
        %1662 = vmatpush1.msra.mxu0 0.0
        %1663 = vmatprep.subr.mxu0 0.0
        %1664 = vmatpush1.msra.mxu0 0.0
        %1665 = vmatprep.subr.mxu0 0.0
        %1666 = vmatpush1.msra.mxu0 0.0
        %1667 = vmatprep.subr.mxu0 0.0
        %1668 = vmatpush1.msra.mxu0 0.0
        %1669 = vmatprep.subr.mxu0 0.0
        %1670 = vmatpush1.msra.mxu0 0.0
        %1671 = vmatprep.subr.mxu0 0.0
        %1672 = vmatpush1.msra.mxu0 0.0
        %1673 = vmatprep.subr.mxu0 0.0
        %1674 = vmatpush1.msra.mxu0 0.0
        %1675 = vmatprep.subr.mxu0 0.0
        %1676 = vmatpush1.msra.mxu0 0.0
        %1677 = vmatprep.subr.mxu0 0.0
        %1678 = vmatpush1.msra.mxu0 0.0
        %1679 = vmatprep.subr.mxu0 0.0
        %1680 = vmatpush1.msra.mxu0 0.0
        %1681 = vmatprep.subr.mxu0 0.0
        %1682 = vmatpush1.msra.mxu0 0.0
        %1683 = vmatprep.subr.mxu0 0.0
        %1684 = vmatpush1.msra.mxu0 0.0
        %1685 = vmatprep.subr.mxu0 0.0
        %1686 = vmatpush1.msra.mxu0 0.0
        %1687 = vmatprep.subr.mxu0 0.0
        %1688 = vmatpush1.msra.mxu0 0.0
        %1689 = vmatprep.subr.mxu0 0.0
        %1690 = vmatpush1.msra.mxu0 0.0
        %1691 = vmatprep.subr.mxu0 0.0
        %1692 = vmatpush1.msra.mxu0 0.0
        %1693 = vmatprep.subr.mxu0 0.0
        %1694 = vmatpush1.msra.mxu0 0.0
        %1695 = vmatprep.subr.mxu0 0.0
        %1696 = vmatpush1.msra.mxu0 0.0
        %1697 = vmatprep.subr.mxu0 0.0
        %1698 = vmatpush1.msra.mxu0 0.0
        %1699 = vmatprep.subr.mxu0 0.0
        %1700 = vmatpush1.msra.mxu0 0.0
        %1701 = vmatprep.subr.mxu0 0.0
        %1702 = vmatpush1.msra.mxu0 0.0
        %1703 = vmatprep.subr.mxu0 0.0
        %1704 = vmatpush1.msra.mxu0 0.0
        %1705 = vmatprep.subr.mxu0 0.0
        %1706 = vmatpush1.msra.mxu0 0.0
        %1707 = vmatprep.subr.mxu0 0.0
        %1708 = vmatpush1.msra.mxu0 0.0
        %1709 = vmatprep.subr.mxu0 0.0
        %1710 = vmatpush1.msra.mxu0 0.0
        %1711 = vmatprep.subr.mxu0 0.0
        %1712 = vmatpush1.msra.mxu0 0.0
        %1713 = vmatprep.subr.mxu0 0.0
        %1714 = vmatpush1.msra.mxu0 0.0
        %1715 = vmatprep.mubr.f32.mxu0 0.0
        %1716 = vmatmul.mubr.f32.gmra.mrb[0].mxu0 %v1649
        %v1717 = vpop.f32.mrb[0].mxu0
        %v1718 = vadd.f32 0.0, %v1717
        %v1719 = vpop.f32.mrb[0].mxu0
        %1720 = vdwg.mxu0
        %v1721 = vld [vmem:[%s6] sm:$0xff]
        %v1722 = vld [vmem:[%s6 + $0x8] sm:$0xff]
        %v1723 = vld [vmem:[%s6 + $0x10] sm:$0xff]
        %v1724 = vld [vmem:[%s6 + $0x18] sm:$0xff]
        %v1725 = vld [vmem:[%s6 + $0x20] sm:$0xff]
        %v1726 = vld [vmem:[%s6 + $0x28] sm:$0xff]
        %v1727 = vld [vmem:[%s6 + $0x30] sm:$0xff]
        %v1728 = vld [vmem:[%s6 + $0x38] sm:$0xff]
        %vm1729 = vcmask 64512
        %v1731 = vsel %vm1729, %v1721, 0
        %v1734 = vsel %vm1729, %v1722, 0
        %v1737 = vsel %vm1729, %v1723, 0
        %v1740 = vsel %vm1729, %v1724, 0
        %v1743 = vsel %vm1729, %v1725, 0
        %v1746 = vsel %vm1729, %v1726, 0
        %v1749 = vsel %vm1729, %v1727, 0
        %v1752 = vsel %vm1729, %v1728, 0
        %1754 = vmatprep.subr.mxu0 0.0
        %1755 = vmatpush1.msra.mxu0 %v1718
        %1756 = vmatprep.subr.mxu0 0.0
        %1757 = vmatpush1.msra.mxu0 0.0
        %1758 = vmatprep.subr.mxu0 0.0
        %1759 = vmatpush1.msra.mxu0 0.0
        %1760 = vmatprep.subr.mxu0 0.0
        %1761 = vmatpush1.msra.mxu0 0.0
        %1762 = vmatprep.subr.mxu0 0.0
        %1763 = vmatpush1.msra.mxu0 0.0
        %1764 = vmatprep.subr.mxu0 0.0
        %1765 = vmatpush1.msra.mxu0 0.0
        %1766 = vmatprep.subr.mxu0 0.0
        %1767 = vmatpush1.msra.mxu0 0.0
        %1768 = vmatprep.subr.mxu0 0.0
        %1769 = vmatpush1.msra.mxu0 0.0
        %1770 = vmatprep.subr.mxu0 0.0
        %1771 = vmatpush1.msra.mxu0 0.0
        %1772 = vmatprep.subr.mxu0 0.0
        %1773 = vmatpush1.msra.mxu0 0.0
        %1774 = vmatprep.subr.mxu0 0.0
        %1775 = vmatpush1.msra.mxu0 0.0
        %1776 = vmatprep.subr.mxu0 0.0
        %1777 = vmatpush1.msra.mxu0 0.0
        %1778 = vmatprep.subr.mxu0 0.0
        %1779 = vmatpush1.msra.mxu0 0.0
        %1780 = vmatprep.subr.mxu0 0.0
        %1781 = vmatpush1.msra.mxu0 0.0
        %1782 = vmatprep.subr.mxu0 0.0
        %1783 = vmatpush1.msra.mxu0 0.0
        %1784 = vmatprep.subr.mxu0 0.0
        %1785 = vmatpush1.msra.mxu0 0.0
        %1786 = vmatprep.subr.mxu0 0.0
        %1787 = vmatpush1.msra.mxu0 0.0
        %1788 = vmatprep.subr.mxu0 0.0
        %1789 = vmatpush1.msra.mxu0 0.0
        %1790 = vmatprep.subr.mxu0 0.0
        %1791 = vmatpush1.msra.mxu0 0.0
        %1792 = vmatprep.subr.mxu0 0.0
        %1793 = vmatpush1.msra.mxu0 0.0
        %1794 = vmatprep.subr.mxu0 0.0
        %1795 = vmatpush1.msra.mxu0 0.0
        %1796 = vmatprep.subr.mxu0 0.0
        %1797 = vmatpush1.msra.mxu0 0.0
        %1798 = vmatprep.subr.mxu0 0.0
        %1799 = vmatpush1.msra.mxu0 0.0
        %1800 = vmatprep.subr.mxu0 0.0
        %1801 = vmatpush1.msra.mxu0 0.0
        %1802 = vmatprep.subr.mxu0 0.0
        %1803 = vmatpush1.msra.mxu0 0.0
        %1804 = vmatprep.subr.mxu0 0.0
        %1805 = vmatpush1.msra.mxu0 0.0
        %1806 = vmatprep.subr.mxu0 0.0
        %1807 = vmatpush1.msra.mxu0 0.0
        %1808 = vmatprep.subr.mxu0 0.0
        %1809 = vmatpush1.msra.mxu0 0.0
        %1810 = vmatprep.subr.mxu0 0.0
        %1811 = vmatpush1.msra.mxu0 0.0
        %1812 = vmatprep.subr.mxu0 0.0
        %1813 = vmatpush1.msra.mxu0 0.0
        %1814 = vmatprep.subr.mxu0 0.0
        %1815 = vmatpush1.msra.mxu0 0.0
        %1816 = vmatprep.subr.mxu0 0.0
        %1817 = vmatpush1.msra.mxu0 0.0
        %1818 = vmatprep.mubr.f32.mxu0 0.0
        %1819 = vmatmul.mubr.f32.gmra.mrb[0].mxu0 %v1731
        %v1820 = vpop.f32.mrb[0].mxu0
        %v1821 = vadd.f32 0.0, %v1820
        %v1822 = vpop.f32.mrb[0].mxu0
        %1823 = vmatprep.mubr.f32.mxu0 0.0
        %1824 = vmatmul.mubr.f32.gmra.mrb[0].mxu0 %v1734
        %v1825 = vpop.f32.mrb[0].mxu0
        %v1826 = vadd.f32 0.0, %v1825
        %v1827 = vpop.f32.mrb[0].mxu0
        %1828 = vmatprep.mubr.f32.mxu0 0.0
        %1829 = vmatmul.mubr.f32.gmra.mrb[0].mxu0 %v1737
        %v1830 = vpop.f32.mrb[0].mxu0
        %v1831 = vadd.f32 0.0, %v1830
        %v1832 = vpop.f32.mrb[0].mxu0
        %1833 = vmatprep.mubr.f32.mxu0 0.0
        %1834 = vmatmul.mubr.f32.gmra.mrb[0].mxu0 %v1740
        %v1835 = vpop.f32.mrb[0].mxu0
        %v1836 = vadd.f32 0.0, %v1835
        %v1837 = vpop.f32.mrb[0].mxu0
        %1838 = vmatprep.mubr.f32.mxu0 0.0
        %1839 = vmatmul.mubr.f32.gmra.mrb[0].mxu0 %v1743
        %v1840 = vpop.f32.mrb[0].mxu0
        %v1841 = vadd.f32 0.0, %v1840
        %v1842 = vpop.f32.mrb[0].mxu0
        %1843 = vmatprep.mubr.f32.mxu0 0.0
        %1844 = vmatmul.mubr.f32.gmra.mrb[0].mxu0 %v1746
        %v1845 = vpop.f32.mrb[0].mxu0
        %v1846 = vadd.f32 0.0, %v1845
        %v1847 = vpop.f32.mrb[0].mxu0
        %1848 = vmatprep.mubr.f32.mxu0 0.0
        %1849 = vmatmul.mubr.f32.gmra.mrb[0].mxu0 %v1749
        %v1850 = vpop.f32.mrb[0].mxu0
        %v1851 = vadd.f32 0.0, %v1850
        %v1852 = vpop.f32.mrb[0].mxu0
        %1853 = vmatprep.mubr.f32.mxu0 0.0
        %1854 = vmatmul.mubr.f32.gmra.mrb[0].mxu0 %v1752
        %v1855 = vpop.f32.mrb[0].mxu0
        %v1856 = vadd.f32 0.0, %v1855
        %v1857 = vpop.f32.mrb[0].mxu0
        %1858 = vdwg.mxu0
        %v1867 = vrot.slane %v1821, 7
        %v1868 = vrot.slane %v1826, 7
        %v1869 = vsel %vm364, %v1867, %v1868
        %v1870 = vrot.slane %v1831, 7
        %v1871 = vsel %vm364, %v1868, %v1870
        %v1872 = vrot.slane %v1836, 7
        %v1873 = vsel %vm364, %v1870, %v1872
        %v1874 = vrot.slane %v1841, 7
        %v1875 = vsel %vm364, %v1872, %v1874
        %v1876 = vrot.slane %v1846, 7
        %v1877 = vsel %vm364, %v1874, %v1876
        %v1878 = vrot.slane %v1851, 7
        %v1879 = vsel %vm364, %v1876, %v1878
        %v1880 = vrot.slane %v1856, 7
        %v1881 = vsel %vm364, %v1878, %v1880
        %v1890 = vsel %vm364, 0.0, %v1867
        %v1891 = vrot.slane %v1821, 1
        %v1892 = vrot.slane %v1826, 1
        %v1893 = vsel %vm389, %v1891, %v1892
        %v1894 = vrot.slane %v1831, 1
        %v1895 = vsel %vm389, %v1892, %v1894
        %v1896 = vrot.slane %v1836, 1
        %v1897 = vsel %vm389, %v1894, %v1896
        %v1898 = vrot.slane %v1841, 1
        %v1899 = vsel %vm389, %v1896, %v1898
        %v1900 = vrot.slane %v1846, 1
        %v1901 = vsel %vm389, %v1898, %v1900
        %v1902 = vrot.slane %v1851, 1
        %v1903 = vsel %vm389, %v1900, %v1902
        %v1904 = vrot.slane %v1856, 1
        %v1905 = vsel %vm389, %v1902, %v1904
        %v1914 = vsel %vm389, %v1904, 0.0
        %s1915 = scalar_lea.vmem [#allocation2], 1152
        %v1916 = vld [vmem:[%s1915] sm:$0xff]
        %v1917 = vld [vmem:[%s1915 + $0x8] sm:$0xff]
        %v1918 = vld [vmem:[%s1915 + $0x10] sm:$0xff]
        %v1919 = vld [vmem:[%s1915 + $0x18] sm:$0xff]
        %v1920 = vld [vmem:[%s1915 + $0x20] sm:$0xff]
        %v1921 = vld [vmem:[%s1915 + $0x28] sm:$0xff]
        %v1922 = vld [vmem:[%s1915 + $0x30] sm:$0xff]
        %v1923 = vld [vmem:[%s1915 + $0x38] sm:$0xff]
        %v1924 = vld [vmem:[%s1915 + $0x40] sm:$0xff]
        %v1925 = vld [vmem:[%s1915 + $0x48] sm:$0xff]
        %v1926 = vld [vmem:[%s1915 + $0x50] sm:$0xff]
        %v1927 = vld [vmem:[%s1915 + $0x58] sm:$0xff]
        %v1928 = vld [vmem:[%s1915 + $0x60] sm:$0xff]
        %v1929 = vld [vmem:[%s1915 + $0x68] sm:$0xff]
        %v1930 = vld [vmem:[%s1915 + $0x70] sm:$0xff]
        %v1931 = vld [vmem:[%s1915 + $0x78] sm:$0xff]
        %s1932 = scalar_lea.vmem [#allocation2], 1280
        %v1933 = vld [vmem:[%s1932] sm:$0xff]
        %v1934 = vld [vmem:[%s1932 + $0x8] sm:$0xff]
        %v1935 = vld [vmem:[%s1932 + $0x10] sm:$0xff]
        %v1936 = vld [vmem:[%s1932 + $0x18] sm:$0xff]
        %v1937 = vld [vmem:[%s1932 + $0x20] sm:$0xff]
        %v1938 = vld [vmem:[%s1932 + $0x28] sm:$0xff]
        %v1939 = vld [vmem:[%s1932 + $0x30] sm:$0xff]
        %v1940 = vld [vmem:[%s1932 + $0x38] sm:$0xff]
        %v1941 = vld [vmem:[%s1932 + $0x40] sm:$0xff]
        %v1942 = vld [vmem:[%s1932 + $0x48] sm:$0xff]
        %v1943 = vld [vmem:[%s1932 + $0x50] sm:$0xff]
        %v1944 = vld [vmem:[%s1932 + $0x58] sm:$0xff]
        %v1945 = vld [vmem:[%s1932 + $0x60] sm:$0xff]
        %v1946 = vld [vmem:[%s1932 + $0x68] sm:$0xff]
        %v1947 = vld [vmem:[%s1932 + $0x70] sm:$0xff]
        %v1948 = vld [vmem:[%s1932 + $0x78] sm:$0xff]
        %1949 = vmatprep.subr.mxu0 0.0
        %1950 = vmatpush1.msra.mxu0 %v1933
        %1951 = vmatprep.subr.mxu0 0.0
        %1952 = vmatpush1.msra.mxu0 %v1934
        %1953 = vmatprep.subr.mxu0 0.0
        %1954 = vmatpush1.msra.mxu0 %v1935
        %1955 = vmatprep.subr.mxu0 0.0
        %1956 = vmatpush1.msra.mxu0 %v1936
        %1957 = vmatprep.subr.mxu0 0.0
        %1958 = vmatpush1.msra.mxu0 %v1937
        %1959 = vmatprep.subr.mxu0 0.0
        %1960 = vmatpush1.msra.mxu0 %v1938
        %1961 = vmatprep.subr.mxu0 0.0
        %1962 = vmatpush1.msra.mxu0 %v1939
        %1963 = vmatprep.subr.mxu0 0.0
        %1964 = vmatpush1.msra.mxu0 %v1940
        %1965 = vmatprep.subr.mxu0 0.0
        %1966 = vmatpush1.msra.mxu0 %v1941
        %1967 = vmatprep.subr.mxu0 0.0
        %1968 = vmatpush1.msra.mxu0 %v1942
        %1969 = vmatprep.subr.mxu0 0.0
        %1970 = vmatpush1.msra.mxu0 %v1943
        %1971 = vmatprep.subr.mxu0 0.0
        %1972 = vmatpush1.msra.mxu0 %v1944
        %1973 = vmatprep.subr.mxu0 0.0
        %1974 = vmatpush1.msra.mxu0 %v1945
        %1975 = vmatprep.subr.mxu0 0.0
        %1976 = vmatpush1.msra.mxu0 %v1946
        %1977 = vmatprep.subr.mxu0 0.0
        %1978 = vmatpush1.msra.mxu0 %v1947
        %1979 = vmatprep.subr.mxu0 0.0
        %1980 = vmatpush1.msra.mxu0 %v1948
        %1981 = vmatprep.subr.mxu0 0.0
        %1982 = vmatpush1.msra.mxu0 0.0
        %1983 = vmatprep.subr.mxu0 0.0
        %1984 = vmatpush1.msra.mxu0 0.0
        %1985 = vmatprep.subr.mxu0 0.0
        %1986 = vmatpush1.msra.mxu0 0.0
        %1987 = vmatprep.subr.mxu0 0.0
        %1988 = vmatpush1.msra.mxu0 0.0
        %1989 = vmatprep.subr.mxu0 0.0
        %1990 = vmatpush1.msra.mxu0 0.0
        %1991 = vmatprep.subr.mxu0 0.0
        %1992 = vmatpush1.msra.mxu0 0.0
        %1993 = vmatprep.subr.mxu0 0.0
        %1994 = vmatpush1.msra.mxu0 0.0
        %1995 = vmatprep.subr.mxu0 0.0
        %1996 = vmatpush1.msra.mxu0 0.0
        %1997 = vmatprep.subr.mxu0 0.0
        %1998 = vmatpush1.msra.mxu0 0.0
        %1999 = vmatprep.subr.mxu0 0.0
        %2000 = vmatpush1.msra.mxu0 0.0
        %2001 = vmatprep.subr.mxu0 0.0
        %2002 = vmatpush1.msra.mxu0 0.0
        %2003 = vmatprep.subr.mxu0 0.0
        %2004 = vmatpush1.msra.mxu0 0.0
        %2005 = vmatprep.subr.mxu0 0.0
        %2006 = vmatpush1.msra.mxu0 0.0
        %2007 = vmatprep.subr.mxu0 0.0
        %2008 = vmatpush1.msra.mxu0 0.0
        %2009 = vmatprep.subr.mxu0 0.0
        %2010 = vmatpush1.msra.mxu0 0.0
        %2011 = vmatprep.subr.mxu0 0.0
        %2012 = vmatpush1.msra.mxu0 0.0
        %2013 = vmatprep.mubr.f32.mxu0 0.0
        %2014 = vmatmul.mubr.f32.gmra.mrb[0].mxu0 %v1821
        %v2015 = vpop.f32.mrb[0].mxu0
        %v2016 = vadd.f32 0.0, %v2015
        %v2017 = vpop.f32.mrb[0].mxu0
        %2018 = vmatprep.mubr.f32.mxu0 0.0
        %2019 = vmatmul.mubr.f32.gmra.mrb[0].mxu0 %v1826
        %v2020 = vpop.f32.mrb[0].mxu0
        %v2021 = vadd.f32 0.0, %v2020
        %v2022 = vpop.f32.mrb[0].mxu0
        %2023 = vmatprep.mubr.f32.mxu0 0.0
        %2024 = vmatmul.mubr.f32.gmra.mrb[0].mxu0 %v1831
        %v2025 = vpop.f32.mrb[0].mxu0
        %v2026 = vadd.f32 0.0, %v2025
        %v2027 = vpop.f32.mrb[0].mxu0
        %2028 = vmatprep.mubr.f32.mxu0 0.0
        %2029 = vmatmul.mubr.f32.gmra.mrb[0].mxu0 %v1836
        %v2030 = vpop.f32.mrb[0].mxu0
        %v2031 = vadd.f32 0.0, %v2030
        %v2032 = vpop.f32.mrb[0].mxu0
        %2033 = vmatprep.mubr.f32.mxu0 0.0
        %2034 = vmatmul.mubr.f32.gmra.mrb[0].mxu0 %v1841
        %v2035 = vpop.f32.mrb[0].mxu0
        %v2036 = vadd.f32 0.0, %v2035
        %v2037 = vpop.f32.mrb[0].mxu0
        %2038 = vmatprep.mubr.f32.mxu0 0.0
        %2039 = vmatmul.mubr.f32.gmra.mrb[0].mxu0 %v1846
        %v2040 = vpop.f32.mrb[0].mxu0
        %v2041 = vadd.f32 0.0, %v2040
        %v2042 = vpop.f32.mrb[0].mxu0
        %2043 = vmatprep.mubr.f32.mxu0 0.0
        %2044 = vmatmul.mubr.f32.gmra.mrb[0].mxu0 %v1851
        %v2045 = vpop.f32.mrb[0].mxu0
        %v2046 = vadd.f32 0.0, %v2045
        %v2047 = vpop.f32.mrb[0].mxu0
        %2048 = vmatprep.mubr.f32.mxu0 0.0
        %2049 = vmatmul.mubr.f32.gmra.mrb[0].mxu0 %v1856
        %v2050 = vpop.f32.mrb[0].mxu0
        %v2051 = vadd.f32 0.0, %v2050
        %v2052 = vpop.f32.mrb[0].mxu0
        %2053 = vdwg.mxu0
        %2054 = vmatprep.subr.mxu0 0.0
        %2055 = vmatpush1.msra.mxu0 %v1916
        %2056 = vmatprep.subr.mxu0 0.0
        %2057 = vmatpush1.msra.mxu0 %v1917
        %2058 = vmatprep.subr.mxu0 0.0
        %2059 = vmatpush1.msra.mxu0 %v1918
        %2060 = vmatprep.subr.mxu0 0.0
        %2061 = vmatpush1.msra.mxu0 %v1919
        %2062 = vmatprep.subr.mxu0 0.0
        %2063 = vmatpush1.msra.mxu0 %v1920
        %2064 = vmatprep.subr.mxu0 0.0
        %2065 = vmatpush1.msra.mxu0 %v1921
        %2066 = vmatprep.subr.mxu0 0.0
        %2067 = vmatpush1.msra.mxu0 %v1922
        %2068 = vmatprep.subr.mxu0 0.0
        %2069 = vmatpush1.msra.mxu0 %v1923
        %2070 = vmatprep.subr.mxu0 0.0
        %2071 = vmatpush1.msra.mxu0 %v1924
        %2072 = vmatprep.subr.mxu0 0.0
        %2073 = vmatpush1.msra.mxu0 %v1925
        %2074 = vmatprep.subr.mxu0 0.0
        %2075 = vmatpush1.msra.mxu0 %v1926
        %2076 = vmatprep.subr.mxu0 0.0
        %2077 = vmatpush1.msra.mxu0 %v1927
        %2078 = vmatprep.subr.mxu0 0.0
        %2079 = vmatpush1.msra.mxu0 %v1928
        %2080 = vmatprep.subr.mxu0 0.0
        %2081 = vmatpush1.msra.mxu0 %v1929
        %2082 = vmatprep.subr.mxu0 0.0
        %2083 = vmatpush1.msra.mxu0 %v1930
        %2084 = vmatprep.subr.mxu0 0.0
        %2085 = vmatpush1.msra.mxu0 %v1931
        %2086 = vmatprep.subr.mxu0 0.0
        %2087 = vmatpush1.msra.mxu0 0.0
        %2088 = vmatprep.subr.mxu0 0.0
        %2089 = vmatpush1.msra.mxu0 0.0
        %2090 = vmatprep.subr.mxu0 0.0
        %2091 = vmatpush1.msra.mxu0 0.0
        %2092 = vmatprep.subr.mxu0 0.0
        %2093 = vmatpush1.msra.mxu0 0.0
        %2094 = vmatprep.subr.mxu0 0.0
        %2095 = vmatpush1.msra.mxu0 0.0
        %2096 = vmatprep.subr.mxu0 0.0
        %2097 = vmatpush1.msra.mxu0 0.0
        %2098 = vmatprep.subr.mxu0 0.0
        %2099 = vmatpush1.msra.mxu0 0.0
        %2100 = vmatprep.subr.mxu0 0.0
        %2101 = vmatpush1.msra.mxu0 0.0
        %2102 = vmatprep.subr.mxu0 0.0
        %2103 = vmatpush1.msra.mxu0 0.0
        %2104 = vmatprep.subr.mxu0 0.0
        %2105 = vmatpush1.msra.mxu0 0.0
        %2106 = vmatprep.subr.mxu0 0.0
        %2107 = vmatpush1.msra.mxu0 0.0
        %2108 = vmatprep.subr.mxu0 0.0
        %2109 = vmatpush1.msra.mxu0 0.0
        %2110 = vmatprep.subr.mxu0 0.0
        %2111 = vmatpush1.msra.mxu0 0.0
        %2112 = vmatprep.subr.mxu0 0.0
        %2113 = vmatpush1.msra.mxu0 0.0
        %2114 = vmatprep.subr.mxu0 0.0
        %2115 = vmatpush1.msra.mxu0 0.0
        %2116 = vmatprep.subr.mxu0 0.0
        %2117 = vmatpush1.msra.mxu0 0.0
        %2118 = vmatprep.mubr.f32.mxu0 0.0
        %2119 = vmatmul.mubr.f32.gmra.mrb[0].mxu0 %v1890
        %v2120 = vpop.f32.mrb[0].mxu0
        %v2121 = vadd.f32 %v2016, %v2120
        %v2122 = vpop.f32.mrb[0].mxu0
        %2123 = vmatprep.mubr.f32.mxu0 0.0
        %2124 = vmatmul.mubr.f32.gmra.mrb[0].mxu0 %v1869
        %v2125 = vpop.f32.mrb[0].mxu0
        %v2126 = vadd.f32 %v2021, %v2125
        %v2127 = vpop.f32.mrb[0].mxu0
        %2128 = vmatprep.mubr.f32.mxu0 0.0
        %2129 = vmatmul.mubr.f32.gmra.mrb[0].mxu0 %v1871
        %v2130 = vpop.f32.mrb[0].mxu0
        %v2131 = vadd.f32 %v2026, %v2130
        %v2132 = vpop.f32.mrb[0].mxu0
        %2133 = vmatprep.mubr.f32.mxu0 0.0
        %2134 = vmatmul.mubr.f32.gmra.mrb[0].mxu0 %v1873
        %v2135 = vpop.f32.mrb[0].mxu0
        %v2136 = vadd.f32 %v2031, %v2135
        %v2137 = vpop.f32.mrb[0].mxu0
        %2138 = vmatprep.mubr.f32.mxu0 0.0
        %2139 = vmatmul.mubr.f32.gmra.mrb[0].mxu0 %v1875
        %v2140 = vpop.f32.mrb[0].mxu0
        %v2141 = vadd.f32 %v2036, %v2140
        %v2142 = vpop.f32.mrb[0].mxu0
        %2143 = vmatprep.mubr.f32.mxu0 0.0
        %2144 = vmatmul.mubr.f32.gmra.mrb[0].mxu0 %v1877
        %v2145 = vpop.f32.mrb[0].mxu0
        %v2146 = vadd.f32 %v2041, %v2145
        %v2147 = vpop.f32.mrb[0].mxu0
        %2148 = vmatprep.mubr.f32.mxu0 0.0
        %2149 = vmatmul.mubr.f32.gmra.mrb[0].mxu0 %v1879
        %v2150 = vpop.f32.mrb[0].mxu0
        %v2151 = vadd.f32 %v2046, %v2150
        %v2152 = vpop.f32.mrb[0].mxu0
        %2153 = vmatprep.mubr.f32.mxu0 0.0
        %2154 = vmatmul.mubr.f32.gmra.mrb[0].mxu0 %v1881
        %v2155 = vpop.f32.mrb[0].mxu0
        %v2156 = vadd.f32 %v2051, %v2155
        %v2157 = vpop.f32.mrb[0].mxu0
        %2158 = vdwg.mxu0
        %s2159 = scalar_lea.vmem [#allocation2], 1408
        %v2160 = vld [vmem:[%s2159] sm:$0xff]
        %v2161 = vld [vmem:[%s2159 + $0x8] sm:$0xff]
        %v2162 = vld [vmem:[%s2159 + $0x10] sm:$0xff]
        %v2163 = vld [vmem:[%s2159 + $0x18] sm:$0xff]
        %v2164 = vld [vmem:[%s2159 + $0x20] sm:$0xff]
        %v2165 = vld [vmem:[%s2159 + $0x28] sm:$0xff]
        %v2166 = vld [vmem:[%s2159 + $0x30] sm:$0xff]
        %v2167 = vld [vmem:[%s2159 + $0x38] sm:$0xff]
        %v2168 = vld [vmem:[%s2159 + $0x40] sm:$0xff]
        %v2169 = vld [vmem:[%s2159 + $0x48] sm:$0xff]
        %v2170 = vld [vmem:[%s2159 + $0x50] sm:$0xff]
        %v2171 = vld [vmem:[%s2159 + $0x58] sm:$0xff]
        %v2172 = vld [vmem:[%s2159 + $0x60] sm:$0xff]
        %v2173 = vld [vmem:[%s2159 + $0x68] sm:$0xff]
        %v2174 = vld [vmem:[%s2159 + $0x70] sm:$0xff]
        %v2175 = vld [vmem:[%s2159 + $0x78] sm:$0xff]
        %2176 = vmatprep.subr.mxu0 0.0
        %2177 = vmatpush1.msra.mxu0 %v2160
        %2178 = vmatprep.subr.mxu0 0.0
        %2179 = vmatpush1.msra.mxu0 %v2161
        %2180 = vmatprep.subr.mxu0 0.0
        %2181 = vmatpush1.msra.mxu0 %v2162
        %2182 = vmatprep.subr.mxu0 0.0
        %2183 = vmatpush1.msra.mxu0 %v2163
        %2184 = vmatprep.subr.mxu0 0.0
        %2185 = vmatpush1.msra.mxu0 %v2164
        %2186 = vmatprep.subr.mxu0 0.0
        %2187 = vmatpush1.msra.mxu0 %v2165
        %2188 = vmatprep.subr.mxu0 0.0
        %2189 = vmatpush1.msra.mxu0 %v2166
        %2190 = vmatprep.subr.mxu0 0.0
        %2191 = vmatpush1.msra.mxu0 %v2167
        %2192 = vmatprep.subr.mxu0 0.0
        %2193 = vmatpush1.msra.mxu0 %v2168
        %2194 = vmatprep.subr.mxu0 0.0
        %2195 = vmatpush1.msra.mxu0 %v2169
        %2196 = vmatprep.subr.mxu0 0.0
        %2197 = vmatpush1.msra.mxu0 %v2170
        %2198 = vmatprep.subr.mxu0 0.0
        %2199 = vmatpush1.msra.mxu0 %v2171
        %2200 = vmatprep.subr.mxu0 0.0
        %2201 = vmatpush1.msra.mxu0 %v2172
        %2202 = vmatprep.subr.mxu0 0.0
        %2203 = vmatpush1.msra.mxu0 %v2173
        %2204 = vmatprep.subr.mxu0 0.0
        %2205 = vmatpush1.msra.mxu0 %v2174
        %2206 = vmatprep.subr.mxu0 0.0
        %2207 = vmatpush1.msra.mxu0 %v2175
        %2208 = vmatprep.subr.mxu0 0.0
        %2209 = vmatpush1.msra.mxu0 0.0
        %2210 = vmatprep.subr.mxu0 0.0
        %2211 = vmatpush1.msra.mxu0 0.0
        %2212 = vmatprep.subr.mxu0 0.0
        %2213 = vmatpush1.msra.mxu0 0.0
        %2214 = vmatprep.subr.mxu0 0.0
        %2215 = vmatpush1.msra.mxu0 0.0
        %2216 = vmatprep.subr.mxu0 0.0
        %2217 = vmatpush1.msra.mxu0 0.0
        %2218 = vmatprep.subr.mxu0 0.0
        %2219 = vmatpush1.msra.mxu0 0.0
        %2220 = vmatprep.subr.mxu0 0.0
        %2221 = vmatpush1.msra.mxu0 0.0
        %2222 = vmatprep.subr.mxu0 0.0
        %2223 = vmatpush1.msra.mxu0 0.0
        %2224 = vmatprep.subr.mxu0 0.0
        %2225 = vmatpush1.msra.mxu0 0.0
        %2226 = vmatprep.subr.mxu0 0.0
        %2227 = vmatpush1.msra.mxu0 0.0
        %2228 = vmatprep.subr.mxu0 0.0
        %2229 = vmatpush1.msra.mxu0 0.0
        %2230 = vmatprep.subr.mxu0 0.0
        %2231 = vmatpush1.msra.mxu0 0.0
        %2232 = vmatprep.subr.mxu0 0.0
        %2233 = vmatpush1.msra.mxu0 0.0
        %2234 = vmatprep.subr.mxu0 0.0
        %2235 = vmatpush1.msra.mxu0 0.0
        %2236 = vmatprep.subr.mxu0 0.0
        %2237 = vmatpush1.msra.mxu0 0.0
        %2238 = vmatprep.subr.mxu0 0.0
        %2239 = vmatpush1.msra.mxu0 0.0
        %2240 = vmatprep.mubr.f32.mxu0 0.0
        %2241 = vmatmul.mubr.f32.gmra.mrb[0].mxu0 %v1893
        %v2242 = vpop.f32.mrb[0].mxu0
        %v2243 = vadd.f32 0.0, %v2242
        %v2244 = vpop.f32.mrb[0].mxu0
        %2245 = vmatprep.mubr.f32.mxu0 0.0
        %2246 = vmatmul.mubr.f32.gmra.mrb[0].mxu0 %v1895
        %v2247 = vpop.f32.mrb[0].mxu0
        %v2248 = vadd.f32 0.0, %v2247
        %v2249 = vpop.f32.mrb[0].mxu0
        %2250 = vmatprep.mubr.f32.mxu0 0.0
        %2251 = vmatmul.mubr.f32.gmra.mrb[0].mxu0 %v1897
        %v2252 = vpop.f32.mrb[0].mxu0
        %v2253 = vadd.f32 0.0, %v2252
        %v2254 = vpop.f32.mrb[0].mxu0
        %2255 = vmatprep.mubr.f32.mxu0 0.0
        %2256 = vmatmul.mubr.f32.gmra.mrb[0].mxu0 %v1899
        %v2257 = vpop.f32.mrb[0].mxu0
        %v2258 = vadd.f32 0.0, %v2257
        %v2259 = vpop.f32.mrb[0].mxu0
        %2260 = vmatprep.mubr.f32.mxu0 0.0
        %2261 = vmatmul.mubr.f32.gmra.mrb[0].mxu0 %v1901
        %v2262 = vpop.f32.mrb[0].mxu0
        %v2263 = vadd.f32 0.0, %v2262
        %v2264 = vpop.f32.mrb[0].mxu0
        %2265 = vmatprep.mubr.f32.mxu0 0.0
        %2266 = vmatmul.mubr.f32.gmra.mrb[0].mxu0 %v1903
        %v2267 = vpop.f32.mrb[0].mxu0
        %v2268 = vadd.f32 0.0, %v2267
        %v2269 = vpop.f32.mrb[0].mxu0
        %2270 = vmatprep.mubr.f32.mxu0 0.0
        %2271 = vmatmul.mubr.f32.gmra.mrb[0].mxu0 %v1905
        %v2272 = vpop.f32.mrb[0].mxu0
        %v2273 = vadd.f32 0.0, %v2272
        %v2274 = vpop.f32.mrb[0].mxu0
        %2275 = vmatprep.mubr.f32.mxu0 0.0
        %2276 = vmatmul.mubr.f32.gmra.mrb[0].mxu0 %v1914
        %v2277 = vpop.f32.mrb[0].mxu0
        %v2278 = vadd.f32 0.0, %v2277
        %v2279 = vpop.f32.mrb[0].mxu0
        %2280 = vdwg.mxu0
        %v2281 = vadd.f32 %v2121, %v2243
        %v2282 = vadd.f32 %v2126, %v2248
        %v2283 = vadd.f32 %v2131, %v2253
        %v2284 = vadd.f32 %v2136, %v2258
        %v2285 = vadd.f32 %v2141, %v2263
        %v2286 = vadd.f32 %v2146, %v2268
        %v2287 = vadd.f32 %v2151, %v2273
        %v2288 = vadd.f32 %v2156, %v2278
        %v2289 = vld [vmem:[#allocation4 + $0x3] sm:$0x1]
        %v2290 = vlaneseq
        %v2291 = vshrl.u32 %v2290, 7
        %v2292 = vsub.s32 0, %v2291
        %v2293 = vrot.slane %v2289, %v2292
        %v2294 = vadd.f32 %v2281, %v2293
        %v2295 = vadd.f32 %v2282, %v2293
        %v2296 = vadd.f32 %v2283, %v2293
        %v2297 = vadd.f32 %v2284, %v2293
        %v2298 = vadd.f32 %v2285, %v2293
        %v2299 = vadd.f32 %v2286, %v2293
        %v2300 = vadd.f32 %v2287, %v2293
        %v2301 = vadd.f32 %v2288, %v2293
        %v2302 = vmax.f32 %v2294, 0.0
        %v2303 = vmax.f32 %v2295, 0.0
        %v2304 = vmax.f32 %v2296, 0.0
        %v2305 = vmax.f32 %v2297, 0.0
        %v2306 = vmax.f32 %v2298, 0.0
        %v2307 = vmax.f32 %v2299, 0.0
        %v2308 = vmax.f32 %v2300, 0.0
        %v2309 = vmax.f32 %v2301, 0.0
        %v2318 = vrot.slane %v2302, 7
        %v2319 = vrot.slane %v2303, 7
        %v2320 = vsel %vm364, %v2318, %v2319
        %v2321 = vrot.slane %v2304, 7
        %v2322 = vsel %vm364, %v2319, %v2321
        %v2323 = vrot.slane %v2305, 7
        %v2324 = vsel %vm364, %v2321, %v2323
        %v2325 = vrot.slane %v2306, 7
        %v2326 = vsel %vm364, %v2323, %v2325
        %v2327 = vrot.slane %v2307, 7
        %v2328 = vsel %vm364, %v2325, %v2327
        %v2329 = vrot.slane %v2308, 7
        %v2330 = vsel %vm364, %v2327, %v2329
        %v2331 = vrot.slane %v2309, 7
        %v2332 = vsel %vm364, %v2329, %v2331
        %v2341 = vsel %vm364, 0.0, %v2318
        %v2342 = vrot.slane %v2302, 1
        %v2343 = vrot.slane %v2303, 1
        %v2344 = vsel %vm389, %v2342, %v2343
        %v2345 = vrot.slane %v2304, 1
        %v2346 = vsel %vm389, %v2343, %v2345
        %v2347 = vrot.slane %v2305, 1
        %v2348 = vsel %vm389, %v2345, %v2347
        %v2349 = vrot.slane %v2306, 1
        %v2350 = vsel %vm389, %v2347, %v2349
        %v2351 = vrot.slane %v2307, 1
        %v2352 = vsel %vm389, %v2349, %v2351
        %v2353 = vrot.slane %v2308, 1
        %v2354 = vsel %vm389, %v2351, %v2353
        %v2355 = vrot.slane %v2309, 1
        %v2356 = vsel %vm389, %v2353, %v2355
        %v2365 = vsel %vm389, %v2355, 0.0
        %s2366 = scalar_lea.vmem [#allocation2], 1536
        %v2367 = vld [vmem:[%s2366] sm:$0xff]
        %v2368 = vld [vmem:[%s2366 + $0x8] sm:$0xff]
        %v2369 = vld [vmem:[%s2366 + $0x10] sm:$0xff]
        %v2370 = vld [vmem:[%s2366 + $0x18] sm:$0xff]
        %v2371 = vld [vmem:[%s2366 + $0x20] sm:$0xff]
        %v2372 = vld [vmem:[%s2366 + $0x28] sm:$0xff]
        %v2373 = vld [vmem:[%s2366 + $0x30] sm:$0xff]
        %v2374 = vld [vmem:[%s2366 + $0x38] sm:$0xff]
        %v2375 = vld [vmem:[%s2366 + $0x40] sm:$0xff]
        %v2376 = vld [vmem:[%s2366 + $0x48] sm:$0xff]
        %v2377 = vld [vmem:[%s2366 + $0x50] sm:$0xff]
        %v2378 = vld [vmem:[%s2366 + $0x58] sm:$0xff]
        %v2379 = vld [vmem:[%s2366 + $0x60] sm:$0xff]
        %v2380 = vld [vmem:[%s2366 + $0x68] sm:$0xff]
        %v2381 = vld [vmem:[%s2366 + $0x70] sm:$0xff]
        %v2382 = vld [vmem:[%s2366 + $0x78] sm:$0xff]
        %s2383 = scalar_lea.vmem [#allocation2], 1664
        %v2384 = vld [vmem:[%s2383] sm:$0xff]
        %v2385 = vld [vmem:[%s2383 + $0x8] sm:$0xff]
        %v2386 = vld [vmem:[%s2383 + $0x10] sm:$0xff]
        %v2387 = vld [vmem:[%s2383 + $0x18] sm:$0xff]
        %v2388 = vld [vmem:[%s2383 + $0x20] sm:$0xff]
        %v2389 = vld [vmem:[%s2383 + $0x28] sm:$0xff]
        %v2390 = vld [vmem:[%s2383 + $0x30] sm:$0xff]
        %v2391 = vld [vmem:[%s2383 + $0x38] sm:$0xff]
        %v2392 = vld [vmem:[%s2383 + $0x40] sm:$0xff]
        %v2393 = vld [vmem:[%s2383 + $0x48] sm:$0xff]
        %v2394 = vld [vmem:[%s2383 + $0x50] sm:$0xff]
        %v2395 = vld [vmem:[%s2383 + $0x58] sm:$0xff]
        %v2396 = vld [vmem:[%s2383 + $0x60] sm:$0xff]
        %v2397 = vld [vmem:[%s2383 + $0x68] sm:$0xff]
        %v2398 = vld [vmem:[%s2383 + $0x70] sm:$0xff]
        %v2399 = vld [vmem:[%s2383 + $0x78] sm:$0xff]
        %2400 = vmatprep.subr.mxu0 0.0
        %2401 = vmatpush1.msra.mxu0 %v2384
        %2402 = vmatprep.subr.mxu0 0.0
        %2403 = vmatpush1.msra.mxu0 %v2385
        %2404 = vmatprep.subr.mxu0 0.0
        %2405 = vmatpush1.msra.mxu0 %v2386
        %2406 = vmatprep.subr.mxu0 0.0
        %2407 = vmatpush1.msra.mxu0 %v2387
        %2408 = vmatprep.subr.mxu0 0.0
        %2409 = vmatpush1.msra.mxu0 %v2388
        %2410 = vmatprep.subr.mxu0 0.0
        %2411 = vmatpush1.msra.mxu0 %v2389
        %2412 = vmatprep.subr.mxu0 0.0
        %2413 = vmatpush1.msra.mxu0 %v2390
        %2414 = vmatprep.subr.mxu0 0.0
        %2415 = vmatpush1.msra.mxu0 %v2391
        %2416 = vmatprep.subr.mxu0 0.0
        %2417 = vmatpush1.msra.mxu0 %v2392
        %2418 = vmatprep.subr.mxu0 0.0
        %2419 = vmatpush1.msra.mxu0 %v2393
        %2420 = vmatprep.subr.mxu0 0.0
        %2421 = vmatpush1.msra.mxu0 %v2394
        %2422 = vmatprep.subr.mxu0 0.0
        %2423 = vmatpush1.msra.mxu0 %v2395
        %2424 = vmatprep.subr.mxu0 0.0
        %2425 = vmatpush1.msra.mxu0 %v2396
        %2426 = vmatprep.subr.mxu0 0.0
        %2427 = vmatpush1.msra.mxu0 %v2397
        %2428 = vmatprep.subr.mxu0 0.0
        %2429 = vmatpush1.msra.mxu0 %v2398
        %2430 = vmatprep.subr.mxu0 0.0
        %2431 = vmatpush1.msra.mxu0 %v2399
        %2432 = vmatprep.subr.mxu0 0.0
        %2433 = vmatpush1.msra.mxu0 0.0
        %2434 = vmatprep.subr.mxu0 0.0
        %2435 = vmatpush1.msra.mxu0 0.0
        %2436 = vmatprep.subr.mxu0 0.0
        %2437 = vmatpush1.msra.mxu0 0.0
        %2438 = vmatprep.subr.mxu0 0.0
        %2439 = vmatpush1.msra.mxu0 0.0
        %2440 = vmatprep.subr.mxu0 0.0
        %2441 = vmatpush1.msra.mxu0 0.0
        %2442 = vmatprep.subr.mxu0 0.0
        %2443 = vmatpush1.msra.mxu0 0.0
        %2444 = vmatprep.subr.mxu0 0.0
        %2445 = vmatpush1.msra.mxu0 0.0
        %2446 = vmatprep.subr.mxu0 0.0
        %2447 = vmatpush1.msra.mxu0 0.0
        %2448 = vmatprep.subr.mxu0 0.0
        %2449 = vmatpush1.msra.mxu0 0.0
        %2450 = vmatprep.subr.mxu0 0.0
        %2451 = vmatpush1.msra.mxu0 0.0
        %2452 = vmatprep.subr.mxu0 0.0
        %2453 = vmatpush1.msra.mxu0 0.0
        %2454 = vmatprep.subr.mxu0 0.0
        %2455 = vmatpush1.msra.mxu0 0.0
        %2456 = vmatprep.subr.mxu0 0.0
        %2457 = vmatpush1.msra.mxu0 0.0
        %2458 = vmatprep.subr.mxu0 0.0
        %2459 = vmatpush1.msra.mxu0 0.0
        %2460 = vmatprep.subr.mxu0 0.0
        %2461 = vmatpush1.msra.mxu0 0.0
        %2462 = vmatprep.subr.mxu0 0.0
        %2463 = vmatpush1.msra.mxu0 0.0
        %2464 = vmatprep.mubr.f32.mxu0 0.0
        %2465 = vmatmul.mubr.f32.gmra.mrb[0].mxu0 %v2302
        %v2466 = vpop.f32.mrb[0].mxu0
        %v2467 = vadd.f32 0.0, %v2466
        %v2468 = vpop.f32.mrb[0].mxu0
        %2469 = vmatprep.mubr.f32.mxu0 0.0
        %2470 = vmatmul.mubr.f32.gmra.mrb[0].mxu0 %v2303
        %v2471 = vpop.f32.mrb[0].mxu0
        %v2472 = vadd.f32 0.0, %v2471
        %v2473 = vpop.f32.mrb[0].mxu0
        %2474 = vmatprep.mubr.f32.mxu0 0.0
        %2475 = vmatmul.mubr.f32.gmra.mrb[0].mxu0 %v2304
        %v2476 = vpop.f32.mrb[0].mxu0
        %v2477 = vadd.f32 0.0, %v2476
        %v2478 = vpop.f32.mrb[0].mxu0
        %2479 = vmatprep.mubr.f32.mxu0 0.0
        %2480 = vmatmul.mubr.f32.gmra.mrb[0].mxu0 %v2305
        %v2481 = vpop.f32.mrb[0].mxu0
        %v2482 = vadd.f32 0.0, %v2481
        %v2483 = vpop.f32.mrb[0].mxu0
        %2484 = vmatprep.mubr.f32.mxu0 0.0
        %2485 = vmatmul.mubr.f32.gmra.mrb[0].mxu0 %v2306
        %v2486 = vpop.f32.mrb[0].mxu0
        %v2487 = vadd.f32 0.0, %v2486
        %v2488 = vpop.f32.mrb[0].mxu0
        %2489 = vmatprep.mubr.f32.mxu0 0.0
        %2490 = vmatmul.mubr.f32.gmra.mrb[0].mxu0 %v2307
        %v2491 = vpop.f32.mrb[0].mxu0
        %v2492 = vadd.f32 0.0, %v2491
        %v2493 = vpop.f32.mrb[0].mxu0
        %2494 = vmatprep.mubr.f32.mxu0 0.0
        %2495 = vmatmul.mubr.f32.gmra.mrb[0].mxu0 %v2308
        %v2496 = vpop.f32.mrb[0].mxu0
        %v2497 = vadd.f32 0.0, %v2496
        %v2498 = vpop.f32.mrb[0].mxu0
        %2499 = vmatprep.mubr.f32.mxu0 0.0
        %2500 = vmatmul.mubr.f32.gmra.mrb[0].mxu0 %v2309
        %v2501 = vpop.f32.mrb[0].mxu0
        %v2502 = vadd.f32 0.0, %v2501
        %v2503 = vpop.f32.mrb[0].mxu0
        %2504 = vdwg.mxu0
        %2505 = vmatprep.subr.mxu0 0.0
        %2506 = vmatpush1.msra.mxu0 %v2367
        %2507 = vmatprep.subr.mxu0 0.0
        %2508 = vmatpush1.msra.mxu0 %v2368
        %2509 = vmatprep.subr.mxu0 0.0
        %2510 = vmatpush1.msra.mxu0 %v2369
        %2511 = vmatprep.subr.mxu0 0.0
        %2512 = vmatpush1.msra.mxu0 %v2370
        %2513 = vmatprep.subr.mxu0 0.0
        %2514 = vmatpush1.msra.mxu0 %v2371
        %2515 = vmatprep.subr.mxu0 0.0
        %2516 = vmatpush1.msra.mxu0 %v2372
        %2517 = vmatprep.subr.mxu0 0.0
        %2518 = vmatpush1.msra.mxu0 %v2373
        %2519 = vmatprep.subr.mxu0 0.0
        %2520 = vmatpush1.msra.mxu0 %v2374
        %2521 = vmatprep.subr.mxu0 0.0
        %2522 = vmatpush1.msra.mxu0 %v2375
        %2523 = vmatprep.subr.mxu0 0.0
        %2524 = vmatpush1.msra.mxu0 %v2376
        %2525 = vmatprep.subr.mxu0 0.0
        %2526 = vmatpush1.msra.mxu0 %v2377
        %2527 = vmatprep.subr.mxu0 0.0
        %2528 = vmatpush1.msra.mxu0 %v2378
        %2529 = vmatprep.subr.mxu0 0.0
        %2530 = vmatpush1.msra.mxu0 %v2379
        %2531 = vmatprep.subr.mxu0 0.0
        %2532 = vmatpush1.msra.mxu0 %v2380
        %2533 = vmatprep.subr.mxu0 0.0
        %2534 = vmatpush1.msra.mxu0 %v2381
        %2535 = vmatprep.subr.mxu0 0.0
        %2536 = vmatpush1.msra.mxu0 %v2382
        %2537 = vmatprep.subr.mxu0 0.0
        %2538 = vmatpush1.msra.mxu0 0.0
        %2539 = vmatprep.subr.mxu0 0.0
        %2540 = vmatpush1.msra.mxu0 0.0
        %2541 = vmatprep.subr.mxu0 0.0
        %2542 = vmatpush1.msra.mxu0 0.0
        %2543 = vmatprep.subr.mxu0 0.0
        %2544 = vmatpush1.msra.mxu0 0.0
        %2545 = vmatprep.subr.mxu0 0.0
        %2546 = vmatpush1.msra.mxu0 0.0
        %2547 = vmatprep.subr.mxu0 0.0
        %2548 = vmatpush1.msra.mxu0 0.0
        %2549 = vmatprep.subr.mxu0 0.0
        %2550 = vmatpush1.msra.mxu0 0.0
        %2551 = vmatprep.subr.mxu0 0.0
        %2552 = vmatpush1.msra.mxu0 0.0
        %2553 = vmatprep.subr.mxu0 0.0
        %2554 = vmatpush1.msra.mxu0 0.0
        %2555 = vmatprep.subr.mxu0 0.0
        %2556 = vmatpush1.msra.mxu0 0.0
        %2557 = vmatprep.subr.mxu0 0.0
        %2558 = vmatpush1.msra.mxu0 0.0
        %2559 = vmatprep.subr.mxu0 0.0
        %2560 = vmatpush1.msra.mxu0 0.0
        %2561 = vmatprep.subr.mxu0 0.0
        %2562 = vmatpush1.msra.mxu0 0.0
        %2563 = vmatprep.subr.mxu0 0.0
        %2564 = vmatpush1.msra.mxu0 0.0
        %2565 = vmatprep.subr.mxu0 0.0
        %2566 = vmatpush1.msra.mxu0 0.0
        %2567 = vmatprep.subr.mxu0 0.0
        %2568 = vmatpush1.msra.mxu0 0.0
        %2569 = vmatprep.mubr.f32.mxu0 0.0
        %2570 = vmatmul.mubr.f32.gmra.mrb[0].mxu0 %v2341
        %v2571 = vpop.f32.mrb[0].mxu0
        %v2572 = vadd.f32 %v2467, %v2571
        %v2573 = vpop.f32.mrb[0].mxu0
        %2574 = vmatprep.mubr.f32.mxu0 0.0
        %2575 = vmatmul.mubr.f32.gmra.mrb[0].mxu0 %v2320
        %v2576 = vpop.f32.mrb[0].mxu0
        %v2577 = vadd.f32 %v2472, %v2576
        %v2578 = vpop.f32.mrb[0].mxu0
        %2579 = vmatprep.mubr.f32.mxu0 0.0
        %2580 = vmatmul.mubr.f32.gmra.mrb[0].mxu0 %v2322
        %v2581 = vpop.f32.mrb[0].mxu0
        %v2582 = vadd.f32 %v2477, %v2581
        %v2583 = vpop.f32.mrb[0].mxu0
        %2584 = vmatprep.mubr.f32.mxu0 0.0
        %2585 = vmatmul.mubr.f32.gmra.mrb[0].mxu0 %v2324
        %v2586 = vpop.f32.mrb[0].mxu0
        %v2587 = vadd.f32 %v2482, %v2586
        %v2588 = vpop.f32.mrb[0].mxu0
        %2589 = vmatprep.mubr.f32.mxu0 0.0
        %2590 = vmatmul.mubr.f32.gmra.mrb[0].mxu0 %v2326
        %v2591 = vpop.f32.mrb[0].mxu0
        %v2592 = vadd.f32 %v2487, %v2591
        %v2593 = vpop.f32.mrb[0].mxu0
        %2594 = vmatprep.mubr.f32.mxu0 0.0
        %2595 = vmatmul.mubr.f32.gmra.mrb[0].mxu0 %v2328
        %v2596 = vpop.f32.mrb[0].mxu0
        %v2597 = vadd.f32 %v2492, %v2596
        %v2598 = vpop.f32.mrb[0].mxu0
        %2599 = vmatprep.mubr.f32.mxu0 0.0
        %2600 = vmatmul.mubr.f32.gmra.mrb[0].mxu0 %v2330
        %v2601 = vpop.f32.mrb[0].mxu0
        %v2602 = vadd.f32 %v2497, %v2601
        %v2603 = vpop.f32.mrb[0].mxu0
        %2604 = vmatprep.mubr.f32.mxu0 0.0
        %2605 = vmatmul.mubr.f32.gmra.mrb[0].mxu0 %v2332
        %v2606 = vpop.f32.mrb[0].mxu0
        %v2607 = vadd.f32 %v2502, %v2606
        %v2608 = vpop.f32.mrb[0].mxu0
        %2609 = vdwg.mxu0
        %s2610 = scalar_lea.vmem [#allocation2], 1792
        %v2611 = vld [vmem:[%s2610] sm:$0xff]
        %v2612 = vld [vmem:[%s2610 + $0x8] sm:$0xff]
        %v2613 = vld [vmem:[%s2610 + $0x10] sm:$0xff]
        %v2614 = vld [vmem:[%s2610 + $0x18] sm:$0xff]
        %v2615 = vld [vmem:[%s2610 + $0x20] sm:$0xff]
        %v2616 = vld [vmem:[%s2610 + $0x28] sm:$0xff]
        %v2617 = vld [vmem:[%s2610 + $0x30] sm:$0xff]
        %v2618 = vld [vmem:[%s2610 + $0x38] sm:$0xff]
        %v2619 = vld [vmem:[%s2610 + $0x40] sm:$0xff]
        %v2620 = vld [vmem:[%s2610 + $0x48] sm:$0xff]
        %v2621 = vld [vmem:[%s2610 + $0x50] sm:$0xff]
        %v2622 = vld [vmem:[%s2610 + $0x58] sm:$0xff]
        %v2623 = vld [vmem:[%s2610 + $0x60] sm:$0xff]
        %v2624 = vld [vmem:[%s2610 + $0x68] sm:$0xff]
        %v2625 = vld [vmem:[%s2610 + $0x70] sm:$0xff]
        %v2626 = vld [vmem:[%s2610 + $0x78] sm:$0xff]
        %2627 = vmatprep.subr.mxu0 0.0
        %2628 = vmatpush1.msra.mxu0 %v2611
        %2629 = vmatprep.subr.mxu0 0.0
        %2630 = vmatpush1.msra.mxu0 %v2612
        %2631 = vmatprep.subr.mxu0 0.0
        %2632 = vmatpush1.msra.mxu0 %v2613
        %2633 = vmatprep.subr.mxu0 0.0
        %2634 = vmatpush1.msra.mxu0 %v2614
        %2635 = vmatprep.subr.mxu0 0.0
        %2636 = vmatpush1.msra.mxu0 %v2615
        %2637 = vmatprep.subr.mxu0 0.0
        %2638 = vmatpush1.msra.mxu0 %v2616
        %2639 = vmatprep.subr.mxu0 0.0
        %2640 = vmatpush1.msra.mxu0 %v2617
        %2641 = vmatprep.subr.mxu0 0.0
        %2642 = vmatpush1.msra.mxu0 %v2618
        %2643 = vmatprep.subr.mxu0 0.0
        %2644 = vmatpush1.msra.mxu0 %v2619
        %2645 = vmatprep.subr.mxu0 0.0
        %2646 = vmatpush1.msra.mxu0 %v2620
        %2647 = vmatprep.subr.mxu0 0.0
        %2648 = vmatpush1.msra.mxu0 %v2621
        %2649 = vmatprep.subr.mxu0 0.0
        %2650 = vmatpush1.msra.mxu0 %v2622
        %2651 = vmatprep.subr.mxu0 0.0
        %2652 = vmatpush1.msra.mxu0 %v2623
        %2653 = vmatprep.subr.mxu0 0.0
        %2654 = vmatpush1.msra.mxu0 %v2624
        %2655 = vmatprep.subr.mxu0 0.0
        %2656 = vmatpush1.msra.mxu0 %v2625
        %2657 = vmatprep.subr.mxu0 0.0
        %2658 = vmatpush1.msra.mxu0 %v2626
        %2659 = vmatprep.subr.mxu0 0.0
        %2660 = vmatpush1.msra.mxu0 0.0
        %2661 = vmatprep.subr.mxu0 0.0
        %2662 = vmatpush1.msra.mxu0 0.0
        %2663 = vmatprep.subr.mxu0 0.0
        %2664 = vmatpush1.msra.mxu0 0.0
        %2665 = vmatprep.subr.mxu0 0.0
        %2666 = vmatpush1.msra.mxu0 0.0
        %2667 = vmatprep.subr.mxu0 0.0
        %2668 = vmatpush1.msra.mxu0 0.0
        %2669 = vmatprep.subr.mxu0 0.0
        %2670 = vmatpush1.msra.mxu0 0.0
        %2671 = vmatprep.subr.mxu0 0.0
        %2672 = vmatpush1.msra.mxu0 0.0
        %2673 = vmatprep.subr.mxu0 0.0
        %2674 = vmatpush1.msra.mxu0 0.0
        %2675 = vmatprep.subr.mxu0 0.0
        %2676 = vmatpush1.msra.mxu0 0.0
        %2677 = vmatprep.subr.mxu0 0.0
        %2678 = vmatpush1.msra.mxu0 0.0
        %2679 = vmatprep.subr.mxu0 0.0
        %2680 = vmatpush1.msra.mxu0 0.0
        %2681 = vmatprep.subr.mxu0 0.0
        %2682 = vmatpush1.msra.mxu0 0.0
        %2683 = vmatprep.subr.mxu0 0.0
        %2684 = vmatpush1.msra.mxu0 0.0
        %2685 = vmatprep.subr.mxu0 0.0
        %2686 = vmatpush1.msra.mxu0 0.0
        %2687 = vmatprep.subr.mxu0 0.0
        %2688 = vmatpush1.msra.mxu0 0.0
        %2689 = vmatprep.subr.mxu0 0.0
        %2690 = vmatpush1.msra.mxu0 0.0
        %2691 = vmatprep.mubr.f32.mxu0 0.0
        %2692 = vmatmul.mubr.f32.gmra.mrb[0].mxu0 %v2344
        %v2693 = vpop.f32.mrb[0].mxu0
        %v2694 = vadd.f32 0.0, %v2693
        %v2695 = vpop.f32.mrb[0].mxu0
        %2696 = vmatprep.mubr.f32.mxu0 0.0
        %2697 = vmatmul.mubr.f32.gmra.mrb[0].mxu0 %v2346
        %v2698 = vpop.f32.mrb[0].mxu0
        %v2699 = vadd.f32 0.0, %v2698
        %v2700 = vpop.f32.mrb[0].mxu0
        %2701 = vmatprep.mubr.f32.mxu0 0.0
        %2702 = vmatmul.mubr.f32.gmra.mrb[0].mxu0 %v2348
        %v2703 = vpop.f32.mrb[0].mxu0
        %v2704 = vadd.f32 0.0, %v2703
        %v2705 = vpop.f32.mrb[0].mxu0
        %2706 = vmatprep.mubr.f32.mxu0 0.0
        %2707 = vmatmul.mubr.f32.gmra.mrb[0].mxu0 %v2350
        %v2708 = vpop.f32.mrb[0].mxu0
        %v2709 = vadd.f32 0.0, %v2708
        %v2710 = vpop.f32.mrb[0].mxu0
        %2711 = vmatprep.mubr.f32.mxu0 0.0
        %2712 = vmatmul.mubr.f32.gmra.mrb[0].mxu0 %v2352
        %v2713 = vpop.f32.mrb[0].mxu0
        %v2714 = vadd.f32 0.0, %v2713
        %v2715 = vpop.f32.mrb[0].mxu0
        %2716 = vmatprep.mubr.f32.mxu0 0.0
        %2717 = vmatmul.mubr.f32.gmra.mrb[0].mxu0 %v2354
        %v2718 = vpop.f32.mrb[0].mxu0
        %v2719 = vadd.f32 0.0, %v2718
        %v2720 = vpop.f32.mrb[0].mxu0
        %2721 = vmatprep.mubr.f32.mxu0 0.0
        %2722 = vmatmul.mubr.f32.gmra.mrb[0].mxu0 %v2356
        %v2723 = vpop.f32.mrb[0].mxu0
        %v2724 = vadd.f32 0.0, %v2723
        %v2725 = vpop.f32.mrb[0].mxu0
        %2726 = vmatprep.mubr.f32.mxu0 0.0
        %2727 = vmatmul.mubr.f32.gmra.mrb[0].mxu0 %v2365
        %v2728 = vpop.f32.mrb[0].mxu0
        %v2729 = vadd.f32 0.0, %v2728
        %v2730 = vpop.f32.mrb[0].mxu0
        %2731 = vdwg.mxu0
        %v2732 = vadd.f32 %v2572, %v2694
        %v2733 = vadd.f32 %v2577, %v2699
        %v2734 = vadd.f32 %v2582, %v2704
        %v2735 = vadd.f32 %v2587, %v2709
        %v2736 = vadd.f32 %v2592, %v2714
        %v2737 = vadd.f32 %v2597, %v2719
        %v2738 = vadd.f32 %v2602, %v2724
        %v2739 = vadd.f32 %v2607, %v2729
        %v2740 = vld [vmem:[#allocation4 + $0x4] sm:$0x1]
        %v2741 = vlaneseq
        %v2742 = vshrl.u32 %v2741, 7
        %v2743 = vsub.s32 0, %v2742
        %v2744 = vrot.slane %v2740, %v2743
        %v2745 = vadd.f32 %v2732, %v2744
        %v2746 = vadd.f32 %v2733, %v2744
        %v2747 = vadd.f32 %v2734, %v2744
        %v2748 = vadd.f32 %v2735, %v2744
        %v2749 = vadd.f32 %v2736, %v2744
        %v2750 = vadd.f32 %v2737, %v2744
        %v2751 = vadd.f32 %v2738, %v2744
        %v2752 = vadd.f32 %v2739, %v2744
        %v2753 = vmax.f32 %v2745, 0.0
        %v2754 = vmax.f32 %v2746, 0.0
        %v2755 = vmax.f32 %v2747, 0.0
        %v2756 = vmax.f32 %v2748, 0.0
        %v2757 = vmax.f32 %v2749, 0.0
        %v2758 = vmax.f32 %v2750, 0.0
        %v2759 = vmax.f32 %v2751, 0.0
        %v2760 = vmax.f32 %v2752, 0.0
        %v2769 = vrot.slane %v2753, 7
        %v2770 = vrot.slane %v2754, 7
        %v2771 = vsel %vm364, %v2769, %v2770
        %v2772 = vrot.slane %v2755, 7
        %v2773 = vsel %vm364, %v2770, %v2772
        %v2774 = vrot.slane %v2756, 7
        %v2775 = vsel %vm364, %v2772, %v2774
        %v2776 = vrot.slane %v2757, 7
        %v2777 = vsel %vm364, %v2774, %v2776
        %v2778 = vrot.slane %v2758, 7
        %v2779 = vsel %vm364, %v2776, %v2778
        %v2780 = vrot.slane %v2759, 7
        %v2781 = vsel %vm364, %v2778, %v2780
        %v2782 = vrot.slane %v2760, 7
        %v2783 = vsel %vm364, %v2780, %v2782
        %v2792 = vsel %vm364, 0.0, %v2769
        %v2793 = vrot.slane %v2753, 1
        %v2794 = vrot.slane %v2754, 1
        %v2795 = vsel %vm389, %v2793, %v2794
        %v2796 = vrot.slane %v2755, 1
        %v2797 = vsel %vm389, %v2794, %v2796
        %v2798 = vrot.slane %v2756, 1
        %v2799 = vsel %vm389, %v2796, %v2798
        %v2800 = vrot.slane %v2757, 1
        %v2801 = vsel %vm389, %v2798, %v2800
        %v2802 = vrot.slane %v2758, 1
        %v2803 = vsel %vm389, %v2800, %v2802
        %v2804 = vrot.slane %v2759, 1
        %v2805 = vsel %vm389, %v2802, %v2804
        %v2806 = vrot.slane %v2760, 1
        %v2807 = vsel %vm389, %v2804, %v2806
        %v2816 = vsel %vm389, %v2806, 0.0
        %s2817 = scalar_lea.vmem [#allocation2], 1920
        %v2818 = vld [vmem:[%s2817] sm:$0xff]
        %v2819 = vld [vmem:[%s2817 + $0x8] sm:$0xff]
        %v2820 = vld [vmem:[%s2817 + $0x10] sm:$0xff]
        %v2821 = vld [vmem:[%s2817 + $0x18] sm:$0xff]
        %v2822 = vld [vmem:[%s2817 + $0x20] sm:$0xff]
        %v2823 = vld [vmem:[%s2817 + $0x28] sm:$0xff]
        %v2824 = vld [vmem:[%s2817 + $0x30] sm:$0xff]
        %v2825 = vld [vmem:[%s2817 + $0x38] sm:$0xff]
        %v2826 = vld [vmem:[%s2817 + $0x40] sm:$0xff]
        %v2827 = vld [vmem:[%s2817 + $0x48] sm:$0xff]
        %v2828 = vld [vmem:[%s2817 + $0x50] sm:$0xff]
        %v2829 = vld [vmem:[%s2817 + $0x58] sm:$0xff]
        %v2830 = vld [vmem:[%s2817 + $0x60] sm:$0xff]
        %v2831 = vld [vmem:[%s2817 + $0x68] sm:$0xff]
        %v2832 = vld [vmem:[%s2817 + $0x70] sm:$0xff]
        %v2833 = vld [vmem:[%s2817 + $0x78] sm:$0xff]
        %s2834 = scalar_lea.vmem [#allocation2], 2048
        %v2835 = vld [vmem:[%s2834] sm:$0xff]
        %v2836 = vld [vmem:[%s2834 + $0x8] sm:$0xff]
        %v2837 = vld [vmem:[%s2834 + $0x10] sm:$0xff]
        %v2838 = vld [vmem:[%s2834 + $0x18] sm:$0xff]
        %v2839 = vld [vmem:[%s2834 + $0x20] sm:$0xff]
        %v2840 = vld [vmem:[%s2834 + $0x28] sm:$0xff]
        %v2841 = vld [vmem:[%s2834 + $0x30] sm:$0xff]
        %v2842 = vld [vmem:[%s2834 + $0x38] sm:$0xff]
        %v2843 = vld [vmem:[%s2834 + $0x40] sm:$0xff]
        %v2844 = vld [vmem:[%s2834 + $0x48] sm:$0xff]
        %v2845 = vld [vmem:[%s2834 + $0x50] sm:$0xff]
        %v2846 = vld [vmem:[%s2834 + $0x58] sm:$0xff]
        %v2847 = vld [vmem:[%s2834 + $0x60] sm:$0xff]
        %v2848 = vld [vmem:[%s2834 + $0x68] sm:$0xff]
        %v2849 = vld [vmem:[%s2834 + $0x70] sm:$0xff]
        %v2850 = vld [vmem:[%s2834 + $0x78] sm:$0xff]
        %2851 = vmatprep.subr.mxu0 0.0
        %2852 = vmatpush1.msra.mxu0 %v2835
        %2853 = vmatprep.subr.mxu0 0.0
        %2854 = vmatpush1.msra.mxu0 %v2836
        %2855 = vmatprep.subr.mxu0 0.0
        %2856 = vmatpush1.msra.mxu0 %v2837
        %2857 = vmatprep.subr.mxu0 0.0
        %2858 = vmatpush1.msra.mxu0 %v2838
        %2859 = vmatprep.subr.mxu0 0.0
        %2860 = vmatpush1.msra.mxu0 %v2839
        %2861 = vmatprep.subr.mxu0 0.0
        %2862 = vmatpush1.msra.mxu0 %v2840
        %2863 = vmatprep.subr.mxu0 0.0
        %2864 = vmatpush1.msra.mxu0 %v2841
        %2865 = vmatprep.subr.mxu0 0.0
        %2866 = vmatpush1.msra.mxu0 %v2842
        %2867 = vmatprep.subr.mxu0 0.0
        %2868 = vmatpush1.msra.mxu0 %v2843
        %2869 = vmatprep.subr.mxu0 0.0
        %2870 = vmatpush1.msra.mxu0 %v2844
        %2871 = vmatprep.subr.mxu0 0.0
        %2872 = vmatpush1.msra.mxu0 %v2845
        %2873 = vmatprep.subr.mxu0 0.0
        %2874 = vmatpush1.msra.mxu0 %v2846
        %2875 = vmatprep.subr.mxu0 0.0
        %2876 = vmatpush1.msra.mxu0 %v2847
        %2877 = vmatprep.subr.mxu0 0.0
        %2878 = vmatpush1.msra.mxu0 %v2848
        %2879 = vmatprep.subr.mxu0 0.0
        %2880 = vmatpush1.msra.mxu0 %v2849
        %2881 = vmatprep.subr.mxu0 0.0
        %2882 = vmatpush1.msra.mxu0 %v2850
        %2883 = vmatprep.subr.mxu0 0.0
        %2884 = vmatpush1.msra.mxu0 0.0
        %2885 = vmatprep.subr.mxu0 0.0
        %2886 = vmatpush1.msra.mxu0 0.0
        %2887 = vmatprep.subr.mxu0 0.0
        %2888 = vmatpush1.msra.mxu0 0.0
        %2889 = vmatprep.subr.mxu0 0.0
        %2890 = vmatpush1.msra.mxu0 0.0
        %2891 = vmatprep.subr.mxu0 0.0
        %2892 = vmatpush1.msra.mxu0 0.0
        %2893 = vmatprep.subr.mxu0 0.0
        %2894 = vmatpush1.msra.mxu0 0.0
        %2895 = vmatprep.subr.mxu0 0.0
        %2896 = vmatpush1.msra.mxu0 0.0
        %2897 = vmatprep.subr.mxu0 0.0
        %2898 = vmatpush1.msra.mxu0 0.0
        %2899 = vmatprep.subr.mxu0 0.0
        %2900 = vmatpush1.msra.mxu0 0.0
        %2901 = vmatprep.subr.mxu0 0.0
        %2902 = vmatpush1.msra.mxu0 0.0
        %2903 = vmatprep.subr.mxu0 0.0
        %2904 = vmatpush1.msra.mxu0 0.0
        %2905 = vmatprep.subr.mxu0 0.0
        %2906 = vmatpush1.msra.mxu0 0.0
        %2907 = vmatprep.subr.mxu0 0.0
        %2908 = vmatpush1.msra.mxu0 0.0
        %2909 = vmatprep.subr.mxu0 0.0
        %2910 = vmatpush1.msra.mxu0 0.0
        %2911 = vmatprep.subr.mxu0 0.0
        %2912 = vmatpush1.msra.mxu0 0.0
        %2913 = vmatprep.subr.mxu0 0.0
        %2914 = vmatpush1.msra.mxu0 0.0
        %2915 = vmatprep.mubr.f32.mxu0 0.0
        %2916 = vmatmul.mubr.f32.gmra.mrb[0].mxu0 %v2753
        %v2917 = vpop.f32.mrb[0].mxu0
        %v2918 = vadd.f32 0.0, %v2917
        %v2919 = vpop.f32.mrb[0].mxu0
        %2920 = vmatprep.mubr.f32.mxu0 0.0
        %2921 = vmatmul.mubr.f32.gmra.mrb[0].mxu0 %v2754
        %v2922 = vpop.f32.mrb[0].mxu0
        %v2923 = vadd.f32 0.0, %v2922
        %v2924 = vpop.f32.mrb[0].mxu0
        %2925 = vmatprep.mubr.f32.mxu0 0.0
        %2926 = vmatmul.mubr.f32.gmra.mrb[0].mxu0 %v2755
        %v2927 = vpop.f32.mrb[0].mxu0
        %v2928 = vadd.f32 0.0, %v2927
        %v2929 = vpop.f32.mrb[0].mxu0
        %2930 = vmatprep.mubr.f32.mxu0 0.0
        %2931 = vmatmul.mubr.f32.gmra.mrb[0].mxu0 %v2756
        %v2932 = vpop.f32.mrb[0].mxu0
        %v2933 = vadd.f32 0.0, %v2932
        %v2934 = vpop.f32.mrb[0].mxu0
        %2935 = vmatprep.mubr.f32.mxu0 0.0
        %2936 = vmatmul.mubr.f32.gmra.mrb[0].mxu0 %v2757
        %v2937 = vpop.f32.mrb[0].mxu0
        %v2938 = vadd.f32 0.0, %v2937
        %v2939 = vpop.f32.mrb[0].mxu0
        %2940 = vmatprep.mubr.f32.mxu0 0.0
        %2941 = vmatmul.mubr.f32.gmra.mrb[0].mxu0 %v2758
        %v2942 = vpop.f32.mrb[0].mxu0
        %v2943 = vadd.f32 0.0, %v2942
        %v2944 = vpop.f32.mrb[0].mxu0
        %2945 = vmatprep.mubr.f32.mxu0 0.0
        %2946 = vmatmul.mubr.f32.gmra.mrb[0].mxu0 %v2759
        %v2947 = vpop.f32.mrb[0].mxu0
        %v2948 = vadd.f32 0.0, %v2947
        %v2949 = vpop.f32.mrb[0].mxu0
        %2950 = vmatprep.mubr.f32.mxu0 0.0
        %2951 = vmatmul.mubr.f32.gmra.mrb[0].mxu0 %v2760
        %v2952 = vpop.f32.mrb[0].mxu0
        %v2953 = vadd.f32 0.0, %v2952
        %v2954 = vpop.f32.mrb[0].mxu0
        %2955 = vdwg.mxu0
        %2956 = vmatprep.subr.mxu0 0.0
        %2957 = vmatpush1.msra.mxu0 %v2818
        %2958 = vmatprep.subr.mxu0 0.0
        %2959 = vmatpush1.msra.mxu0 %v2819
        %2960 = vmatprep.subr.mxu0 0.0
        %2961 = vmatpush1.msra.mxu0 %v2820
        %2962 = vmatprep.subr.mxu0 0.0
        %2963 = vmatpush1.msra.mxu0 %v2821
        %2964 = vmatprep.subr.mxu0 0.0
        %2965 = vmatpush1.msra.mxu0 %v2822
        %2966 = vmatprep.subr.mxu0 0.0
        %2967 = vmatpush1.msra.mxu0 %v2823
        %2968 = vmatprep.subr.mxu0 0.0
        %2969 = vmatpush1.msra.mxu0 %v2824
        %2970 = vmatprep.subr.mxu0 0.0
        %2971 = vmatpush1.msra.mxu0 %v2825
        %2972 = vmatprep.subr.mxu0 0.0
        %2973 = vmatpush1.msra.mxu0 %v2826
        %2974 = vmatprep.subr.mxu0 0.0
        %2975 = vmatpush1.msra.mxu0 %v2827
        %2976 = vmatprep.subr.mxu0 0.0
        %2977 = vmatpush1.msra.mxu0 %v2828
        %2978 = vmatprep.subr.mxu0 0.0
        %2979 = vmatpush1.msra.mxu0 %v2829
        %2980 = vmatprep.subr.mxu0 0.0
        %2981 = vmatpush1.msra.mxu0 %v2830
        %2982 = vmatprep.subr.mxu0 0.0
        %2983 = vmatpush1.msra.mxu0 %v2831
        %2984 = vmatprep.subr.mxu0 0.0
        %2985 = vmatpush1.msra.mxu0 %v2832
        %2986 = vmatprep.subr.mxu0 0.0
        %2987 = vmatpush1.msra.mxu0 %v2833
        %2988 = vmatprep.subr.mxu0 0.0
        %2989 = vmatpush1.msra.mxu0 0.0
        %2990 = vmatprep.subr.mxu0 0.0
        %2991 = vmatpush1.msra.mxu0 0.0
        %2992 = vmatprep.subr.mxu0 0.0
        %2993 = vmatpush1.msra.mxu0 0.0
        %2994 = vmatprep.subr.mxu0 0.0
        %2995 = vmatpush1.msra.mxu0 0.0
        %2996 = vmatprep.subr.mxu0 0.0
        %2997 = vmatpush1.msra.mxu0 0.0
        %2998 = vmatprep.subr.mxu0 0.0
        %2999 = vmatpush1.msra.mxu0 0.0
        %3000 = vmatprep.subr.mxu0 0.0
        %3001 = vmatpush1.msra.mxu0 0.0
        %3002 = vmatprep.subr.mxu0 0.0
        %3003 = vmatpush1.msra.mxu0 0.0
        %3004 = vmatprep.subr.mxu0 0.0
        %3005 = vmatpush1.msra.mxu0 0.0
        %3006 = vmatprep.subr.mxu0 0.0
        %3007 = vmatpush1.msra.mxu0 0.0
        %3008 = vmatprep.subr.mxu0 0.0
        %3009 = vmatpush1.msra.mxu0 0.0
        %3010 = vmatprep.subr.mxu0 0.0
        %3011 = vmatpush1.msra.mxu0 0.0
        %3012 = vmatprep.subr.mxu0 0.0
        %3013 = vmatpush1.msra.mxu0 0.0
        %3014 = vmatprep.subr.mxu0 0.0
        %3015 = vmatpush1.msra.mxu0 0.0
        %3016 = vmatprep.subr.mxu0 0.0
        %3017 = vmatpush1.msra.mxu0 0.0
        %3018 = vmatprep.subr.mxu0 0.0
        %3019 = vmatpush1.msra.mxu0 0.0
        %3020 = vmatprep.mubr.f32.mxu0 0.0
        %3021 = vmatmul.mubr.f32.gmra.mrb[0].mxu0 %v2792
        %v3022 = vpop.f32.mrb[0].mxu0
        %v3023 = vadd.f32 %v2918, %v3022
        %v3024 = vpop.f32.mrb[0].mxu0
        %3025 = vmatprep.mubr.f32.mxu0 0.0
        %3026 = vmatmul.mubr.f32.gmra.mrb[0].mxu0 %v2771
        %v3027 = vpop.f32.mrb[0].mxu0
        %v3028 = vadd.f32 %v2923, %v3027
        %v3029 = vpop.f32.mrb[0].mxu0
        %3030 = vmatprep.mubr.f32.mxu0 0.0
        %3031 = vmatmul.mubr.f32.gmra.mrb[0].mxu0 %v2773
        %v3032 = vpop.f32.mrb[0].mxu0
        %v3033 = vadd.f32 %v2928, %v3032
        %v3034 = vpop.f32.mrb[0].mxu0
        %3035 = vmatprep.mubr.f32.mxu0 0.0
        %3036 = vmatmul.mubr.f32.gmra.mrb[0].mxu0 %v2775
        %v3037 = vpop.f32.mrb[0].mxu0
        %v3038 = vadd.f32 %v2933, %v3037
        %v3039 = vpop.f32.mrb[0].mxu0
        %3040 = vmatprep.mubr.f32.mxu0 0.0
        %3041 = vmatmul.mubr.f32.gmra.mrb[0].mxu0 %v2777
        %v3042 = vpop.f32.mrb[0].mxu0
        %v3043 = vadd.f32 %v2938, %v3042
        %v3044 = vpop.f32.mrb[0].mxu0
        %3045 = vmatprep.mubr.f32.mxu0 0.0
        %3046 = vmatmul.mubr.f32.gmra.mrb[0].mxu0 %v2779
        %v3047 = vpop.f32.mrb[0].mxu0
        %v3048 = vadd.f32 %v2943, %v3047
        %v3049 = vpop.f32.mrb[0].mxu0
        %3050 = vmatprep.mubr.f32.mxu0 0.0
        %3051 = vmatmul.mubr.f32.gmra.mrb[0].mxu0 %v2781
        %v3052 = vpop.f32.mrb[0].mxu0
        %v3053 = vadd.f32 %v2948, %v3052
        %v3054 = vpop.f32.mrb[0].mxu0
        %3055 = vmatprep.mubr.f32.mxu0 0.0
        %3056 = vmatmul.mubr.f32.gmra.mrb[0].mxu0 %v2783
        %v3057 = vpop.f32.mrb[0].mxu0
        %v3058 = vadd.f32 %v2953, %v3057
        %v3059 = vpop.f32.mrb[0].mxu0
        %3060 = vdwg.mxu0
        %s3061 = scalar_lea.vmem [#allocation2], 2176
        %v3062 = vld [vmem:[%s3061] sm:$0xff]
        %v3063 = vld [vmem:[%s3061 + $0x8] sm:$0xff]
        %v3064 = vld [vmem:[%s3061 + $0x10] sm:$0xff]
        %v3065 = vld [vmem:[%s3061 + $0x18] sm:$0xff]
        %v3066 = vld [vmem:[%s3061 + $0x20] sm:$0xff]
        %v3067 = vld [vmem:[%s3061 + $0x28] sm:$0xff]
        %v3068 = vld [vmem:[%s3061 + $0x30] sm:$0xff]
        %v3069 = vld [vmem:[%s3061 + $0x38] sm:$0xff]
        %v3070 = vld [vmem:[%s3061 + $0x40] sm:$0xff]
        %v3071 = vld [vmem:[%s3061 + $0x48] sm:$0xff]
        %v3072 = vld [vmem:[%s3061 + $0x50] sm:$0xff]
        %v3073 = vld [vmem:[%s3061 + $0x58] sm:$0xff]
        %v3074 = vld [vmem:[%s3061 + $0x60] sm:$0xff]
        %v3075 = vld [vmem:[%s3061 + $0x68] sm:$0xff]
        %v3076 = vld [vmem:[%s3061 + $0x70] sm:$0xff]
        %v3077 = vld [vmem:[%s3061 + $0x78] sm:$0xff]
        %3078 = vmatprep.subr.mxu0 0.0
        %3079 = vmatpush1.msra.mxu0 %v3062
        %3080 = vmatprep.subr.mxu0 0.0
        %3081 = vmatpush1.msra.mxu0 %v3063
        %3082 = vmatprep.subr.mxu0 0.0
        %3083 = vmatpush1.msra.mxu0 %v3064
        %3084 = vmatprep.subr.mxu0 0.0
        %3085 = vmatpush1.msra.mxu0 %v3065
        %3086 = vmatprep.subr.mxu0 0.0
        %3087 = vmatpush1.msra.mxu0 %v3066
        %3088 = vmatprep.subr.mxu0 0.0
        %3089 = vmatpush1.msra.mxu0 %v3067
        %3090 = vmatprep.subr.mxu0 0.0
        %3091 = vmatpush1.msra.mxu0 %v3068
        %3092 = vmatprep.subr.mxu0 0.0
        %3093 = vmatpush1.msra.mxu0 %v3069
        %3094 = vmatprep.subr.mxu0 0.0
        %3095 = vmatpush1.msra.mxu0 %v3070
        %3096 = vmatprep.subr.mxu0 0.0
        %3097 = vmatpush1.msra.mxu0 %v3071
        %3098 = vmatprep.subr.mxu0 0.0
        %3099 = vmatpush1.msra.mxu0 %v3072
        %3100 = vmatprep.subr.mxu0 0.0
        %3101 = vmatpush1.msra.mxu0 %v3073
        %3102 = vmatprep.subr.mxu0 0.0
        %3103 = vmatpush1.msra.mxu0 %v3074
        %3104 = vmatprep.subr.mxu0 0.0
        %3105 = vmatpush1.msra.mxu0 %v3075
        %3106 = vmatprep.subr.mxu0 0.0
        %3107 = vmatpush1.msra.mxu0 %v3076
        %3108 = vmatprep.subr.mxu0 0.0
        %3109 = vmatpush1.msra.mxu0 %v3077
        %3110 = vmatprep.subr.mxu0 0.0
        %3111 = vmatpush1.msra.mxu0 0.0
        %3112 = vmatprep.subr.mxu0 0.0
        %3113 = vmatpush1.msra.mxu0 0.0
        %3114 = vmatprep.subr.mxu0 0.0
        %3115 = vmatpush1.msra.mxu0 0.0
        %3116 = vmatprep.subr.mxu0 0.0
        %3117 = vmatpush1.msra.mxu0 0.0
        %3118 = vmatprep.subr.mxu0 0.0
        %3119 = vmatpush1.msra.mxu0 0.0
        %3120 = vmatprep.subr.mxu0 0.0
        %3121 = vmatpush1.msra.mxu0 0.0
        %3122 = vmatprep.subr.mxu0 0.0
        %3123 = vmatpush1.msra.mxu0 0.0
        %3124 = vmatprep.subr.mxu0 0.0
        %3125 = vmatpush1.msra.mxu0 0.0
        %3126 = vmatprep.subr.mxu0 0.0
        %3127 = vmatpush1.msra.mxu0 0.0
        %3128 = vmatprep.subr.mxu0 0.0
        %3129 = vmatpush1.msra.mxu0 0.0
        %3130 = vmatprep.subr.mxu0 0.0
        %3131 = vmatpush1.msra.mxu0 0.0
        %3132 = vmatprep.subr.mxu0 0.0
        %3133 = vmatpush1.msra.mxu0 0.0
        %3134 = vmatprep.subr.mxu0 0.0
        %3135 = vmatpush1.msra.mxu0 0.0
        %3136 = vmatprep.subr.mxu0 0.0
        %3137 = vmatpush1.msra.mxu0 0.0
        %3138 = vmatprep.subr.mxu0 0.0
        %3139 = vmatpush1.msra.mxu0 0.0
        %3140 = vmatprep.subr.mxu0 0.0
        %3141 = vmatpush1.msra.mxu0 0.0
        %3142 = vmatprep.mubr.f32.mxu0 0.0
        %3143 = vmatmul.mubr.f32.gmra.mrb[0].mxu0 %v2795
        %v3144 = vpop.f32.mrb[0].mxu0
        %v3145 = vadd.f32 0.0, %v3144
        %v3146 = vpop.f32.mrb[0].mxu0
        %3147 = vmatprep.mubr.f32.mxu0 0.0
        %3148 = vmatmul.mubr.f32.gmra.mrb[0].mxu0 %v2797
        %v3149 = vpop.f32.mrb[0].mxu0
        %v3150 = vadd.f32 0.0, %v3149
        %v3151 = vpop.f32.mrb[0].mxu0
        %3152 = vmatprep.mubr.f32.mxu0 0.0
        %3153 = vmatmul.mubr.f32.gmra.mrb[0].mxu0 %v2799
        %v3154 = vpop.f32.mrb[0].mxu0
        %v3155 = vadd.f32 0.0, %v3154
        %v3156 = vpop.f32.mrb[0].mxu0
        %3157 = vmatprep.mubr.f32.mxu0 0.0
        %3158 = vmatmul.mubr.f32.gmra.mrb[0].mxu0 %v2801
        %v3159 = vpop.f32.mrb[0].mxu0
        %v3160 = vadd.f32 0.0, %v3159
        %v3161 = vpop.f32.mrb[0].mxu0
        %3162 = vmatprep.mubr.f32.mxu0 0.0
        %3163 = vmatmul.mubr.f32.gmra.mrb[0].mxu0 %v2803
        %v3164 = vpop.f32.mrb[0].mxu0
        %v3165 = vadd.f32 0.0, %v3164
        %v3166 = vpop.f32.mrb[0].mxu0
        %3167 = vmatprep.mubr.f32.mxu0 0.0
        %3168 = vmatmul.mubr.f32.gmra.mrb[0].mxu0 %v2805
        %v3169 = vpop.f32.mrb[0].mxu0
        %v3170 = vadd.f32 0.0, %v3169
        %v3171 = vpop.f32.mrb[0].mxu0
        %3172 = vmatprep.mubr.f32.mxu0 0.0
        %3173 = vmatmul.mubr.f32.gmra.mrb[0].mxu0 %v2807
        %v3174 = vpop.f32.mrb[0].mxu0
        %v3175 = vadd.f32 0.0, %v3174
        %v3176 = vpop.f32.mrb[0].mxu0
        %3177 = vmatprep.mubr.f32.mxu0 0.0
        %3178 = vmatmul.mubr.f32.gmra.mrb[0].mxu0 %v2816
        %v3179 = vpop.f32.mrb[0].mxu0
        %v3180 = vadd.f32 0.0, %v3179
        %v3181 = vpop.f32.mrb[0].mxu0
        %3182 = vdwg.mxu0
        %v3183 = vadd.f32 %v3023, %v3145
        %v3184 = vadd.f32 %v3028, %v3150
        %v3185 = vadd.f32 %v3033, %v3155
        %v3186 = vadd.f32 %v3038, %v3160
        %v3187 = vadd.f32 %v3043, %v3165
        %v3188 = vadd.f32 %v3048, %v3170
        %v3189 = vadd.f32 %v3053, %v3175
        %v3190 = vadd.f32 %v3058, %v3180
        %v3191 = vld [vmem:[#allocation4 + $0x5] sm:$0x1]
        %v3192 = vlaneseq
        %v3193 = vshrl.u32 %v3192, 7
        %v3194 = vsub.s32 0, %v3193
        %v3195 = vrot.slane %v3191, %v3194
        %v3196 = vadd.f32 %v3183, %v3195
        %v3197 = vadd.f32 %v3184, %v3195
        %v3198 = vadd.f32 %v3185, %v3195
        %v3199 = vadd.f32 %v3186, %v3195
        %v3200 = vadd.f32 %v3187, %v3195
        %v3201 = vadd.f32 %v3188, %v3195
        %v3202 = vadd.f32 %v3189, %v3195
        %v3203 = vadd.f32 %v3190, %v3195
        %v3204 = vmax.f32 %v3196, 0.0
        %v3205 = vmax.f32 %v3197, 0.0
        %v3206 = vmax.f32 %v3198, 0.0
        %v3207 = vmax.f32 %v3199, 0.0
        %v3208 = vmax.f32 %v3200, 0.0
        %v3209 = vmax.f32 %v3201, 0.0
        %v3210 = vmax.f32 %v3202, 0.0
        %v3211 = vmax.f32 %v3203, 0.0
        %3212 = vst [vmem:[%s347] sm:$0xff] %v3204
        %3213 = vst [vmem:[%s347 + $0x8] sm:$0xff] %v3205
        %3214 = vst [vmem:[%s347 + $0x10] sm:$0xff] %v3206
        %3215 = vst [vmem:[%s347 + $0x18] sm:$0xff] %v3207
        %3216 = vst [vmem:[%s347 + $0x20] sm:$0xff] %v3208
        %3217 = vst [vmem:[%s347 + $0x28] sm:$0xff] %v3209
        %3218 = vst [vmem:[%s347 + $0x30] sm:$0xff] %v3210
        %3219 = vst [vmem:[%s347 + $0x38] sm:$0xff] %v3211
        %p3220 = scmp.lt.s32.totalorder %s21, 1
        %s3221 = scalar_select %p3220, %s21, 1
        %s3222 = smul.addr %s3221, 8
        %s3223 = smul.addr %s3222, 8
        %s3224 = scalar_lea.vmem %s7, %s3223
        // Predicated region
        $region69: #{forward_pallas.1} parent=47 // pred_check
          %p3225 = pneg %p191
        $region70: #{forward_pallas.1} parent=47 // pred_check_branch
          %3227 = sbr.rel (%p3225) target = $region72
        $region71: #{forward_pallas.1} parent=47 // pred_region
          _
        $region72: #{forward_pallas.1} parent=47 // pred_fallthru
          _
      $region48: #{forward_pallas.1} parent=5 // pred_fallthru
        _
      %p3228 = scmp.le.s32.totalorder 2, %s16
      // Predicated region
      $region73: #{forward_pallas.1} parent=5 // pred_check
        %p3229 = pneg %p3228
      $region74: #{forward_pallas.1} parent=5 // pred_check_branch
        %3231 = sbr.rel (%p3229) target = $region76
      $region75: #{forward_pallas.1} parent=5 // pred_region
        %s3232 = ssub.s32 %s16, 2
        // Predicated region
        $region77: #{forward_pallas.1} parent=75 // pred_check
          %p3233 = pneg %p197
        $region78: #{forward_pallas.1} parent=75 // pred_check_branch
          %3235 = sbr.rel (%p3233) target = $region80
        $region79: #{forward_pallas.1} parent=75 // pred_region
          %p3236 = scmp.lt.s32.totalorder %s22, 1
          %s3237 = scalar_select %p3236, %s22, 1
          %s3238 = smul.addr %s3237, 8
          %s3239 = smul.addr %s3238, 8
          %s3240 = scalar_lea.vmem %s7, %s3239
        $region80: #{forward_pallas.1} parent=75 // pred_fallthru
          _
      $region76: #{forward_pallas.1} parent=5 // pred_fallthru
        _
    $region6: #{forward_pallas.1} parent=1 // loop_footer
      %s20 = sadd.s32 1, %s16
    $region7: #{forward_pallas.1} parent=1 // loop_footer_branch
      %15 = sbr.rel target = $region3
    $region8: #{forward_pallas.1} parent=1 // loop_exit
      _
    %3241 = vsyncpa [#allocation3], 1
    %s3242 = scalar_lea.sflag [#allocation3], 1
    %3243 = vsyncpa %s3242, 1
    %3244 = vsyncpa [#allocation5], 1
    %3245 = vsyncpa [#allocation8], 1

</llo_original>
